<compile_context>
chip_gen: v7x
topology: tpu7x:2x2x1
jax: 0.10.0
libtpu: 0.0.40
codegen_flags: <defaults>
</compile_context>

<pallas_src>
import functools

import jax
import jax.numpy as jnp
from jax.experimental import pallas as pl
from jax.experimental.pallas import tpu as pltpu


def gru_qnet_kernel(x_ref, wih_ref, whh_ref, bfold_ref, bhhn_ref,
                    wlin_ref, blin_ref, out_ref, *, T, BP):
    """Multi-layer GRU + ReLU + Linear(last timestep), all resident in VMEM.

    x_ref    : (T*BP, 128)     time-major input; rows [t*BP, t*BP+B) are real,
                               lanes [0, H) are real, everything else zero.
    wih_ref  : (L, 128, 384)   input->hidden weights, gate g in lanes
                               [g*128, g*128+H), zero elsewhere.
    whh_ref  : (L, 128, 384)   hidden->hidden weights, same layout.
    bfold_ref: (L, 1, 384)     b_ih + [b_hh_r, b_hh_z, 0], gate-block padded.
    bhhn_ref : (L, 1, 128)     b_hh_n (stays inside the r*(.) term), lane padded.
    wlin_ref : (128, A)        final linear weight (rows [0,H) real).
    blin_ref : (1, A)          final linear bias.
    out_ref  : (BP, A)         Q-values (rows [0,B) real; wrapper slices).
    """
    HP = 128
    L = wih_ref.shape[0]

    x_all = x_ref[...]                                   # (T*BP, HP)

    outs = None
    for l in range(L):                                   # static layer loop
        wih = wih_ref[l]                                 # (HP, 3*HP)
        whh = whh_ref[l]                                 # (HP, 3*HP) - loop-invariant MXU RHS
        bfold = bfold_ref[l]                             # (1, 3*HP)
        # Hoist the (1,HP)->(BP,HP) broadcast once per layer.
        bhh_n = jnp.broadcast_to(bhhn_ref[l], (BP, HP))

        # ---- hoisted input projection: one matmul for all T timesteps -------
        gi_all = jnp.dot(x_all, wih,
                         preferred_element_type=jnp.float32) + bfold   # (T*BP, 3*HP)

        # ---- recurrence: only h @ W_hh sits on the serial dependency chain --
        h = jnp.zeros((BP, HP), jnp.float32)             # h0 = 0 (PyTorch default)
        outs = []
        for t in range(T):                               # fully unrolled, static, aligned
            gi = gi_all[t * BP:(t + 1) * BP, :]          # sublane-aligned (BP % 8 == 0)
            gh = jnp.dot(h, whh, preferred_element_type=jnp.float32)   # (BP, 3*HP)

            # r, z share one sigmoid over the contiguous first two gate blocks.
            rz = jax.nn.sigmoid(gi[:, 0:2 * HP] + gh[:, 0:2 * HP])
            r = rz[:, 0:HP]
            z = rz[:, HP:2 * HP]
            n = jnp.tanh(gi[:, 2 * HP:3 * HP] + r * (gh[:, 2 * HP:3 * HP] + bhh_n))
            h = n + z * (h - n)                          # == (1-z)*n + z*h
            outs.append(h)

        if l + 1 < L:                                    # feed next layer (tile-aligned stack)
            x_all = jnp.concatenate(outs, axis=0)        # (T*BP, HP)

    # relu(gru_out)[:, -1, :] == relu(last hidden); then the final linear.
    h_last = jnp.maximum(outs[-1], 0.0)                  # (BP, HP)
    out_ref[...] = (jnp.dot(h_last, wlin_ref[...],
                            preferred_element_type=jnp.float32)
                    + blin_ref[...])


def gru_qnetwork_forward(state, params):
    """state: (B, T, H) float32, batch-first like PyTorch."""
    wih, whh, bih, bhh, wlin, blin = params
    B, T, H = state.shape
    L = wih.shape[0]
    A = wlin.shape[1]
    f32 = jnp.float32

    HP = 128                                 # one gate per 128-lane block
    BP = ((B + 7) // 8) * 8                  # sublane-tile-padded batch

    # ---- bias folding (PyTorch GRU semantics, gate order r, z, n) -----------
    #   r, z gates: b_ih and b_hh both sit outside the nonlinearity -> sum them.
    #   n gate    : only b_ih folds; b_hh_n stays inside the r*(.) term.
    bfold = bih + jnp.concatenate(
        [bhh[:, :, :2 * H], jnp.zeros_like(bhh[:, :, 2 * H:])], axis=2)  # (L,1,3H)
    bhh_n = bhh[:, :, 2 * H:]                                            # (L,1,H)

    # ---- wrapper-side layout plumbing (free XLA work, keeps the kernel clean) ----
    def pad_gate_cols(w):                    # (L, H, 3H) -> (L, HP, 3*HP)
        out = jnp.zeros((L, HP, 3 * HP), f32)
        for g in range(3):
            out = out.at[:, :H, g * HP:g * HP + H].set(w[:, :, g * H:(g + 1) * H])
        return out

    wih_p = pad_gate_cols(wih.astype(f32))
    whh_p = pad_gate_cols(whh.astype(f32))

    bfold_p = jnp.zeros((L, 1, 3 * HP), f32)
    for g in range(3):
        bfold_p = bfold_p.at[:, :, g * HP:g * HP + H].set(
            bfold[:, :, g * H:(g + 1) * H])
    bhhn_p = jnp.zeros((L, 1, HP), f32).at[:, :, :H].set(bhh_n)

    wlin_p = jnp.zeros((HP, A), f32).at[:H, :].set(wlin)

    # Time-major, sublane/lane-padded input slab: (T*BP, HP).
    x_p = jnp.zeros((T, BP, HP), f32).at[:, :B, :H].set(
        jnp.transpose(state.astype(f32), (1, 0, 2)))
    x_flat = x_p.reshape(T * BP, HP)

    kernel = functools.partial(gru_qnet_kernel, T=T, BP=BP)
    out = pl.pallas_call(
        kernel,
        out_shape=jax.ShapeDtypeStruct((BP, A), jnp.float32),
        in_specs=[pl.BlockSpec(memory_space=pltpu.MemorySpace.VMEM)] * 7,
        out_specs=pl.BlockSpec(memory_space=pltpu.MemorySpace.VMEM),
    )(x_flat, wih_p, whh_p, bfold_p, bhhn_p, wlin_p, blin)
    return out[:B]


def gru_qnetwork_ref(state, params):
    """Pure-JAX reference matching torch.nn.GRU semantics (gate order r, z, n)."""
    wih, whh, bih, bhh, wlin, blin = params
    B, T, H = state.shape
    L = wih.shape[0]
    seq = state.astype(jnp.float32)
    for l in range(L):
        h = jnp.zeros((B, H), jnp.float32)
        outs = []
        for t in range(T):
            x_t = seq[:, t, :]
            gi = x_t @ wih[l] + bih[l]
            gh = h @ whh[l] + bhh[l]
            r = jax.nn.sigmoid(gi[:, :H] + gh[:, :H])
            z = jax.nn.sigmoid(gi[:, H:2 * H] + gh[:, H:2 * H])
            n = jnp.tanh(gi[:, 2 * H:] + r * gh[:, 2 * H:])
            h = (1.0 - z) * n + z * h
            outs.append(h)
        seq = jnp.stack(outs, axis=1)
    h_last = jnp.maximum(seq[:, -1, :], 0.0)
    return h_last @ wlin + blin


def init_params(key, n_frames, state_space, action_space):
    """Deterministic init mirroring PyTorch GRU/Linear uniform(-1/sqrt(H), 1/sqrt(H))."""
    H = state_space
    L = n_frames
    A = action_space
    bound = 1.0 / jnp.sqrt(jnp.float32(H))
    ks = jax.random.split(key, 6)
    # Weights stored pre-transposed: (in_features, 3H) so the kernel does x @ W.
    wih = jax.random.uniform(ks[0], (L, H, 3 * H), jnp.float32, -bound, bound)
    whh = jax.random.uniform(ks[1], (L, H, 3 * H), jnp.float32, -bound, bound)
    bih = jax.random.uniform(ks[2], (L, 1, 3 * H), jnp.float32, -bound, bound)
    bhh = jax.random.uniform(ks[3], (L, 1, 3 * H), jnp.float32, -bound, bound)
    wlin = jax.random.uniform(ks[4], (H, A), jnp.float32, -bound, bound)
    blin = jax.random.uniform(ks[5], (1, A), jnp.float32, -bound, bound)
    return wih, whh, bih, bhh, wlin, blin


if __name__ == "__main__":
    # Module hyper-params: n_frames (num GRU layers), state_space (= hidden), action_space
    n_frames = 2
    state_space = 32
    action_space = 4
    batch, seq_len = 2, 8

    key = jax.random.PRNGKey(0)
    k_params, k_x = jax.random.split(key)
    params = init_params(k_params, n_frames, state_space, action_space)

    # state: (batch, seq, state_space), batch_first=True
    state = jax.random.normal(k_x, (batch, seq_len, state_space), jnp.float32)

    out = gru_qnetwork_forward(state, params)
    out = jax.block_until_ready(out)

    ref = gru_qnetwork_ref(state, params)
    assert out.shape == (batch, action_space)
    assert jnp.allclose(out, ref, atol=1e-5, rtol=1e-5), (out, ref)

    print("KERNEL_OK")
</pallas_src>

<mosaic_0001>
module attributes {stable_mosaic.version = 11 : i64} {
  func.func @gru_qnet_kernel(%arg0: memref<64x128xf32, #tpu.memory_space<vmem>>, %arg1: memref<2x128x384xf32, #tpu.memory_space<vmem>>, %arg2: memref<2x128x384xf32, #tpu.memory_space<vmem>>, %arg3: memref<2x1x384xf32, #tpu.memory_space<vmem>>, %arg4: memref<2x1x128xf32, #tpu.memory_space<vmem>>, %arg5: memref<128x4xf32, #tpu.memory_space<vmem>>, %arg6: memref<1x4xf32, #tpu.memory_space<vmem>>, %arg7: memref<8x4xf32, #tpu.memory_space<vmem>>) attributes {dimension_semantics = [], scalar_prefetch = 0 : i64, scratch_operands = 0 : i64, tpu.core_type = #tpu.core_type<tc>} {
    %c0 = arith.constant 0 : index
    %c0_0 = arith.constant 0 : index
    %0 = vector.load %arg0[%c0, %c0_0] : memref<64x128xf32, #tpu.memory_space<vmem>>, vector<64x128xf32>
    %c0_1 = arith.constant 0 : index
    %c0_2 = arith.constant 0 : index
    %c0_3 = arith.constant 0 : index
    %1 = vector.load %arg1[%c0_1, %c0_2, %c0_3] : memref<2x128x384xf32, #tpu.memory_space<vmem>>, vector<1x128x384xf32>
    %2 = vector.shape_cast %1 : vector<1x128x384xf32> to vector<128x384xf32>
    %c0_4 = arith.constant 0 : index
    %c0_5 = arith.constant 0 : index
    %c0_6 = arith.constant 0 : index
    %3 = vector.load %arg2[%c0_4, %c0_5, %c0_6] : memref<2x128x384xf32, #tpu.memory_space<vmem>>, vector<1x128x384xf32>
    %4 = vector.shape_cast %3 : vector<1x128x384xf32> to vector<128x384xf32>
    %c0_7 = arith.constant 0 : index
    %c0_8 = arith.constant 0 : index
    %c0_9 = arith.constant 0 : index
    %5 = vector.load %arg3[%c0_7, %c0_8, %c0_9] : memref<2x1x384xf32, #tpu.memory_space<vmem>>, vector<1x1x384xf32>
    %6 = vector.shape_cast %5 : vector<1x1x384xf32> to vector<1x384xf32>
    %c0_10 = arith.constant 0 : index
    %c0_11 = arith.constant 0 : index
    %c0_12 = arith.constant 0 : index
    %7 = vector.load %arg4[%c0_10, %c0_11, %c0_12] : memref<2x1x128xf32, #tpu.memory_space<vmem>>, vector<1x1x128xf32>
    %8 = vector.shape_cast %7 : vector<1x1x128xf32> to vector<1x128xf32>
    %9 = vector.shape_cast %8 : vector<1x128xf32> to vector<1x128xf32>
    %10 = vector.broadcast %9 : vector<1x128xf32> to vector<8x128xf32>
    %cst = arith.constant dense<0.000000e+00> : vector<64x384xf32>
    %11 = tpu.matmul %0, %2, %cst {dimension_numbers = #tpu.dot_dimension_numbers<[1], [0], [0], [1], [0, 0, 1, 1], [], []>} : vector<64x128xf32>, vector<128x384xf32>, vector<64x384xf32> -> vector<64x384xf32>
    %12 = vector.broadcast %6 : vector<1x384xf32> to vector<64x384xf32>
    %13 = arith.addf %11, %12 : vector<64x384xf32>
    %cst_13 = arith.constant 0.000000e+00 : f32
    %14 = vector.broadcast %cst_13 : f32 to vector<8x128xf32>
    %15 = vector.extract_strided_slice %13 {offsets = [0, 0], sizes = [8, 384], strides = [1, 1]} : vector<64x384xf32> to vector<8x384xf32>
    %cst_14 = arith.constant dense<0.000000e+00> : vector<8x384xf32>
    %16 = tpu.matmul %14, %4, %cst_14 {dimension_numbers = #tpu.dot_dimension_numbers<[1], [0], [0], [1], [0, 0, 1, 1], [], []>} : vector<8x128xf32>, vector<128x384xf32>, vector<8x384xf32> -> vector<8x384xf32>
    %17 = vector.extract_strided_slice %15 {offsets = [0, 0], sizes = [8, 256], strides = [1, 1]} : vector<8x384xf32> to vector<8x256xf32>
    %18 = vector.extract_strided_slice %16 {offsets = [0, 0], sizes = [8, 256], strides = [1, 1]} : vector<8x384xf32> to vector<8x256xf32>
    %19 = arith.addf %17, %18 : vector<8x256xf32>
    %20 = arith.negf %19 : vector<8x256xf32>
    %21 = math.exp %20 : vector<8x256xf32>
    %cst_15 = arith.constant 1.000000e+00 : f32
    %22 = vector.broadcast %cst_15 : f32 to vector<8x256xf32>
    %23 = arith.addf %22, %21 : vector<8x256xf32>
    %24 = arith.divf %22, %23 : vector<8x256xf32>
    %25 = vector.extract_strided_slice %24 {offsets = [0, 0], sizes = [8, 128], strides = [1, 1]} : vector<8x256xf32> to vector<8x128xf32>
    %26 = vector.extract_strided_slice %24 {offsets = [0, 128], sizes = [8, 128], strides = [1, 1]} : vector<8x256xf32> to vector<8x128xf32>
    %27 = vector.extract_strided_slice %15 {offsets = [0, 256], sizes = [8, 128], strides = [1, 1]} : vector<8x384xf32> to vector<8x128xf32>
    %28 = vector.extract_strided_slice %16 {offsets = [0, 256], sizes = [8, 128], strides = [1, 1]} : vector<8x384xf32> to vector<8x128xf32>
    %29 = arith.addf %28, %10 : vector<8x128xf32>
    %30 = arith.mulf %25, %29 : vector<8x128xf32>
    %31 = arith.addf %27, %30 : vector<8x128xf32>
    %32 = math.tanh %31 : vector<8x128xf32>
    %33 = arith.subf %14, %32 : vector<8x128xf32>
    %34 = arith.mulf %26, %33 : vector<8x128xf32>
    %35 = arith.addf %32, %34 : vector<8x128xf32>
    %36 = vector.extract_strided_slice %13 {offsets = [8, 0], sizes = [8, 384], strides = [1, 1]} : vector<64x384xf32> to vector<8x384xf32>
    %cst_16 = arith.constant dense<0.000000e+00> : vector<8x384xf32>
    %37 = tpu.matmul %35, %4, %cst_16 {dimension_numbers = #tpu.dot_dimension_numbers<[1], [0], [0], [1], [0, 0, 1, 1], [], []>} : vector<8x128xf32>, vector<128x384xf32>, vector<8x384xf32> -> vector<8x384xf32>
    %38 = vector.extract_strided_slice %36 {offsets = [0, 0], sizes = [8, 256], strides = [1, 1]} : vector<8x384xf32> to vector<8x256xf32>
    %39 = vector.extract_strided_slice %37 {offsets = [0, 0], sizes = [8, 256], strides = [1, 1]} : vector<8x384xf32> to vector<8x256xf32>
    %40 = arith.addf %38, %39 : vector<8x256xf32>
    %41 = arith.negf %40 : vector<8x256xf32>
    %42 = math.exp %41 : vector<8x256xf32>
    %cst_17 = arith.constant 1.000000e+00 : f32
    %43 = vector.broadcast %cst_17 : f32 to vector<8x256xf32>
    %44 = arith.addf %43, %42 : vector<8x256xf32>
    %45 = arith.divf %43, %44 : vector<8x256xf32>
    %46 = vector.extract_strided_slice %45 {offsets = [0, 0], sizes = [8, 128], strides = [1, 1]} : vector<8x256xf32> to vector<8x128xf32>
    %47 = vector.extract_strided_slice %45 {offsets = [0, 128], sizes = [8, 128], strides = [1, 1]} : vector<8x256xf32> to vector<8x128xf32>
    %48 = vector.extract_strided_slice %36 {offsets = [0, 256], sizes = [8, 128], strides = [1, 1]} : vector<8x384xf32> to vector<8x128xf32>
    %49 = vector.extract_strided_slice %37 {offsets = [0, 256], sizes = [8, 128], strides = [1, 1]} : vector<8x384xf32> to vector<8x128xf32>
    %50 = arith.addf %49, %10 : vector<8x128xf32>
    %51 = arith.mulf %46, %50 : vector<8x128xf32>
    %52 = arith.addf %48, %51 : vector<8x128xf32>
    %53 = math.tanh %52 : vector<8x128xf32>
    %54 = arith.subf %35, %53 : vector<8x128xf32>
    %55 = arith.mulf %47, %54 : vector<8x128xf32>
    %56 = arith.addf %53, %55 : vector<8x128xf32>
    %57 = vector.extract_strided_slice %13 {offsets = [16, 0], sizes = [8, 384], strides = [1, 1]} : vector<64x384xf32> to vector<8x384xf32>
    %cst_18 = arith.constant dense<0.000000e+00> : vector<8x384xf32>
    %58 = tpu.matmul %56, %4, %cst_18 {dimension_numbers = #tpu.dot_dimension_numbers<[1], [0], [0], [1], [0, 0, 1, 1], [], []>} : vector<8x128xf32>, vector<128x384xf32>, vector<8x384xf32> -> vector<8x384xf32>
    %59 = vector.extract_strided_slice %57 {offsets = [0, 0], sizes = [8, 256], strides = [1, 1]} : vector<8x384xf32> to vector<8x256xf32>
    %60 = vector.extract_strided_slice %58 {offsets = [0, 0], sizes = [8, 256], strides = [1, 1]} : vector<8x384xf32> to vector<8x256xf32>
    %61 = arith.addf %59, %60 : vector<8x256xf32>
    %62 = arith.negf %61 : vector<8x256xf32>
    %63 = math.exp %62 : vector<8x256xf32>
    %cst_19 = arith.constant 1.000000e+00 : f32
    %64 = vector.broadcast %cst_19 : f32 to vector<8x256xf32>
    %65 = arith.addf %64, %63 : vector<8x256xf32>
    %66 = arith.divf %64, %65 : vector<8x256xf32>
    %67 = vector.extract_strided_slice %66 {offsets = [0, 0], sizes = [8, 128], strides = [1, 1]} : vector<8x256xf32> to vector<8x128xf32>
    %68 = vector.extract_strided_slice %66 {offsets = [0, 128], sizes = [8, 128], strides = [1, 1]} : vector<8x256xf32> to vector<8x128xf32>
    %69 = vector.extract_strided_slice %57 {offsets = [0, 256], sizes = [8, 128], strides = [1, 1]} : vector<8x384xf32> to vector<8x128xf32>
    %70 = vector.extract_strided_slice %58 {offsets = [0, 256], sizes = [8, 128], strides = [1, 1]} : vector<8x384xf32> to vector<8x128xf32>
    %71 = arith.addf %70, %10 : vector<8x128xf32>
    %72 = arith.mulf %67, %71 : vector<8x128xf32>
    %73 = arith.addf %69, %72 : vector<8x128xf32>
    %74 = math.tanh %73 : vector<8x128xf32>
    %75 = arith.subf %56, %74 : vector<8x128xf32>
    %76 = arith.mulf %68, %75 : vector<8x128xf32>
    %77 = arith.addf %74, %76 : vector<8x128xf32>
    %78 = vector.extract_strided_slice %13 {offsets = [24, 0], sizes = [8, 384], strides = [1, 1]} : vector<64x384xf32> to vector<8x384xf32>
    %cst_20 = arith.constant dense<0.000000e+00> : vector<8x384xf32>
    %79 = tpu.matmul %77, %4, %cst_20 {dimension_numbers = #tpu.dot_dimension_numbers<[1], [0], [0], [1], [0, 0, 1, 1], [], []>} : vector<8x128xf32>, vector<128x384xf32>, vector<8x384xf32> -> vector<8x384xf32>
    %80 = vector.extract_strided_slice %78 {offsets = [0, 0], sizes = [8, 256], strides = [1, 1]} : vector<8x384xf32> to vector<8x256xf32>
    %81 = vector.extract_strided_slice %79 {offsets = [0, 0], sizes = [8, 256], strides = [1, 1]} : vector<8x384xf32> to vector<8x256xf32>
    %82 = arith.addf %80, %81 : vector<8x256xf32>
    %83 = arith.negf %82 : vector<8x256xf32>
    %84 = math.exp %83 : vector<8x256xf32>
    %cst_21 = arith.constant 1.000000e+00 : f32
    %85 = vector.broadcast %cst_21 : f32 to vector<8x256xf32>
    %86 = arith.addf %85, %84 : vector<8x256xf32>
    %87 = arith.divf %85, %86 : vector<8x256xf32>
    %88 = vector.extract_strided_slice %87 {offsets = [0, 0], sizes = [8, 128], strides = [1, 1]} : vector<8x256xf32> to vector<8x128xf32>
    %89 = vector.extract_strided_slice %87 {offsets = [0, 128], sizes = [8, 128], strides = [1, 1]} : vector<8x256xf32> to vector<8x128xf32>
    %90 = vector.extract_strided_slice %78 {offsets = [0, 256], sizes = [8, 128], strides = [1, 1]} : vector<8x384xf32> to vector<8x128xf32>
    %91 = vector.extract_strided_slice %79 {offsets = [0, 256], sizes = [8, 128], strides = [1, 1]} : vector<8x384xf32> to vector<8x128xf32>
    %92 = arith.addf %91, %10 : vector<8x128xf32>
    %93 = arith.mulf %88, %92 : vector<8x128xf32>
    %94 = arith.addf %90, %93 : vector<8x128xf32>
    %95 = math.tanh %94 : vector<8x128xf32>
    %96 = arith.subf %77, %95 : vector<8x128xf32>
    %97 = arith.mulf %89, %96 : vector<8x128xf32>
    %98 = arith.addf %95, %97 : vector<8x128xf32>
    %99 = vector.extract_strided_slice %13 {offsets = [32, 0], sizes = [8, 384], strides = [1, 1]} : vector<64x384xf32> to vector<8x384xf32>
    %cst_22 = arith.constant dense<0.000000e+00> : vector<8x384xf32>
    %100 = tpu.matmul %98, %4, %cst_22 {dimension_numbers = #tpu.dot_dimension_numbers<[1], [0], [0], [1], [0, 0, 1, 1], [], []>} : vector<8x128xf32>, vector<128x384xf32>, vector<8x384xf32> -> vector<8x384xf32>
    %101 = vector.extract_strided_slice %99 {offsets = [0, 0], sizes = [8, 256], strides = [1, 1]} : vector<8x384xf32> to vector<8x256xf32>
    %102 = vector.extract_strided_slice %100 {offsets = [0, 0], sizes = [8, 256], strides = [1, 1]} : vector<8x384xf32> to vector<8x256xf32>
    %103 = arith.addf %101, %102 : vector<8x256xf32>
    %104 = arith.negf %103 : vector<8x256xf32>
    %105 = math.exp %104 : vector<8x256xf32>
    %cst_23 = arith.constant 1.000000e+00 : f32
    %106 = vector.broadcast %cst_23 : f32 to vector<8x256xf32>
    %107 = arith.addf %106, %105 : vector<8x256xf32>
    %108 = arith.divf %106, %107 : vector<8x256xf32>
    %109 = vector.extract_strided_slice %108 {offsets = [0, 0], sizes = [8, 128], strides = [1, 1]} : vector<8x256xf32> to vector<8x128xf32>
    %110 = vector.extract_strided_slice %108 {offsets = [0, 128], sizes = [8, 128], strides = [1, 1]} : vector<8x256xf32> to vector<8x128xf32>
    %111 = vector.extract_strided_slice %99 {offsets = [0, 256], sizes = [8, 128], strides = [1, 1]} : vector<8x384xf32> to vector<8x128xf32>
    %112 = vector.extract_strided_slice %100 {offsets = [0, 256], sizes = [8, 128], strides = [1, 1]} : vector<8x384xf32> to vector<8x128xf32>
    %113 = arith.addf %112, %10 : vector<8x128xf32>
    %114 = arith.mulf %109, %113 : vector<8x128xf32>
    %115 = arith.addf %111, %114 : vector<8x128xf32>
    %116 = math.tanh %115 : vector<8x128xf32>
    %117 = arith.subf %98, %116 : vector<8x128xf32>
    %118 = arith.mulf %110, %117 : vector<8x128xf32>
    %119 = arith.addf %116, %118 : vector<8x128xf32>
    %120 = vector.extract_strided_slice %13 {offsets = [40, 0], sizes = [8, 384], strides = [1, 1]} : vector<64x384xf32> to vector<8x384xf32>
    %cst_24 = arith.constant dense<0.000000e+00> : vector<8x384xf32>
    %121 = tpu.matmul %119, %4, %cst_24 {dimension_numbers = #tpu.dot_dimension_numbers<[1], [0], [0], [1], [0, 0, 1, 1], [], []>} : vector<8x128xf32>, vector<128x384xf32>, vector<8x384xf32> -> vector<8x384xf32>
    %122 = vector.extract_strided_slice %120 {offsets = [0, 0], sizes = [8, 256], strides = [1, 1]} : vector<8x384xf32> to vector<8x256xf32>
    %123 = vector.extract_strided_slice %121 {offsets = [0, 0], sizes = [8, 256], strides = [1, 1]} : vector<8x384xf32> to vector<8x256xf32>
    %124 = arith.addf %122, %123 : vector<8x256xf32>
    %125 = arith.negf %124 : vector<8x256xf32>
    %126 = math.exp %125 : vector<8x256xf32>
    %cst_25 = arith.constant 1.000000e+00 : f32
    %127 = vector.broadcast %cst_25 : f32 to vector<8x256xf32>
    %128 = arith.addf %127, %126 : vector<8x256xf32>
    %129 = arith.divf %127, %128 : vector<8x256xf32>
    %130 = vector.extract_strided_slice %129 {offsets = [0, 0], sizes = [8, 128], strides = [1, 1]} : vector<8x256xf32> to vector<8x128xf32>
    %131 = vector.extract_strided_slice %129 {offsets = [0, 128], sizes = [8, 128], strides = [1, 1]} : vector<8x256xf32> to vector<8x128xf32>
    %132 = vector.extract_strided_slice %120 {offsets = [0, 256], sizes = [8, 128], strides = [1, 1]} : vector<8x384xf32> to vector<8x128xf32>
    %133 = vector.extract_strided_slice %121 {offsets = [0, 256], sizes = [8, 128], strides = [1, 1]} : vector<8x384xf32> to vector<8x128xf32>
    %134 = arith.addf %133, %10 : vector<8x128xf32>
    %135 = arith.mulf %130, %134 : vector<8x128xf32>
    %136 = arith.addf %132, %135 : vector<8x128xf32>
    %137 = math.tanh %136 : vector<8x128xf32>
    %138 = arith.subf %119, %137 : vector<8x128xf32>
    %139 = arith.mulf %131, %138 : vector<8x128xf32>
    %140 = arith.addf %137, %139 : vector<8x128xf32>
    %141 = vector.extract_strided_slice %13 {offsets = [48, 0], sizes = [8, 384], strides = [1, 1]} : vector<64x384xf32> to vector<8x384xf32>
    %cst_26 = arith.constant dense<0.000000e+00> : vector<8x384xf32>
    %142 = tpu.matmul %140, %4, %cst_26 {dimension_numbers = #tpu.dot_dimension_numbers<[1], [0], [0], [1], [0, 0, 1, 1], [], []>} : vector<8x128xf32>, vector<128x384xf32>, vector<8x384xf32> -> vector<8x384xf32>
    %143 = vector.extract_strided_slice %141 {offsets = [0, 0], sizes = [8, 256], strides = [1, 1]} : vector<8x384xf32> to vector<8x256xf32>
    %144 = vector.extract_strided_slice %142 {offsets = [0, 0], sizes = [8, 256], strides = [1, 1]} : vector<8x384xf32> to vector<8x256xf32>
    %145 = arith.addf %143, %144 : vector<8x256xf32>
    %146 = arith.negf %145 : vector<8x256xf32>
    %147 = math.exp %146 : vector<8x256xf32>
    %cst_27 = arith.constant 1.000000e+00 : f32
    %148 = vector.broadcast %cst_27 : f32 to vector<8x256xf32>
    %149 = arith.addf %148, %147 : vector<8x256xf32>
    %150 = arith.divf %148, %149 : vector<8x256xf32>
    %151 = vector.extract_strided_slice %150 {offsets = [0, 0], sizes = [8, 128], strides = [1, 1]} : vector<8x256xf32> to vector<8x128xf32>
    %152 = vector.extract_strided_slice %150 {offsets = [0, 128], sizes = [8, 128], strides = [1, 1]} : vector<8x256xf32> to vector<8x128xf32>
    %153 = vector.extract_strided_slice %141 {offsets = [0, 256], sizes = [8, 128], strides = [1, 1]} : vector<8x384xf32> to vector<8x128xf32>
    %154 = vector.extract_strided_slice %142 {offsets = [0, 256], sizes = [8, 128], strides = [1, 1]} : vector<8x384xf32> to vector<8x128xf32>
    %155 = arith.addf %154, %10 : vector<8x128xf32>
    %156 = arith.mulf %151, %155 : vector<8x128xf32>
    %157 = arith.addf %153, %156 : vector<8x128xf32>
    %158 = math.tanh %157 : vector<8x128xf32>
    %159 = arith.subf %140, %158 : vector<8x128xf32>
    %160 = arith.mulf %152, %159 : vector<8x128xf32>
    %161 = arith.addf %158, %160 : vector<8x128xf32>
    %162 = vector.extract_strided_slice %13 {offsets = [56, 0], sizes = [8, 384], strides = [1, 1]} : vector<64x384xf32> to vector<8x384xf32>
    %cst_28 = arith.constant dense<0.000000e+00> : vector<8x384xf32>
    %163 = tpu.matmul %161, %4, %cst_28 {dimension_numbers = #tpu.dot_dimension_numbers<[1], [0], [0], [1], [0, 0, 1, 1], [], []>} : vector<8x128xf32>, vector<128x384xf32>, vector<8x384xf32> -> vector<8x384xf32>
    %164 = vector.extract_strided_slice %162 {offsets = [0, 0], sizes = [8, 256], strides = [1, 1]} : vector<8x384xf32> to vector<8x256xf32>
    %165 = vector.extract_strided_slice %163 {offsets = [0, 0], sizes = [8, 256], strides = [1, 1]} : vector<8x384xf32> to vector<8x256xf32>
    %166 = arith.addf %164, %165 : vector<8x256xf32>
    %167 = arith.negf %166 : vector<8x256xf32>
    %168 = math.exp %167 : vector<8x256xf32>
    %cst_29 = arith.constant 1.000000e+00 : f32
    %169 = vector.broadcast %cst_29 : f32 to vector<8x256xf32>
    %170 = arith.addf %169, %168 : vector<8x256xf32>
    %171 = arith.divf %169, %170 : vector<8x256xf32>
    %172 = vector.extract_strided_slice %171 {offsets = [0, 0], sizes = [8, 128], strides = [1, 1]} : vector<8x256xf32> to vector<8x128xf32>
    %173 = vector.extract_strided_slice %171 {offsets = [0, 128], sizes = [8, 128], strides = [1, 1]} : vector<8x256xf32> to vector<8x128xf32>
    %174 = vector.extract_strided_slice %162 {offsets = [0, 256], sizes = [8, 128], strides = [1, 1]} : vector<8x384xf32> to vector<8x128xf32>
    %175 = vector.extract_strided_slice %163 {offsets = [0, 256], sizes = [8, 128], strides = [1, 1]} : vector<8x384xf32> to vector<8x128xf32>
    %176 = arith.addf %175, %10 : vector<8x128xf32>
    %177 = arith.mulf %172, %176 : vector<8x128xf32>
    %178 = arith.addf %174, %177 : vector<8x128xf32>
    %179 = math.tanh %178 : vector<8x128xf32>
    %180 = arith.subf %161, %179 : vector<8x128xf32>
    %181 = arith.mulf %173, %180 : vector<8x128xf32>
    %182 = arith.addf %179, %181 : vector<8x128xf32>
    %183 = tpu.concatenate %35, %56, %77, %98, %119, %140, %161, %182 in 0 : vector<8x128xf32>, vector<8x128xf32>, vector<8x128xf32>, vector<8x128xf32>, vector<8x128xf32>, vector<8x128xf32>, vector<8x128xf32>, vector<8x128xf32> -> vector<64x128xf32>
    %c1 = arith.constant 1 : index
    %c0_30 = arith.constant 0 : index
    %c0_31 = arith.constant 0 : index
    %184 = vector.load %arg1[%c1, %c0_30, %c0_31] : memref<2x128x384xf32, #tpu.memory_space<vmem>>, vector<1x128x384xf32>
    %185 = vector.shape_cast %184 : vector<1x128x384xf32> to vector<128x384xf32>
    %c1_32 = arith.constant 1 : index
    %c0_33 = arith.constant 0 : index
    %c0_34 = arith.constant 0 : index
    %186 = vector.load %arg2[%c1_32, %c0_33, %c0_34] : memref<2x128x384xf32, #tpu.memory_space<vmem>>, vector<1x128x384xf32>
    %187 = vector.shape_cast %186 : vector<1x128x384xf32> to vector<128x384xf32>
    %c1_35 = arith.constant 1 : index
    %c0_36 = arith.constant 0 : index
    %c0_37 = arith.constant 0 : index
    %188 = vector.load %arg3[%c1_35, %c0_36, %c0_37] : memref<2x1x384xf32, #tpu.memory_space<vmem>>, vector<1x1x384xf32>
    %189 = vector.shape_cast %188 : vector<1x1x384xf32> to vector<1x384xf32>
    %c1_38 = arith.constant 1 : index
    %c0_39 = arith.constant 0 : index
    %c0_40 = arith.constant 0 : index
    %190 = vector.load %arg4[%c1_38, %c0_39, %c0_40] : memref<2x1x128xf32, #tpu.memory_space<vmem>>, vector<1x1x128xf32>
    %191 = vector.shape_cast %190 : vector<1x1x128xf32> to vector<1x128xf32>
    %192 = vector.shape_cast %191 : vector<1x128xf32> to vector<1x128xf32>
    %193 = vector.broadcast %192 : vector<1x128xf32> to vector<8x128xf32>
    %cst_41 = arith.constant dense<0.000000e+00> : vector<64x384xf32>
    %194 = tpu.matmul %183, %185, %cst_41 {dimension_numbers = #tpu.dot_dimension_numbers<[1], [0], [0], [1], [0, 0, 1, 1], [], []>} : vector<64x128xf32>, vector<128x384xf32>, vector<64x384xf32> -> vector<64x384xf32>
    %195 = vector.broadcast %189 : vector<1x384xf32> to vector<64x384xf32>
    %196 = arith.addf %194, %195 : vector<64x384xf32>
    %cst_42 = arith.constant 0.000000e+00 : f32
    %197 = vector.broadcast %cst_42 : f32 to vector<8x128xf32>
    %198 = vector.extract_strided_slice %196 {offsets = [0, 0], sizes = [8, 384], strides = [1, 1]} : vector<64x384xf32> to vector<8x384xf32>
    %cst_43 = arith.constant dense<0.000000e+00> : vector<8x384xf32>
    %199 = tpu.matmul %197, %187, %cst_43 {dimension_numbers = #tpu.dot_dimension_numbers<[1], [0], [0], [1], [0, 0, 1, 1], [], []>} : vector<8x128xf32>, vector<128x384xf32>, vector<8x384xf32> -> vector<8x384xf32>
    %200 = vector.extract_strided_slice %198 {offsets = [0, 0], sizes = [8, 256], strides = [1, 1]} : vector<8x384xf32> to vector<8x256xf32>
    %201 = vector.extract_strided_slice %199 {offsets = [0, 0], sizes = [8, 256], strides = [1, 1]} : vector<8x384xf32> to vector<8x256xf32>
    %202 = arith.addf %200, %201 : vector<8x256xf32>
    %203 = arith.negf %202 : vector<8x256xf32>
    %204 = math.exp %203 : vector<8x256xf32>
    %cst_44 = arith.constant 1.000000e+00 : f32
    %205 = vector.broadcast %cst_44 : f32 to vector<8x256xf32>
    %206 = arith.addf %205, %204 : vector<8x256xf32>
    %207 = arith.divf %205, %206 : vector<8x256xf32>
    %208 = vector.extract_strided_slice %207 {offsets = [0, 0], sizes = [8, 128], strides = [1, 1]} : vector<8x256xf32> to vector<8x128xf32>
    %209 = vector.extract_strided_slice %207 {offsets = [0, 128], sizes = [8, 128], strides = [1, 1]} : vector<8x256xf32> to vector<8x128xf32>
    %210 = vector.extract_strided_slice %198 {offsets = [0, 256], sizes = [8, 128], strides = [1, 1]} : vector<8x384xf32> to vector<8x128xf32>
    %211 = vector.extract_strided_slice %199 {offsets = [0, 256], sizes = [8, 128], strides = [1, 1]} : vector<8x384xf32> to vector<8x128xf32>
    %212 = arith.addf %211, %193 : vector<8x128xf32>
    %213 = arith.mulf %208, %212 : vector<8x128xf32>
    %214 = arith.addf %210, %213 : vector<8x128xf32>
    %215 = math.tanh %214 : vector<8x128xf32>
    %216 = arith.subf %197, %215 : vector<8x128xf32>
    %217 = arith.mulf %209, %216 : vector<8x128xf32>
    %218 = arith.addf %215, %217 : vector<8x128xf32>
    %219 = vector.extract_strided_slice %196 {offsets = [8, 0], sizes = [8, 384], strides = [1, 1]} : vector<64x384xf32> to vector<8x384xf32>
    %cst_45 = arith.constant dense<0.000000e+00> : vector<8x384xf32>
    %220 = tpu.matmul %218, %187, %cst_45 {dimension_numbers = #tpu.dot_dimension_numbers<[1], [0], [0], [1], [0, 0, 1, 1], [], []>} : vector<8x128xf32>, vector<128x384xf32>, vector<8x384xf32> -> vector<8x384xf32>
    %221 = vector.extract_strided_slice %219 {offsets = [0, 0], sizes = [8, 256], strides = [1, 1]} : vector<8x384xf32> to vector<8x256xf32>
    %222 = vector.extract_strided_slice %220 {offsets = [0, 0], sizes = [8, 256], strides = [1, 1]} : vector<8x384xf32> to vector<8x256xf32>
    %223 = arith.addf %221, %222 : vector<8x256xf32>
    %224 = arith.negf %223 : vector<8x256xf32>
    %225 = math.exp %224 : vector<8x256xf32>
    %cst_46 = arith.constant 1.000000e+00 : f32
    %226 = vector.broadcast %cst_46 : f32 to vector<8x256xf32>
    %227 = arith.addf %226, %225 : vector<8x256xf32>
    %228 = arith.divf %226, %227 : vector<8x256xf32>
    %229 = vector.extract_strided_slice %228 {offsets = [0, 0], sizes = [8, 128], strides = [1, 1]} : vector<8x256xf32> to vector<8x128xf32>
    %230 = vector.extract_strided_slice %228 {offsets = [0, 128], sizes = [8, 128], strides = [1, 1]} : vector<8x256xf32> to vector<8x128xf32>
    %231 = vector.extract_strided_slice %219 {offsets = [0, 256], sizes = [8, 128], strides = [1, 1]} : vector<8x384xf32> to vector<8x128xf32>
    %232 = vector.extract_strided_slice %220 {offsets = [0, 256], sizes = [8, 128], strides = [1, 1]} : vector<8x384xf32> to vector<8x128xf32>
    %233 = arith.addf %232, %193 : vector<8x128xf32>
    %234 = arith.mulf %229, %233 : vector<8x128xf32>
    %235 = arith.addf %231, %234 : vector<8x128xf32>
    %236 = math.tanh %235 : vector<8x128xf32>
    %237 = arith.subf %218, %236 : vector<8x128xf32>
    %238 = arith.mulf %230, %237 : vector<8x128xf32>
    %239 = arith.addf %236, %238 : vector<8x128xf32>
    %240 = vector.extract_strided_slice %196 {offsets = [16, 0], sizes = [8, 384], strides = [1, 1]} : vector<64x384xf32> to vector<8x384xf32>
    %cst_47 = arith.constant dense<0.000000e+00> : vector<8x384xf32>
    %241 = tpu.matmul %239, %187, %cst_47 {dimension_numbers = #tpu.dot_dimension_numbers<[1], [0], [0], [1], [0, 0, 1, 1], [], []>} : vector<8x128xf32>, vector<128x384xf32>, vector<8x384xf32> -> vector<8x384xf32>
    %242 = vector.extract_strided_slice %240 {offsets = [0, 0], sizes = [8, 256], strides = [1, 1]} : vector<8x384xf32> to vector<8x256xf32>
    %243 = vector.extract_strided_slice %241 {offsets = [0, 0], sizes = [8, 256], strides = [1, 1]} : vector<8x384xf32> to vector<8x256xf32>
    %244 = arith.addf %242, %243 : vector<8x256xf32>
    %245 = arith.negf %244 : vector<8x256xf32>
    %246 = math.exp %245 : vector<8x256xf32>
    %cst_48 = arith.constant 1.000000e+00 : f32
    %247 = vector.broadcast %cst_48 : f32 to vector<8x256xf32>
    %248 = arith.addf %247, %246 : vector<8x256xf32>
    %249 = arith.divf %247, %248 : vector<8x256xf32>
    %250 = vector.extract_strided_slice %249 {offsets = [0, 0], sizes = [8, 128], strides = [1, 1]} : vector<8x256xf32> to vector<8x128xf32>
    %251 = vector.extract_strided_slice %249 {offsets = [0, 128], sizes = [8, 128], strides = [1, 1]} : vector<8x256xf32> to vector<8x128xf32>
    %252 = vector.extract_strided_slice %240 {offsets = [0, 256], sizes = [8, 128], strides = [1, 1]} : vector<8x384xf32> to vector<8x128xf32>
    %253 = vector.extract_strided_slice %241 {offsets = [0, 256], sizes = [8, 128], strides = [1, 1]} : vector<8x384xf32> to vector<8x128xf32>
    %254 = arith.addf %253, %193 : vector<8x128xf32>
    %255 = arith.mulf %250, %254 : vector<8x128xf32>
    %256 = arith.addf %252, %255 : vector<8x128xf32>
    %257 = math.tanh %256 : vector<8x128xf32>
    %258 = arith.subf %239, %257 : vector<8x128xf32>
    %259 = arith.mulf %251, %258 : vector<8x128xf32>
    %260 = arith.addf %257, %259 : vector<8x128xf32>
    %261 = vector.extract_strided_slice %196 {offsets = [24, 0], sizes = [8, 384], strides = [1, 1]} : vector<64x384xf32> to vector<8x384xf32>
    %cst_49 = arith.constant dense<0.000000e+00> : vector<8x384xf32>
    %262 = tpu.matmul %260, %187, %cst_49 {dimension_numbers = #tpu.dot_dimension_numbers<[1], [0], [0], [1], [0, 0, 1, 1], [], []>} : vector<8x128xf32>, vector<128x384xf32>, vector<8x384xf32> -> vector<8x384xf32>
    %263 = vector.extract_strided_slice %261 {offsets = [0, 0], sizes = [8, 256], strides = [1, 1]} : vector<8x384xf32> to vector<8x256xf32>
    %264 = vector.extract_strided_slice %262 {offsets = [0, 0], sizes = [8, 256], strides = [1, 1]} : vector<8x384xf32> to vector<8x256xf32>
    %265 = arith.addf %263, %264 : vector<8x256xf32>
    %266 = arith.negf %265 : vector<8x256xf32>
    %267 = math.exp %266 : vector<8x256xf32>
    %cst_50 = arith.constant 1.000000e+00 : f32
    %268 = vector.broadcast %cst_50 : f32 to vector<8x256xf32>
    %269 = arith.addf %268, %267 : vector<8x256xf32>
    %270 = arith.divf %268, %269 : vector<8x256xf32>
    %271 = vector.extract_strided_slice %270 {offsets = [0, 0], sizes = [8, 128], strides = [1, 1]} : vector<8x256xf32> to vector<8x128xf32>
    %272 = vector.extract_strided_slice %270 {offsets = [0, 128], sizes = [8, 128], strides = [1, 1]} : vector<8x256xf32> to vector<8x128xf32>
    %273 = vector.extract_strided_slice %261 {offsets = [0, 256], sizes = [8, 128], strides = [1, 1]} : vector<8x384xf32> to vector<8x128xf32>
    %274 = vector.extract_strided_slice %262 {offsets = [0, 256], sizes = [8, 128], strides = [1, 1]} : vector<8x384xf32> to vector<8x128xf32>
    %275 = arith.addf %274, %193 : vector<8x128xf32>
    %276 = arith.mulf %271, %275 : vector<8x128xf32>
    %277 = arith.addf %273, %276 : vector<8x128xf32>
    %278 = math.tanh %277 : vector<8x128xf32>
    %279 = arith.subf %260, %278 : vector<8x128xf32>
    %280 = arith.mulf %272, %279 : vector<8x128xf32>
    %281 = arith.addf %278, %280 : vector<8x128xf32>
    %282 = vector.extract_strided_slice %196 {offsets = [32, 0], sizes = [8, 384], strides = [1, 1]} : vector<64x384xf32> to vector<8x384xf32>
    %cst_51 = arith.constant dense<0.000000e+00> : vector<8x384xf32>
    %283 = tpu.matmul %281, %187, %cst_51 {dimension_numbers = #tpu.dot_dimension_numbers<[1], [0], [0], [1], [0, 0, 1, 1], [], []>} : vector<8x128xf32>, vector<128x384xf32>, vector<8x384xf32> -> vector<8x384xf32>
    %284 = vector.extract_strided_slice %282 {offsets = [0, 0], sizes = [8, 256], strides = [1, 1]} : vector<8x384xf32> to vector<8x256xf32>
    %285 = vector.extract_strided_slice %283 {offsets = [0, 0], sizes = [8, 256], strides = [1, 1]} : vector<8x384xf32> to vector<8x256xf32>
    %286 = arith.addf %284, %285 : vector<8x256xf32>
    %287 = arith.negf %286 : vector<8x256xf32>
    %288 = math.exp %287 : vector<8x256xf32>
    %cst_52 = arith.constant 1.000000e+00 : f32
    %289 = vector.broadcast %cst_52 : f32 to vector<8x256xf32>
    %290 = arith.addf %289, %288 : vector<8x256xf32>
    %291 = arith.divf %289, %290 : vector<8x256xf32>
    %292 = vector.extract_strided_slice %291 {offsets = [0, 0], sizes = [8, 128], strides = [1, 1]} : vector<8x256xf32> to vector<8x128xf32>
    %293 = vector.extract_strided_slice %291 {offsets = [0, 128], sizes = [8, 128], strides = [1, 1]} : vector<8x256xf32> to vector<8x128xf32>
    %294 = vector.extract_strided_slice %282 {offsets = [0, 256], sizes = [8, 128], strides = [1, 1]} : vector<8x384xf32> to vector<8x128xf32>
    %295 = vector.extract_strided_slice %283 {offsets = [0, 256], sizes = [8, 128], strides = [1, 1]} : vector<8x384xf32> to vector<8x128xf32>
    %296 = arith.addf %295, %193 : vector<8x128xf32>
    %297 = arith.mulf %292, %296 : vector<8x128xf32>
    %298 = arith.addf %294, %297 : vector<8x128xf32>
    %299 = math.tanh %298 : vector<8x128xf32>
    %300 = arith.subf %281, %299 : vector<8x128xf32>
    %301 = arith.mulf %293, %300 : vector<8x128xf32>
    %302 = arith.addf %299, %301 : vector<8x128xf32>
    %303 = vector.extract_strided_slice %196 {offsets = [40, 0], sizes = [8, 384], strides = [1, 1]} : vector<64x384xf32> to vector<8x384xf32>
    %cst_53 = arith.constant dense<0.000000e+00> : vector<8x384xf32>
    %304 = tpu.matmul %302, %187, %cst_53 {dimension_numbers = #tpu.dot_dimension_numbers<[1], [0], [0], [1], [0, 0, 1, 1], [], []>} : vector<8x128xf32>, vector<128x384xf32>, vector<8x384xf32> -> vector<8x384xf32>
    %305 = vector.extract_strided_slice %303 {offsets = [0, 0], sizes = [8, 256], strides = [1, 1]} : vector<8x384xf32> to vector<8x256xf32>
    %306 = vector.extract_strided_slice %304 {offsets = [0, 0], sizes = [8, 256], strides = [1, 1]} : vector<8x384xf32> to vector<8x256xf32>
    %307 = arith.addf %305, %306 : vector<8x256xf32>
    %308 = arith.negf %307 : vector<8x256xf32>
    %309 = math.exp %308 : vector<8x256xf32>
    %cst_54 = arith.constant 1.000000e+00 : f32
    %310 = vector.broadcast %cst_54 : f32 to vector<8x256xf32>
    %311 = arith.addf %310, %309 : vector<8x256xf32>
    %312 = arith.divf %310, %311 : vector<8x256xf32>
    %313 = vector.extract_strided_slice %312 {offsets = [0, 0], sizes = [8, 128], strides = [1, 1]} : vector<8x256xf32> to vector<8x128xf32>
    %314 = vector.extract_strided_slice %312 {offsets = [0, 128], sizes = [8, 128], strides = [1, 1]} : vector<8x256xf32> to vector<8x128xf32>
    %315 = vector.extract_strided_slice %303 {offsets = [0, 256], sizes = [8, 128], strides = [1, 1]} : vector<8x384xf32> to vector<8x128xf32>
    %316 = vector.extract_strided_slice %304 {offsets = [0, 256], sizes = [8, 128], strides = [1, 1]} : vector<8x384xf32> to vector<8x128xf32>
    %317 = arith.addf %316, %193 : vector<8x128xf32>
    %318 = arith.mulf %313, %317 : vector<8x128xf32>
    %319 = arith.addf %315, %318 : vector<8x128xf32>
    %320 = math.tanh %319 : vector<8x128xf32>
    %321 = arith.subf %302, %320 : vector<8x128xf32>
    %322 = arith.mulf %314, %321 : vector<8x128xf32>
    %323 = arith.addf %320, %322 : vector<8x128xf32>
    %324 = vector.extract_strided_slice %196 {offsets = [48, 0], sizes = [8, 384], strides = [1, 1]} : vector<64x384xf32> to vector<8x384xf32>
    %cst_55 = arith.constant dense<0.000000e+00> : vector<8x384xf32>
    %325 = tpu.matmul %323, %187, %cst_55 {dimension_numbers = #tpu.dot_dimension_numbers<[1], [0], [0], [1], [0, 0, 1, 1], [], []>} : vector<8x128xf32>, vector<128x384xf32>, vector<8x384xf32> -> vector<8x384xf32>
    %326 = vector.extract_strided_slice %324 {offsets = [0, 0], sizes = [8, 256], strides = [1, 1]} : vector<8x384xf32> to vector<8x256xf32>
    %327 = vector.extract_strided_slice %325 {offsets = [0, 0], sizes = [8, 256], strides = [1, 1]} : vector<8x384xf32> to vector<8x256xf32>
    %328 = arith.addf %326, %327 : vector<8x256xf32>
    %329 = arith.negf %328 : vector<8x256xf32>
    %330 = math.exp %329 : vector<8x256xf32>
    %cst_56 = arith.constant 1.000000e+00 : f32
    %331 = vector.broadcast %cst_56 : f32 to vector<8x256xf32>
    %332 = arith.addf %331, %330 : vector<8x256xf32>
    %333 = arith.divf %331, %332 : vector<8x256xf32>
    %334 = vector.extract_strided_slice %333 {offsets = [0, 0], sizes = [8, 128], strides = [1, 1]} : vector<8x256xf32> to vector<8x128xf32>
    %335 = vector.extract_strided_slice %333 {offsets = [0, 128], sizes = [8, 128], strides = [1, 1]} : vector<8x256xf32> to vector<8x128xf32>
    %336 = vector.extract_strided_slice %324 {offsets = [0, 256], sizes = [8, 128], strides = [1, 1]} : vector<8x384xf32> to vector<8x128xf32>
    %337 = vector.extract_strided_slice %325 {offsets = [0, 256], sizes = [8, 128], strides = [1, 1]} : vector<8x384xf32> to vector<8x128xf32>
    %338 = arith.addf %337, %193 : vector<8x128xf32>
    %339 = arith.mulf %334, %338 : vector<8x128xf32>
    %340 = arith.addf %336, %339 : vector<8x128xf32>
    %341 = math.tanh %340 : vector<8x128xf32>
    %342 = arith.subf %323, %341 : vector<8x128xf32>
    %343 = arith.mulf %335, %342 : vector<8x128xf32>
    %344 = arith.addf %341, %343 : vector<8x128xf32>
    %345 = vector.extract_strided_slice %196 {offsets = [56, 0], sizes = [8, 384], strides = [1, 1]} : vector<64x384xf32> to vector<8x384xf32>
    %cst_57 = arith.constant dense<0.000000e+00> : vector<8x384xf32>
    %346 = tpu.matmul %344, %187, %cst_57 {dimension_numbers = #tpu.dot_dimension_numbers<[1], [0], [0], [1], [0, 0, 1, 1], [], []>} : vector<8x128xf32>, vector<128x384xf32>, vector<8x384xf32> -> vector<8x384xf32>
    %347 = vector.extract_strided_slice %345 {offsets = [0, 0], sizes = [8, 256], strides = [1, 1]} : vector<8x384xf32> to vector<8x256xf32>
    %348 = vector.extract_strided_slice %346 {offsets = [0, 0], sizes = [8, 256], strides = [1, 1]} : vector<8x384xf32> to vector<8x256xf32>
    %349 = arith.addf %347, %348 : vector<8x256xf32>
    %350 = arith.negf %349 : vector<8x256xf32>
    %351 = math.exp %350 : vector<8x256xf32>
    %cst_58 = arith.constant 1.000000e+00 : f32
    %352 = vector.broadcast %cst_58 : f32 to vector<8x256xf32>
    %353 = arith.addf %352, %351 : vector<8x256xf32>
    %354 = arith.divf %352, %353 : vector<8x256xf32>
    %355 = vector.extract_strided_slice %354 {offsets = [0, 0], sizes = [8, 128], strides = [1, 1]} : vector<8x256xf32> to vector<8x128xf32>
    %356 = vector.extract_strided_slice %354 {offsets = [0, 128], sizes = [8, 128], strides = [1, 1]} : vector<8x256xf32> to vector<8x128xf32>
    %357 = vector.extract_strided_slice %345 {offsets = [0, 256], sizes = [8, 128], strides = [1, 1]} : vector<8x384xf32> to vector<8x128xf32>
    %358 = vector.extract_strided_slice %346 {offsets = [0, 256], sizes = [8, 128], strides = [1, 1]} : vector<8x384xf32> to vector<8x128xf32>
    %359 = arith.addf %358, %193 : vector<8x128xf32>
    %360 = arith.mulf %355, %359 : vector<8x128xf32>
    %361 = arith.addf %357, %360 : vector<8x128xf32>
    %362 = math.tanh %361 : vector<8x128xf32>
    %363 = arith.subf %344, %362 : vector<8x128xf32>
    %364 = arith.mulf %356, %363 : vector<8x128xf32>
    %365 = arith.addf %362, %364 : vector<8x128xf32>
    %cst_59 = arith.constant 0.000000e+00 : f32
    %366 = vector.broadcast %cst_59 : f32 to vector<8x128xf32>
    %367 = arith.maximumf %365, %366 : vector<8x128xf32>
    %c0_60 = arith.constant 0 : index
    %c0_61 = arith.constant 0 : index
    %368 = vector.load %arg5[%c0_60, %c0_61] : memref<128x4xf32, #tpu.memory_space<vmem>>, vector<128x4xf32>
    %cst_62 = arith.constant dense<0.000000e+00> : vector<8x4xf32>
    %369 = tpu.matmul %367, %368, %cst_62 {dimension_numbers = #tpu.dot_dimension_numbers<[1], [0], [0], [1], [0, 0, 1, 1], [], []>} : vector<8x128xf32>, vector<128x4xf32>, vector<8x4xf32> -> vector<8x4xf32>
    %c0_63 = arith.constant 0 : index
    %c0_64 = arith.constant 0 : index
    %370 = vector.load %arg6[%c0_63, %c0_64] : memref<1x4xf32, #tpu.memory_space<vmem>>, vector<1x4xf32>
    %371 = vector.broadcast %370 : vector<1x4xf32> to vector<8x4xf32>
    %372 = arith.addf %369, %371 : vector<8x4xf32>
    %c0_65 = arith.constant 0 : index
    %c0_66 = arith.constant 0 : index
    %373 = vector.load %arg7[%c0_65, %c0_66] : memref<8x4xf32, #tpu.memory_space<vmem>>, vector<8x4xf32>
    tpu.vector_store %arg7[%c0_65, %c0_66], %372 {strides = array<i32>} : memref<8x4xf32, #tpu.memory_space<vmem>>, vector<8x4xf32>,
    return
  }
}

</mosaic_0001>

<llo_original>
// kernel: tpu_custom_call.1
$region0: #{tpu_custom_call.1}
  #allocation0 [shape = 'u32[]', space=smem, size = 0x4, offset = 0x4, fixed_abs, tag = 'smem constant byte address 0x4 - core index']
  #allocation1 [shape = 'u32[144,128]{1,0:T(1,128)}', space=vmem, size = 0x12000, scoped, tag = 'internal scratch']
  %s0 = inlined_call_operand.vmem [shape: f32[64,128], index: 0, kind: input, shape index: {}]
  %s1 = inlined_call_operand.hbm [shape: f32[2,128,384], index: 1, kind: input, shape index: {}]
  %s2 = inlined_call_operand.hbm [shape: f32[2,128,384], index: 2, kind: input, shape index: {}]
  %s3 = inlined_call_operand.vmem [shape: f32[2,1,384], index: 3, kind: input, shape index: {}]
  %s4 = inlined_call_operand.vmem [shape: f32[2,1,128], index: 4, kind: input, shape index: {}]
  %s5 = inlined_call_operand.vmem [shape: f32[128,4], index: 5, kind: input, shape index: {}]
  %s6 = inlined_call_operand.vmem [shape: f32[1,4], index: 6, kind: input, shape index: {}]
  %s7 = inlined_call_operand.vmem [shape: f32[8,4], index: 7, kind: output, shape index: {}]
  %s8 = sld [smem:[#allocation0]]
  $region46: #{tpu_custom_call.1} parent=0
    _
  %s10 = ssub.s32 1, %s8
  %s11 = scalar_select 0, %s10, %s8
  $region1: #{tpu_custom_call.1} parent=0
    #allocation2 [shape = 'u8[393216]{0}', space=vmem, size = 0x60000, scoped, tag = 'input window, operand 1, single buffered']
    #allocation3 [shape = 's32[1]{0}', space=sflag, size = 0x4, scoped, tag = 'scoped memory for tpu_custom_call.1']
    #allocation4 [shape = 'u8[393216]{0}', space=vmem, size = 0x60000, scoped, tag = 'input window, operand 2, single buffered']
    #allocation5 [shape = 's32[1]{0}', space=sflag, size = 0x4, scoped, tag = 'scoped memory for tpu_custom_call.1']
    %12 = vsyncpa [#allocation3], 0
    %13 = vsyncpa [#allocation5], 0
    // Predicated region
    $region2: #{tpu_custom_call.1} parent=1 // pred_check
      _
    $region3: #{tpu_custom_call.1} parent=1 // pred_check_branch
      %15 = sbr.rel (0) target = $region5
    $region4: #{tpu_custom_call.1} parent=1 // pred_region
      _
    $region5: #{tpu_custom_call.1} parent=1 // pred_fallthru
      _
    // Predicated region
    $region6: #{tpu_custom_call.1} parent=1 // pred_check
      _
    $region7: #{tpu_custom_call.1} parent=1 // pred_check_branch
      %17 = sbr.rel (0) target = $region9
    $region8: #{tpu_custom_call.1} parent=1 // pred_region
      %s19 = ssub.s32 12288, 12288
      %20 = vsyncadd [#allocation3], %s19
      %s21 = sshll.u32 [#allocation2], 4
      %s22 = int_to_ptr.vmem [resolvable:$true] %s21
      %27 = dma.hbm_to_vmem [thread:$0]  %s1, 12288, %s22, [#allocation3], 384, 384, 24
    $region9: #{tpu_custom_call.1} parent=1 // pred_fallthru
      _
    // Predicated region
    $region10: #{tpu_custom_call.1} parent=1 // pred_check
      _
    $region11: #{tpu_custom_call.1} parent=1 // pred_check_branch
      %29 = sbr.rel (0) target = $region13
    $region12: #{tpu_custom_call.1} parent=1 // pred_region
      %s31 = ssub.s32 12288, 12288
      %32 = vsyncadd [#allocation5], %s31
      %s33 = sshll.u32 [#allocation4], 4
      %s34 = int_to_ptr.vmem [resolvable:$true] %s33
      %39 = dma.hbm_to_vmem [thread:$0]  %s2, 12288, %s34, [#allocation5], 384, 384, 24
    $region13: #{tpu_custom_call.1} parent=1 // pred_fallthru
      _
    // Predicated region
    $region14: #{tpu_custom_call.1} parent=1 // pred_check
      _
    $region15: #{tpu_custom_call.1} parent=1 // pred_check_branch
      %41 = sbr.rel (0) target = $region17
    $region16: #{tpu_custom_call.1} parent=1 // pred_region
      _
    $region17: #{tpu_custom_call.1} parent=1 // pred_fallthru
      _
    // Predicated region
    $region18: #{tpu_custom_call.1} parent=1 // pred_check
      _
    $region19: #{tpu_custom_call.1} parent=1 // pred_check_branch
      %43 = sbr.rel (0) target = $region21
    $region20: #{tpu_custom_call.1} parent=1 // pred_region
      _
    $region21: #{tpu_custom_call.1} parent=1 // pred_fallthru
      _
    // Predicated region
    $region22: #{tpu_custom_call.1} parent=1 // pred_check
      _
    $region23: #{tpu_custom_call.1} parent=1 // pred_check_branch
      %45 = sbr.rel (0) target = $region25
    $region24: #{tpu_custom_call.1} parent=1 // pred_region
      _
    $region25: #{tpu_custom_call.1} parent=1 // pred_fallthru
      _
    // Predicated region
    $region26: #{tpu_custom_call.1} parent=1 // pred_check
      _
    $region27: #{tpu_custom_call.1} parent=1 // pred_check_branch
      %47 = sbr.rel (0) target = $region29
    $region28: #{tpu_custom_call.1} parent=1 // pred_region
      _
    $region29: #{tpu_custom_call.1} parent=1 // pred_fallthru
      _
    // Predicated region
    $region30: #{tpu_custom_call.1} parent=1 // pred_check
      _
    $region31: #{tpu_custom_call.1} parent=1 // pred_check_branch
      %49 = sbr.rel (0) target = $region33
    $region32: #{tpu_custom_call.1} parent=1 // pred_region
      %50 = dma.done [#allocation3], 12288
    $region33: #{tpu_custom_call.1} parent=1 // pred_fallthru
      _
    // Predicated region
    $region34: #{tpu_custom_call.1} parent=1 // pred_check
      _
    $region35: #{tpu_custom_call.1} parent=1 // pred_check_branch
      %52 = sbr.rel (0) target = $region37
    $region36: #{tpu_custom_call.1} parent=1 // pred_region
      %53 = dma.done [#allocation5], 12288
    $region37: #{tpu_custom_call.1} parent=1 // pred_fallthru
      _
    %v54 = vld [vmem:[%s0] sm:$0xff]
    %v55 = vld [vmem:[%s0 + $0x8] sm:$0xff]
    %v56 = vld [vmem:[%s0 + $0x10] sm:$0xff]
    %v57 = vld [vmem:[%s0 + $0x18] sm:$0xff]
    %v58 = vld [vmem:[%s0 + $0x20] sm:$0xff]
    %v59 = vld [vmem:[%s0 + $0x28] sm:$0xff]
    %v60 = vld [vmem:[%s0 + $0x30] sm:$0xff]
    %v61 = vld [vmem:[%s0 + $0x38] sm:$0xff]
    %v62 = vld [vmem:[#allocation2] sm:$0xff]
    %v63 = vld [vmem:[#allocation2 + $0x8] sm:$0xff]
    %v64 = vld [vmem:[#allocation2 + $0x10] sm:$0xff]
    %v65 = vld [vmem:[#allocation2 + $0x18] sm:$0xff]
    %v66 = vld [vmem:[#allocation2 + $0x20] sm:$0xff]
    %v67 = vld [vmem:[#allocation2 + $0x28] sm:$0xff]
    %v68 = vld [vmem:[#allocation2 + $0x30] sm:$0xff]
    %v69 = vld [vmem:[#allocation2 + $0x38] sm:$0xff]
    %v70 = vld [vmem:[#allocation2 + $0x40] sm:$0xff]
    %v71 = vld [vmem:[#allocation2 + $0x48] sm:$0xff]
    %v72 = vld [vmem:[#allocation2 + $0x50] sm:$0xff]
    %v73 = vld [vmem:[#allocation2 + $0x58] sm:$0xff]
    %v74 = vld [vmem:[#allocation2 + $0x60] sm:$0xff]
    %v75 = vld [vmem:[#allocation2 + $0x68] sm:$0xff]
    %v76 = vld [vmem:[#allocation2 + $0x70] sm:$0xff]
    %v77 = vld [vmem:[#allocation2 + $0x78] sm:$0xff]
    %v78 = vld [vmem:[#allocation2 + $0x80] sm:$0xff]
    %v79 = vld [vmem:[#allocation2 + $0x88] sm:$0xff]
    %v80 = vld [vmem:[#allocation2 + $0x90] sm:$0xff]
    %v81 = vld [vmem:[#allocation2 + $0x98] sm:$0xff]
    %v82 = vld [vmem:[#allocation2 + $0xa0] sm:$0xff]
    %v83 = vld [vmem:[#allocation2 + $0xa8] sm:$0xff]
    %v84 = vld [vmem:[#allocation2 + $0xb0] sm:$0xff]
    %v85 = vld [vmem:[#allocation2 + $0xb8] sm:$0xff]
    %v86 = vld [vmem:[#allocation2 + $0xc0] sm:$0xff]
    %v87 = vld [vmem:[#allocation2 + $0xc8] sm:$0xff]
    %v88 = vld [vmem:[#allocation2 + $0xd0] sm:$0xff]
    %v89 = vld [vmem:[#allocation2 + $0xd8] sm:$0xff]
    %v90 = vld [vmem:[#allocation2 + $0xe0] sm:$0xff]
    %v91 = vld [vmem:[#allocation2 + $0xe8] sm:$0xff]
    %v92 = vld [vmem:[#allocation2 + $0xf0] sm:$0xff]
    %v93 = vld [vmem:[#allocation2 + $0xf8] sm:$0xff]
    %v94 = vld [vmem:[#allocation2 + $0x100] sm:$0xff]
    %v95 = vld [vmem:[#allocation2 + $0x108] sm:$0xff]
    %v96 = vld [vmem:[#allocation2 + $0x110] sm:$0xff]
    %v97 = vld [vmem:[#allocation2 + $0x118] sm:$0xff]
    %v98 = vld [vmem:[#allocation2 + $0x120] sm:$0xff]
    %v99 = vld [vmem:[#allocation2 + $0x128] sm:$0xff]
    %v100 = vld [vmem:[#allocation2 + $0x130] sm:$0xff]
    %v101 = vld [vmem:[#allocation2 + $0x138] sm:$0xff]
    %v102 = vld [vmem:[#allocation2 + $0x140] sm:$0xff]
    %v103 = vld [vmem:[#allocation2 + $0x148] sm:$0xff]
    %v104 = vld [vmem:[#allocation2 + $0x150] sm:$0xff]
    %v105 = vld [vmem:[#allocation2 + $0x158] sm:$0xff]
    %v106 = vld [vmem:[#allocation2 + $0x160] sm:$0xff]
    %v107 = vld [vmem:[#allocation2 + $0x168] sm:$0xff]
    %v108 = vld [vmem:[#allocation2 + $0x170] sm:$0xff]
    %v109 = vld [vmem:[#allocation2 + $0x178] sm:$0xff]
    %v110 = vld [vmem:[#allocation4] sm:$0xff]
    %v111 = vld [vmem:[#allocation4 + $0x8] sm:$0xff]
    %v112 = vld [vmem:[#allocation4 + $0x10] sm:$0xff]
    %v113 = vld [vmem:[#allocation4 + $0x18] sm:$0xff]
    %v114 = vld [vmem:[#allocation4 + $0x20] sm:$0xff]
    %v115 = vld [vmem:[#allocation4 + $0x28] sm:$0xff]
    %v116 = vld [vmem:[#allocation4 + $0x30] sm:$0xff]
    %v117 = vld [vmem:[#allocation4 + $0x38] sm:$0xff]
    %v118 = vld [vmem:[#allocation4 + $0x40] sm:$0xff]
    %v119 = vld [vmem:[#allocation4 + $0x48] sm:$0xff]
    %v120 = vld [vmem:[#allocation4 + $0x50] sm:$0xff]
    %v121 = vld [vmem:[#allocation4 + $0x58] sm:$0xff]
    %v122 = vld [vmem:[#allocation4 + $0x60] sm:$0xff]
    %v123 = vld [vmem:[#allocation4 + $0x68] sm:$0xff]
    %v124 = vld [vmem:[#allocation4 + $0x70] sm:$0xff]
    %v125 = vld [vmem:[#allocation4 + $0x78] sm:$0xff]
    %v126 = vld [vmem:[#allocation4 + $0x80] sm:$0xff]
    %v127 = vld [vmem:[#allocation4 + $0x88] sm:$0xff]
    %v128 = vld [vmem:[#allocation4 + $0x90] sm:$0xff]
    %v129 = vld [vmem:[#allocation4 + $0x98] sm:$0xff]
    %v130 = vld [vmem:[#allocation4 + $0xa0] sm:$0xff]
    %v131 = vld [vmem:[#allocation4 + $0xa8] sm:$0xff]
    %v132 = vld [vmem:[#allocation4 + $0xb0] sm:$0xff]
    %v133 = vld [vmem:[#allocation4 + $0xb8] sm:$0xff]
    %v134 = vld [vmem:[#allocation4 + $0xc0] sm:$0xff]
    %v135 = vld [vmem:[#allocation4 + $0xc8] sm:$0xff]
    %v136 = vld [vmem:[#allocation4 + $0xd0] sm:$0xff]
    %v137 = vld [vmem:[#allocation4 + $0xd8] sm:$0xff]
    %v138 = vld [vmem:[#allocation4 + $0xe0] sm:$0xff]
    %v139 = vld [vmem:[#allocation4 + $0xe8] sm:$0xff]
    %v140 = vld [vmem:[#allocation4 + $0xf0] sm:$0xff]
    %v141 = vld [vmem:[#allocation4 + $0xf8] sm:$0xff]
    %v142 = vld [vmem:[#allocation4 + $0x100] sm:$0xff]
    %v143 = vld [vmem:[#allocation4 + $0x108] sm:$0xff]
    %v144 = vld [vmem:[#allocation4 + $0x110] sm:$0xff]
    %v145 = vld [vmem:[#allocation4 + $0x118] sm:$0xff]
    %v146 = vld [vmem:[#allocation4 + $0x120] sm:$0xff]
    %v147 = vld [vmem:[#allocation4 + $0x128] sm:$0xff]
    %v148 = vld [vmem:[#allocation4 + $0x130] sm:$0xff]
    %v149 = vld [vmem:[#allocation4 + $0x138] sm:$0xff]
    %v150 = vld [vmem:[#allocation4 + $0x140] sm:$0xff]
    %v151 = vld [vmem:[#allocation4 + $0x148] sm:$0xff]
    %v152 = vld [vmem:[#allocation4 + $0x150] sm:$0xff]
    %v153 = vld [vmem:[#allocation4 + $0x158] sm:$0xff]
    %v154 = vld [vmem:[#allocation4 + $0x160] sm:$0xff]
    %v155 = vld [vmem:[#allocation4 + $0x168] sm:$0xff]
    %v156 = vld [vmem:[#allocation4 + $0x170] sm:$0xff]
    %v157 = vld [vmem:[#allocation4 + $0x178] sm:$0xff]
    %v158 = vld [vmem:[%s3] sm:$0x7]
    %v159 = vld [vmem:[%s4] sm:$0x1]
    %v161 = vlaneseq
    %v162 = vshrl.u32 %v161, 7
    %v163 = vsub.s32 0, %v162
    %v164 = vrot.slane %v159, %v163
    %v167 = vlaneseq
    %v168 = vshrl.u32 %v167, 7
    %v169 = vsub.s32 0, %v168
    %v170 = vrot.slane %v158, %v169
    %v171 = vlaneseq
    %v172 = vshrl.u32 %v171, 7
    %v173 = vsub.s32 1, %v172
    %v174 = vrot.slane %v158, %v173
    %v175 = vlaneseq
    %v176 = vshrl.u32 %v175, 7
    %v177 = vsub.s32 2, %v176
    %v178 = vrot.slane %v158, %v177
    %182 = vmatprep.subr.mxu0 %v63
    %183 = vmatpush1.msra.mxu0 %v62
    %184 = vmatprep.subr.mxu0 %v66
    %185 = vmatpush1.msra.mxu0 %v65
    %186 = vmatprep.subr.mxu0 %v69
    %187 = vmatpush1.msra.mxu0 %v68
    %188 = vmatprep.subr.mxu0 %v72
    %189 = vmatpush1.msra.mxu0 %v71
    %190 = vmatprep.subr.mxu0 %v75
    %191 = vmatpush1.msra.mxu0 %v74
    %192 = vmatprep.subr.mxu0 %v78
    %193 = vmatpush1.msra.mxu0 %v77
    %194 = vmatprep.subr.mxu0 %v81
    %195 = vmatpush1.msra.mxu0 %v80
    %196 = vmatprep.subr.mxu0 %v84
    %197 = vmatpush1.msra.mxu0 %v83
    %198 = vmatprep.subr.mxu0 %v87
    %199 = vmatpush1.msra.mxu0 %v86
    %200 = vmatprep.subr.mxu0 %v90
    %201 = vmatpush1.msra.mxu0 %v89
    %202 = vmatprep.subr.mxu0 %v93
    %203 = vmatpush1.msra.mxu0 %v92
    %204 = vmatprep.subr.mxu0 %v96
    %205 = vmatpush1.msra.mxu0 %v95
    %206 = vmatprep.subr.mxu0 %v99
    %207 = vmatpush1.msra.mxu0 %v98
    %208 = vmatprep.subr.mxu0 %v102
    %209 = vmatpush1.msra.mxu0 %v101
    %210 = vmatprep.subr.mxu0 %v105
    %211 = vmatpush1.msra.mxu0 %v104
    %212 = vmatprep.subr.mxu0 %v108
    %213 = vmatpush1.msra.mxu0 %v107
    %214 = vmatprep.subr.mxu0 0.0
    %215 = vmatpush1.msra.mxu0 0.0
    %216 = vmatprep.subr.mxu0 0.0
    %217 = vmatpush1.msra.mxu0 0.0
    %218 = vmatprep.subr.mxu0 0.0
    %219 = vmatpush1.msra.mxu0 0.0
    %220 = vmatprep.subr.mxu0 0.0
    %221 = vmatpush1.msra.mxu0 0.0
    %222 = vmatprep.subr.mxu0 0.0
    %223 = vmatpush1.msra.mxu0 0.0
    %224 = vmatprep.subr.mxu0 0.0
    %225 = vmatpush1.msra.mxu0 0.0
    %226 = vmatprep.subr.mxu0 0.0
    %227 = vmatpush1.msra.mxu0 0.0
    %228 = vmatprep.subr.mxu0 0.0
    %229 = vmatpush1.msra.mxu0 0.0
    %230 = vmatprep.subr.mxu0 0.0
    %231 = vmatpush1.msra.mxu0 0.0
    %232 = vmatprep.subr.mxu0 0.0
    %233 = vmatpush1.msra.mxu0 0.0
    %234 = vmatprep.subr.mxu0 0.0
    %235 = vmatpush1.msra.mxu0 0.0
    %236 = vmatprep.subr.mxu0 0.0
    %237 = vmatpush1.msra.mxu0 0.0
    %238 = vmatprep.subr.mxu0 0.0
    %239 = vmatpush1.msra.mxu0 0.0
    %240 = vmatprep.subr.mxu0 0.0
    %241 = vmatpush1.msra.mxu0 0.0
    %242 = vmatprep.subr.mxu0 0.0
    %243 = vmatpush1.msra.mxu0 0.0
    %244 = vmatprep.subr.mxu0 0.0
    %245 = vmatpush1.msra.mxu0 0.0
    %246 = vmatprep.mubr.f32.mxu0 0.0
    %247 = vmatmul.mubr.f32.gmra.mrb[0].mxu0 %v54
    %v248 = vpop.f32.mrb[0].mxu0
    %v249 = vadd.f32 %v170, %v248
    %v250 = vpop.f32.mrb[0].mxu0
    %v251 = vadd.f32 %v174, %v250
    %252 = vmatprep.mubr.f32.mxu0 0.0
    %253 = vmatmul.mubr.f32.gmra.mrb[0].mxu0 %v55
    %v254 = vpop.f32.mrb[0].mxu0
    %v255 = vadd.f32 %v170, %v254
    %v256 = vpop.f32.mrb[0].mxu0
    %v257 = vadd.f32 %v174, %v256
    %258 = vmatprep.mubr.f32.mxu0 0.0
    %259 = vmatmul.mubr.f32.gmra.mrb[0].mxu0 %v56
    %v260 = vpop.f32.mrb[0].mxu0
    %v261 = vadd.f32 %v170, %v260
    %v262 = vpop.f32.mrb[0].mxu0
    %v263 = vadd.f32 %v174, %v262
    %264 = vmatprep.mubr.f32.mxu0 0.0
    %265 = vmatmul.mubr.f32.gmra.mrb[0].mxu0 %v57
    %v266 = vpop.f32.mrb[0].mxu0
    %v267 = vadd.f32 %v170, %v266
    %v268 = vpop.f32.mrb[0].mxu0
    %v269 = vadd.f32 %v174, %v268
    %270 = vmatprep.mubr.f32.mxu0 0.0
    %271 = vmatmul.mubr.f32.gmra.mrb[0].mxu0 %v58
    %v272 = vpop.f32.mrb[0].mxu0
    %v273 = vadd.f32 %v170, %v272
    %v274 = vpop.f32.mrb[0].mxu0
    %v275 = vadd.f32 %v174, %v274
    %276 = vmatprep.mubr.f32.mxu0 0.0
    %277 = vmatmul.mubr.f32.gmra.mrb[0].mxu0 %v59
    %v278 = vpop.f32.mrb[0].mxu0
    %v279 = vadd.f32 %v170, %v278
    %v280 = vpop.f32.mrb[0].mxu0
    %v281 = vadd.f32 %v174, %v280
    %282 = vmatprep.mubr.f32.mxu0 0.0
    %283 = vmatmul.mubr.f32.gmra.mrb[0].mxu0 %v60
    %v284 = vpop.f32.mrb[0].mxu0
    %v285 = vadd.f32 %v170, %v284
    %v286 = vpop.f32.mrb[0].mxu0
    %v287 = vadd.f32 %v174, %v286
    %288 = vmatprep.mubr.f32.mxu0 0.0
    %289 = vmatmul.mubr.f32.gmra.mrb[0].mxu0 %v61
    %v290 = vpop.f32.mrb[0].mxu0
    %v291 = vadd.f32 %v170, %v290
    %v292 = vpop.f32.mrb[0].mxu0
    %v293 = vadd.f32 %v174, %v292
    %294 = vdwg.mxu0
    %295 = vmatprep.subr.mxu0 0.0
    %296 = vmatpush1.msra.mxu0 %v64
    %297 = vmatprep.subr.mxu0 0.0
    %298 = vmatpush1.msra.mxu0 %v67
    %299 = vmatprep.subr.mxu0 0.0
    %300 = vmatpush1.msra.mxu0 %v70
    %301 = vmatprep.subr.mxu0 0.0
    %302 = vmatpush1.msra.mxu0 %v73
    %303 = vmatprep.subr.mxu0 0.0
    %304 = vmatpush1.msra.mxu0 %v76
    %305 = vmatprep.subr.mxu0 0.0
    %306 = vmatpush1.msra.mxu0 %v79
    %307 = vmatprep.subr.mxu0 0.0
    %308 = vmatpush1.msra.mxu0 %v82
    %309 = vmatprep.subr.mxu0 0.0
    %310 = vmatpush1.msra.mxu0 %v85
    %311 = vmatprep.subr.mxu0 0.0
    %312 = vmatpush1.msra.mxu0 %v88
    %313 = vmatprep.subr.mxu0 0.0
    %314 = vmatpush1.msra.mxu0 %v91
    %315 = vmatprep.subr.mxu0 0.0
    %316 = vmatpush1.msra.mxu0 %v94
    %317 = vmatprep.subr.mxu0 0.0
    %318 = vmatpush1.msra.mxu0 %v97
    %319 = vmatprep.subr.mxu0 0.0
    %320 = vmatpush1.msra.mxu0 %v100
    %321 = vmatprep.subr.mxu0 0.0
    %322 = vmatpush1.msra.mxu0 %v103
    %323 = vmatprep.subr.mxu0 0.0
    %324 = vmatpush1.msra.mxu0 %v106
    %325 = vmatprep.subr.mxu0 0.0
    %326 = vmatpush1.msra.mxu0 %v109
    %327 = vmatprep.subr.mxu0 0.0
    %328 = vmatpush1.msra.mxu0 0.0
    %329 = vmatprep.subr.mxu0 0.0
    %330 = vmatpush1.msra.mxu0 0.0
    %331 = vmatprep.subr.mxu0 0.0
    %332 = vmatpush1.msra.mxu0 0.0
    %333 = vmatprep.subr.mxu0 0.0
    %334 = vmatpush1.msra.mxu0 0.0
    %335 = vmatprep.subr.mxu0 0.0
    %336 = vmatpush1.msra.mxu0 0.0
    %337 = vmatprep.subr.mxu0 0.0
    %338 = vmatpush1.msra.mxu0 0.0
    %339 = vmatprep.subr.mxu0 0.0
    %340 = vmatpush1.msra.mxu0 0.0
    %341 = vmatprep.subr.mxu0 0.0
    %342 = vmatpush1.msra.mxu0 0.0
    %343 = vmatprep.subr.mxu0 0.0
    %344 = vmatpush1.msra.mxu0 0.0
    %345 = vmatprep.subr.mxu0 0.0
    %346 = vmatpush1.msra.mxu0 0.0
    %347 = vmatprep.subr.mxu0 0.0
    %348 = vmatpush1.msra.mxu0 0.0
    %349 = vmatprep.subr.mxu0 0.0
    %350 = vmatpush1.msra.mxu0 0.0
    %351 = vmatprep.subr.mxu0 0.0
    %352 = vmatpush1.msra.mxu0 0.0
    %353 = vmatprep.subr.mxu0 0.0
    %354 = vmatpush1.msra.mxu0 0.0
    %355 = vmatprep.subr.mxu0 0.0
    %356 = vmatpush1.msra.mxu0 0.0
    %357 = vmatprep.subr.mxu0 0.0
    %358 = vmatpush1.msra.mxu0 0.0
    %359 = vmatprep.mubr.f32.mxu0 0.0
    %360 = vmatmul.mubr.f32.gmra.mrb[0].mxu0 %v54
    %v361 = vpop.f32.mrb[0].mxu0
    %v362 = vadd.f32 %v178, %v361
    %v363 = vpop.f32.mrb[0].mxu0
    %364 = vmatprep.mubr.f32.mxu0 0.0
    %365 = vmatmul.mubr.f32.gmra.mrb[0].mxu0 %v55
    %v366 = vpop.f32.mrb[0].mxu0
    %v367 = vadd.f32 %v178, %v366
    %v368 = vpop.f32.mrb[0].mxu0
    %369 = vmatprep.mubr.f32.mxu0 0.0
    %370 = vmatmul.mubr.f32.gmra.mrb[0].mxu0 %v56
    %v371 = vpop.f32.mrb[0].mxu0
    %v372 = vadd.f32 %v178, %v371
    %v373 = vpop.f32.mrb[0].mxu0
    %374 = vmatprep.mubr.f32.mxu0 0.0
    %375 = vmatmul.mubr.f32.gmra.mrb[0].mxu0 %v57
    %v376 = vpop.f32.mrb[0].mxu0
    %v377 = vadd.f32 %v178, %v376
    %v378 = vpop.f32.mrb[0].mxu0
    %379 = vmatprep.mubr.f32.mxu0 0.0
    %380 = vmatmul.mubr.f32.gmra.mrb[0].mxu0 %v58
    %v381 = vpop.f32.mrb[0].mxu0
    %v382 = vadd.f32 %v178, %v381
    %v383 = vpop.f32.mrb[0].mxu0
    %384 = vmatprep.mubr.f32.mxu0 0.0
    %385 = vmatmul.mubr.f32.gmra.mrb[0].mxu0 %v59
    %v386 = vpop.f32.mrb[0].mxu0
    %v387 = vadd.f32 %v178, %v386
    %v388 = vpop.f32.mrb[0].mxu0
    %389 = vmatprep.mubr.f32.mxu0 0.0
    %390 = vmatmul.mubr.f32.gmra.mrb[0].mxu0 %v60
    %v391 = vpop.f32.mrb[0].mxu0
    %v392 = vadd.f32 %v178, %v391
    %v393 = vpop.f32.mrb[0].mxu0
    %394 = vmatprep.mubr.f32.mxu0 0.0
    %395 = vmatmul.mubr.f32.gmra.mrb[0].mxu0 %v61
    %v396 = vpop.f32.mrb[0].mxu0
    %v397 = vadd.f32 %v178, %v396
    %v398 = vpop.f32.mrb[0].mxu0
    %399 = vdwg.mxu0
    %400 = vmatprep.subr.mxu0 %v111
    %401 = vmatpush1.msra.mxu0 %v110
    %402 = vmatprep.subr.mxu0 %v114
    %403 = vmatpush1.msra.mxu0 %v113
    %404 = vmatprep.subr.mxu0 %v117
    %405 = vmatpush1.msra.mxu0 %v116
    %406 = vmatprep.subr.mxu0 %v120
    %407 = vmatpush1.msra.mxu0 %v119
    %408 = vmatprep.subr.mxu0 %v123
    %409 = vmatpush1.msra.mxu0 %v122
    %410 = vmatprep.subr.mxu0 %v126
    %411 = vmatpush1.msra.mxu0 %v125
    %412 = vmatprep.subr.mxu0 %v129
    %413 = vmatpush1.msra.mxu0 %v128
    %414 = vmatprep.subr.mxu0 %v132
    %415 = vmatpush1.msra.mxu0 %v131
    %416 = vmatprep.subr.mxu0 %v135
    %417 = vmatpush1.msra.mxu0 %v134
    %418 = vmatprep.subr.mxu0 %v138
    %419 = vmatpush1.msra.mxu0 %v137
    %420 = vmatprep.subr.mxu0 %v141
    %421 = vmatpush1.msra.mxu0 %v140
    %422 = vmatprep.subr.mxu0 %v144
    %423 = vmatpush1.msra.mxu0 %v143
    %424 = vmatprep.subr.mxu0 %v147
    %425 = vmatpush1.msra.mxu0 %v146
    %426 = vmatprep.subr.mxu0 %v150
    %427 = vmatpush1.msra.mxu0 %v149
    %428 = vmatprep.subr.mxu0 %v153
    %429 = vmatpush1.msra.mxu0 %v152
    %430 = vmatprep.subr.mxu0 %v156
    %431 = vmatpush1.msra.mxu0 %v155
    %432 = vmatprep.subr.mxu0 0.0
    %433 = vmatpush1.msra.mxu0 0.0
    %434 = vmatprep.subr.mxu0 0.0
    %435 = vmatpush1.msra.mxu0 0.0
    %436 = vmatprep.subr.mxu0 0.0
    %437 = vmatpush1.msra.mxu0 0.0
    %438 = vmatprep.subr.mxu0 0.0
    %439 = vmatpush1.msra.mxu0 0.0
    %440 = vmatprep.subr.mxu0 0.0
    %441 = vmatpush1.msra.mxu0 0.0
    %442 = vmatprep.subr.mxu0 0.0
    %443 = vmatpush1.msra.mxu0 0.0
    %444 = vmatprep.subr.mxu0 0.0
    %445 = vmatpush1.msra.mxu0 0.0
    %446 = vmatprep.subr.mxu0 0.0
    %447 = vmatpush1.msra.mxu0 0.0
    %448 = vmatprep.subr.mxu0 0.0
    %449 = vmatpush1.msra.mxu0 0.0
    %450 = vmatprep.subr.mxu0 0.0
    %451 = vmatpush1.msra.mxu0 0.0
    %452 = vmatprep.subr.mxu0 0.0
    %453 = vmatpush1.msra.mxu0 0.0
    %454 = vmatprep.subr.mxu0 0.0
    %455 = vmatpush1.msra.mxu0 0.0
    %456 = vmatprep.subr.mxu0 0.0
    %457 = vmatpush1.msra.mxu0 0.0
    %458 = vmatprep.subr.mxu0 0.0
    %459 = vmatpush1.msra.mxu0 0.0
    %460 = vmatprep.subr.mxu0 0.0
    %461 = vmatpush1.msra.mxu0 0.0
    %462 = vmatprep.subr.mxu0 0.0
    %463 = vmatpush1.msra.mxu0 0.0
    %464 = vmatprep.mubr.f32.mxu0 0.0
    %465 = vmatmul.mubr.f32.gmra.mrb[0].mxu0 0.0
    %v466 = vpop.f32.mrb[0].mxu0
    %v467 = vadd.f32 0.0, %v466
    %v468 = vpop.f32.mrb[0].mxu0
    %v469 = vadd.f32 0.0, %v468
    %470 = vdwg.mxu0
    %471 = vmatprep.subr.mxu0 0.0
    %472 = vmatpush1.msra.mxu0 %v112
    %473 = vmatprep.subr.mxu0 0.0
    %474 = vmatpush1.msra.mxu0 %v115
    %475 = vmatprep.subr.mxu0 0.0
    %476 = vmatpush1.msra.mxu0 %v118
    %477 = vmatprep.subr.mxu0 0.0
    %478 = vmatpush1.msra.mxu0 %v121
    %479 = vmatprep.subr.mxu0 0.0
    %480 = vmatpush1.msra.mxu0 %v124
    %481 = vmatprep.subr.mxu0 0.0
    %482 = vmatpush1.msra.mxu0 %v127
    %483 = vmatprep.subr.mxu0 0.0
    %484 = vmatpush1.msra.mxu0 %v130
    %485 = vmatprep.subr.mxu0 0.0
    %486 = vmatpush1.msra.mxu0 %v133
    %487 = vmatprep.subr.mxu0 0.0
    %488 = vmatpush1.msra.mxu0 %v136
    %489 = vmatprep.subr.mxu0 0.0
    %490 = vmatpush1.msra.mxu0 %v139
    %491 = vmatprep.subr.mxu0 0.0
    %492 = vmatpush1.msra.mxu0 %v142
    %493 = vmatprep.subr.mxu0 0.0
    %494 = vmatpush1.msra.mxu0 %v145
    %495 = vmatprep.subr.mxu0 0.0
    %496 = vmatpush1.msra.mxu0 %v148
    %497 = vmatprep.subr.mxu0 0.0
    %498 = vmatpush1.msra.mxu0 %v151
    %499 = vmatprep.subr.mxu0 0.0
    %500 = vmatpush1.msra.mxu0 %v154
    %501 = vmatprep.subr.mxu0 0.0
    %502 = vmatpush1.msra.mxu0 %v157
    %503 = vmatprep.subr.mxu0 0.0
    %504 = vmatpush1.msra.mxu0 0.0
    %505 = vmatprep.subr.mxu0 0.0
    %506 = vmatpush1.msra.mxu0 0.0
    %507 = vmatprep.subr.mxu0 0.0
    %508 = vmatpush1.msra.mxu0 0.0
    %509 = vmatprep.subr.mxu0 0.0
    %510 = vmatpush1.msra.mxu0 0.0
    %511 = vmatprep.subr.mxu0 0.0
    %512 = vmatpush1.msra.mxu0 0.0
    %513 = vmatprep.subr.mxu0 0.0
    %514 = vmatpush1.msra.mxu0 0.0
    %515 = vmatprep.subr.mxu0 0.0
    %516 = vmatpush1.msra.mxu0 0.0
    %517 = vmatprep.subr.mxu0 0.0
    %518 = vmatpush1.msra.mxu0 0.0
    %519 = vmatprep.subr.mxu0 0.0
    %520 = vmatpush1.msra.mxu0 0.0
    %521 = vmatprep.subr.mxu0 0.0
    %522 = vmatpush1.msra.mxu0 0.0
    %523 = vmatprep.subr.mxu0 0.0
    %524 = vmatpush1.msra.mxu0 0.0
    %525 = vmatprep.subr.mxu0 0.0
    %526 = vmatpush1.msra.mxu0 0.0
    %527 = vmatprep.subr.mxu0 0.0
    %528 = vmatpush1.msra.mxu0 0.0
    %529 = vmatprep.subr.mxu0 0.0
    %530 = vmatpush1.msra.mxu0 0.0
    %531 = vmatprep.subr.mxu0 0.0
    %532 = vmatpush1.msra.mxu0 0.0
    %533 = vmatprep.subr.mxu0 0.0
    %534 = vmatpush1.msra.mxu0 0.0
    %535 = vmatprep.mubr.f32.mxu0 0.0
    %536 = vmatmul.mubr.f32.gmra.mrb[0].mxu0 0.0
    %v537 = vpop.f32.mrb[0].mxu0
    %v538 = vadd.f32 0.0, %v537
    %v539 = vpop.f32.mrb[0].mxu0
    %540 = vdwg.mxu0
    %v541 = vadd.f32 %v249, %v467
    %v542 = vadd.f32 %v251, %v469
    %v543 = vxor.u32 %v541, 2147483648
    %v544 = vxor.u32 %v542, 2147483648
    %v545 = vmul.f32 %v543, 1.442695
    %v546 = vpow.pop %v545
    %v547 = vmul.f32 %v544, 1.442695
    %v548 = vpow.pop %v547
    %v549 = vadd.f32 %v546, 1.0
    %v550 = vadd.f32 %v548, 1.0
    %v551 = vrcp.pop %v549
    %v552 = vmul.f32 1.0, %v551
    %v553 = vrcp.pop %v550
    %v554 = vmul.f32 1.0, %v553
    %v555 = vadd.f32 %v538, %v164
    %v556 = vmul.f32 %v552, %v555
    %v557 = vadd.f32 %v362, %v556
    %v558 = vtanh.pop %v557
    %v559 = vsub.f32 0.0, %v558
    %v560 = vmul.f32 %v554, %v559
    %v561 = vadd.f32 %v558, %v560
    %562 = vmatprep.subr.mxu0 %v111
    %563 = vmatpush1.msra.mxu0 %v110
    %564 = vmatprep.subr.mxu0 %v114
    %565 = vmatpush1.msra.mxu0 %v113
    %566 = vmatprep.subr.mxu0 %v117
    %567 = vmatpush1.msra.mxu0 %v116
    %568 = vmatprep.subr.mxu0 %v120
    %569 = vmatpush1.msra.mxu0 %v119
    %570 = vmatprep.subr.mxu0 %v123
    %571 = vmatpush1.msra.mxu0 %v122
    %572 = vmatprep.subr.mxu0 %v126
    %573 = vmatpush1.msra.mxu0 %v125
    %574 = vmatprep.subr.mxu0 %v129
    %575 = vmatpush1.msra.mxu0 %v128
    %576 = vmatprep.subr.mxu0 %v132
    %577 = vmatpush1.msra.mxu0 %v131
    %578 = vmatprep.subr.mxu0 %v135
    %579 = vmatpush1.msra.mxu0 %v134
    %580 = vmatprep.subr.mxu0 %v138
    %581 = vmatpush1.msra.mxu0 %v137
    %582 = vmatprep.subr.mxu0 %v141
    %583 = vmatpush1.msra.mxu0 %v140
    %584 = vmatprep.subr.mxu0 %v144
    %585 = vmatpush1.msra.mxu0 %v143
    %586 = vmatprep.subr.mxu0 %v147
    %587 = vmatpush1.msra.mxu0 %v146
    %588 = vmatprep.subr.mxu0 %v150
    %589 = vmatpush1.msra.mxu0 %v149
    %590 = vmatprep.subr.mxu0 %v153
    %591 = vmatpush1.msra.mxu0 %v152
    %592 = vmatprep.subr.mxu0 %v156
    %593 = vmatpush1.msra.mxu0 %v155
    %594 = vmatprep.subr.mxu0 0.0
    %595 = vmatpush1.msra.mxu0 0.0
    %596 = vmatprep.subr.mxu0 0.0
    %597 = vmatpush1.msra.mxu0 0.0
    %598 = vmatprep.subr.mxu0 0.0
    %599 = vmatpush1.msra.mxu0 0.0
    %600 = vmatprep.subr.mxu0 0.0
    %601 = vmatpush1.msra.mxu0 0.0
    %602 = vmatprep.subr.mxu0 0.0
    %603 = vmatpush1.msra.mxu0 0.0
    %604 = vmatprep.subr.mxu0 0.0
    %605 = vmatpush1.msra.mxu0 0.0
    %606 = vmatprep.subr.mxu0 0.0
    %607 = vmatpush1.msra.mxu0 0.0
    %608 = vmatprep.subr.mxu0 0.0
    %609 = vmatpush1.msra.mxu0 0.0
    %610 = vmatprep.subr.mxu0 0.0
    %611 = vmatpush1.msra.mxu0 0.0
    %612 = vmatprep.subr.mxu0 0.0
    %613 = vmatpush1.msra.mxu0 0.0
    %614 = vmatprep.subr.mxu0 0.0
    %615 = vmatpush1.msra.mxu0 0.0
    %616 = vmatprep.subr.mxu0 0.0
    %617 = vmatpush1.msra.mxu0 0.0
    %618 = vmatprep.subr.mxu0 0.0
    %619 = vmatpush1.msra.mxu0 0.0
    %620 = vmatprep.subr.mxu0 0.0
    %621 = vmatpush1.msra.mxu0 0.0
    %622 = vmatprep.subr.mxu0 0.0
    %623 = vmatpush1.msra.mxu0 0.0
    %624 = vmatprep.subr.mxu0 0.0
    %625 = vmatpush1.msra.mxu0 0.0
    %626 = vmatprep.mubr.f32.mxu0 0.0
    %627 = vmatmul.mubr.f32.gmra.mrb[0].mxu0 %v561
    %v628 = vpop.f32.mrb[0].mxu0
    %v629 = vadd.f32 0.0, %v628
    %v630 = vpop.f32.mrb[0].mxu0
    %v631 = vadd.f32 0.0, %v630
    %632 = vdwg.mxu0
    %633 = vmatprep.subr.mxu0 0.0
    %634 = vmatpush1.msra.mxu0 %v112
    %635 = vmatprep.subr.mxu0 0.0
    %636 = vmatpush1.msra.mxu0 %v115
    %637 = vmatprep.subr.mxu0 0.0
    %638 = vmatpush1.msra.mxu0 %v118
    %639 = vmatprep.subr.mxu0 0.0
    %640 = vmatpush1.msra.mxu0 %v121
    %641 = vmatprep.subr.mxu0 0.0
    %642 = vmatpush1.msra.mxu0 %v124
    %643 = vmatprep.subr.mxu0 0.0
    %644 = vmatpush1.msra.mxu0 %v127
    %645 = vmatprep.subr.mxu0 0.0
    %646 = vmatpush1.msra.mxu0 %v130
    %647 = vmatprep.subr.mxu0 0.0
    %648 = vmatpush1.msra.mxu0 %v133
    %649 = vmatprep.subr.mxu0 0.0
    %650 = vmatpush1.msra.mxu0 %v136
    %651 = vmatprep.subr.mxu0 0.0
    %652 = vmatpush1.msra.mxu0 %v139
    %653 = vmatprep.subr.mxu0 0.0
    %654 = vmatpush1.msra.mxu0 %v142
    %655 = vmatprep.subr.mxu0 0.0
    %656 = vmatpush1.msra.mxu0 %v145
    %657 = vmatprep.subr.mxu0 0.0
    %658 = vmatpush1.msra.mxu0 %v148
    %659 = vmatprep.subr.mxu0 0.0
    %660 = vmatpush1.msra.mxu0 %v151
    %661 = vmatprep.subr.mxu0 0.0
    %662 = vmatpush1.msra.mxu0 %v154
    %663 = vmatprep.subr.mxu0 0.0
    %664 = vmatpush1.msra.mxu0 %v157
    %665 = vmatprep.subr.mxu0 0.0
    %666 = vmatpush1.msra.mxu0 0.0
    %667 = vmatprep.subr.mxu0 0.0
    %668 = vmatpush1.msra.mxu0 0.0
    %669 = vmatprep.subr.mxu0 0.0
    %670 = vmatpush1.msra.mxu0 0.0
    %671 = vmatprep.subr.mxu0 0.0
    %672 = vmatpush1.msra.mxu0 0.0
    %673 = vmatprep.subr.mxu0 0.0
    %674 = vmatpush1.msra.mxu0 0.0
    %675 = vmatprep.subr.mxu0 0.0
    %676 = vmatpush1.msra.mxu0 0.0
    %677 = vmatprep.subr.mxu0 0.0
    %678 = vmatpush1.msra.mxu0 0.0
    %679 = vmatprep.subr.mxu0 0.0
    %680 = vmatpush1.msra.mxu0 0.0
    %681 = vmatprep.subr.mxu0 0.0
    %682 = vmatpush1.msra.mxu0 0.0
    %683 = vmatprep.subr.mxu0 0.0
    %684 = vmatpush1.msra.mxu0 0.0
    %685 = vmatprep.subr.mxu0 0.0
    %686 = vmatpush1.msra.mxu0 0.0
    %687 = vmatprep.subr.mxu0 0.0
    %688 = vmatpush1.msra.mxu0 0.0
    %689 = vmatprep.subr.mxu0 0.0
    %690 = vmatpush1.msra.mxu0 0.0
    %691 = vmatprep.subr.mxu0 0.0
    %692 = vmatpush1.msra.mxu0 0.0
    %693 = vmatprep.subr.mxu0 0.0
    %694 = vmatpush1.msra.mxu0 0.0
    %695 = vmatprep.subr.mxu0 0.0
    %696 = vmatpush1.msra.mxu0 0.0
    %697 = vmatprep.mubr.f32.mxu0 0.0
    %698 = vmatmul.mubr.f32.gmra.mrb[0].mxu0 %v561
    %v699 = vpop.f32.mrb[0].mxu0
    %v700 = vadd.f32 0.0, %v699
    %v701 = vpop.f32.mrb[0].mxu0
    %702 = vdwg.mxu0
    %v703 = vadd.f32 %v255, %v629
    %v704 = vadd.f32 %v257, %v631
    %v705 = vxor.u32 %v703, 2147483648
    %v706 = vxor.u32 %v704, 2147483648
    %v707 = vmul.f32 %v705, 1.442695
    %v708 = vpow.pop %v707
    %v709 = vmul.f32 %v706, 1.442695
    %v710 = vpow.pop %v709
    %v711 = vadd.f32 %v708, 1.0
    %v712 = vadd.f32 %v710, 1.0
    %v713 = vrcp.pop %v711
    %v714 = vmul.f32 1.0, %v713
    %v715 = vrcp.pop %v712
    %v716 = vmul.f32 1.0, %v715
    %v717 = vadd.f32 %v700, %v164
    %v718 = vmul.f32 %v714, %v717
    %v719 = vadd.f32 %v367, %v718
    %v720 = vtanh.pop %v719
    %v721 = vsub.f32 %v561, %v720
    %v722 = vmul.f32 %v716, %v721
    %v723 = vadd.f32 %v720, %v722
    %724 = vmatprep.subr.mxu0 %v111
    %725 = vmatpush1.msra.mxu0 %v110
    %726 = vmatprep.subr.mxu0 %v114
    %727 = vmatpush1.msra.mxu0 %v113
    %728 = vmatprep.subr.mxu0 %v117
    %729 = vmatpush1.msra.mxu0 %v116
    %730 = vmatprep.subr.mxu0 %v120
    %731 = vmatpush1.msra.mxu0 %v119
    %732 = vmatprep.subr.mxu0 %v123
    %733 = vmatpush1.msra.mxu0 %v122
    %734 = vmatprep.subr.mxu0 %v126
    %735 = vmatpush1.msra.mxu0 %v125
    %736 = vmatprep.subr.mxu0 %v129
    %737 = vmatpush1.msra.mxu0 %v128
    %738 = vmatprep.subr.mxu0 %v132
    %739 = vmatpush1.msra.mxu0 %v131
    %740 = vmatprep.subr.mxu0 %v135
    %741 = vmatpush1.msra.mxu0 %v134
    %742 = vmatprep.subr.mxu0 %v138
    %743 = vmatpush1.msra.mxu0 %v137
    %744 = vmatprep.subr.mxu0 %v141
    %745 = vmatpush1.msra.mxu0 %v140
    %746 = vmatprep.subr.mxu0 %v144
    %747 = vmatpush1.msra.mxu0 %v143
    %748 = vmatprep.subr.mxu0 %v147
    %749 = vmatpush1.msra.mxu0 %v146
    %750 = vmatprep.subr.mxu0 %v150
    %751 = vmatpush1.msra.mxu0 %v149
    %752 = vmatprep.subr.mxu0 %v153
    %753 = vmatpush1.msra.mxu0 %v152
    %754 = vmatprep.subr.mxu0 %v156
    %755 = vmatpush1.msra.mxu0 %v155
    %756 = vmatprep.subr.mxu0 0.0
    %757 = vmatpush1.msra.mxu0 0.0
    %758 = vmatprep.subr.mxu0 0.0
    %759 = vmatpush1.msra.mxu0 0.0
    %760 = vmatprep.subr.mxu0 0.0
    %761 = vmatpush1.msra.mxu0 0.0
    %762 = vmatprep.subr.mxu0 0.0
    %763 = vmatpush1.msra.mxu0 0.0
    %764 = vmatprep.subr.mxu0 0.0
    %765 = vmatpush1.msra.mxu0 0.0
    %766 = vmatprep.subr.mxu0 0.0
    %767 = vmatpush1.msra.mxu0 0.0
    %768 = vmatprep.subr.mxu0 0.0
    %769 = vmatpush1.msra.mxu0 0.0
    %770 = vmatprep.subr.mxu0 0.0
    %771 = vmatpush1.msra.mxu0 0.0
    %772 = vmatprep.subr.mxu0 0.0
    %773 = vmatpush1.msra.mxu0 0.0
    %774 = vmatprep.subr.mxu0 0.0
    %775 = vmatpush1.msra.mxu0 0.0
    %776 = vmatprep.subr.mxu0 0.0
    %777 = vmatpush1.msra.mxu0 0.0
    %778 = vmatprep.subr.mxu0 0.0
    %779 = vmatpush1.msra.mxu0 0.0
    %780 = vmatprep.subr.mxu0 0.0
    %781 = vmatpush1.msra.mxu0 0.0
    %782 = vmatprep.subr.mxu0 0.0
    %783 = vmatpush1.msra.mxu0 0.0
    %784 = vmatprep.subr.mxu0 0.0
    %785 = vmatpush1.msra.mxu0 0.0
    %786 = vmatprep.subr.mxu0 0.0
    %787 = vmatpush1.msra.mxu0 0.0
    %788 = vmatprep.mubr.f32.mxu0 0.0
    %789 = vmatmul.mubr.f32.gmra.mrb[0].mxu0 %v723
    %v790 = vpop.f32.mrb[0].mxu0
    %v791 = vadd.f32 0.0, %v790
    %v792 = vpop.f32.mrb[0].mxu0
    %v793 = vadd.f32 0.0, %v792
    %794 = vdwg.mxu0
    %795 = vmatprep.subr.mxu0 0.0
    %796 = vmatpush1.msra.mxu0 %v112
    %797 = vmatprep.subr.mxu0 0.0
    %798 = vmatpush1.msra.mxu0 %v115
    %799 = vmatprep.subr.mxu0 0.0
    %800 = vmatpush1.msra.mxu0 %v118
    %801 = vmatprep.subr.mxu0 0.0
    %802 = vmatpush1.msra.mxu0 %v121
    %803 = vmatprep.subr.mxu0 0.0
    %804 = vmatpush1.msra.mxu0 %v124
    %805 = vmatprep.subr.mxu0 0.0
    %806 = vmatpush1.msra.mxu0 %v127
    %807 = vmatprep.subr.mxu0 0.0
    %808 = vmatpush1.msra.mxu0 %v130
    %809 = vmatprep.subr.mxu0 0.0
    %810 = vmatpush1.msra.mxu0 %v133
    %811 = vmatprep.subr.mxu0 0.0
    %812 = vmatpush1.msra.mxu0 %v136
    %813 = vmatprep.subr.mxu0 0.0
    %814 = vmatpush1.msra.mxu0 %v139
    %815 = vmatprep.subr.mxu0 0.0
    %816 = vmatpush1.msra.mxu0 %v142
    %817 = vmatprep.subr.mxu0 0.0
    %818 = vmatpush1.msra.mxu0 %v145
    %819 = vmatprep.subr.mxu0 0.0
    %820 = vmatpush1.msra.mxu0 %v148
    %821 = vmatprep.subr.mxu0 0.0
    %822 = vmatpush1.msra.mxu0 %v151
    %823 = vmatprep.subr.mxu0 0.0
    %824 = vmatpush1.msra.mxu0 %v154
    %825 = vmatprep.subr.mxu0 0.0
    %826 = vmatpush1.msra.mxu0 %v157
    %827 = vmatprep.subr.mxu0 0.0
    %828 = vmatpush1.msra.mxu0 0.0
    %829 = vmatprep.subr.mxu0 0.0
    %830 = vmatpush1.msra.mxu0 0.0
    %831 = vmatprep.subr.mxu0 0.0
    %832 = vmatpush1.msra.mxu0 0.0
    %833 = vmatprep.subr.mxu0 0.0
    %834 = vmatpush1.msra.mxu0 0.0
    %835 = vmatprep.subr.mxu0 0.0
    %836 = vmatpush1.msra.mxu0 0.0
    %837 = vmatprep.subr.mxu0 0.0
    %838 = vmatpush1.msra.mxu0 0.0
    %839 = vmatprep.subr.mxu0 0.0
    %840 = vmatpush1.msra.mxu0 0.0
    %841 = vmatprep.subr.mxu0 0.0
    %842 = vmatpush1.msra.mxu0 0.0
    %843 = vmatprep.subr.mxu0 0.0
    %844 = vmatpush1.msra.mxu0 0.0
    %845 = vmatprep.subr.mxu0 0.0
    %846 = vmatpush1.msra.mxu0 0.0
    %847 = vmatprep.subr.mxu0 0.0
    %848 = vmatpush1.msra.mxu0 0.0
    %849 = vmatprep.subr.mxu0 0.0
    %850 = vmatpush1.msra.mxu0 0.0
    %851 = vmatprep.subr.mxu0 0.0
    %852 = vmatpush1.msra.mxu0 0.0
    %853 = vmatprep.subr.mxu0 0.0
    %854 = vmatpush1.msra.mxu0 0.0
    %855 = vmatprep.subr.mxu0 0.0
    %856 = vmatpush1.msra.mxu0 0.0
    %857 = vmatprep.subr.mxu0 0.0
    %858 = vmatpush1.msra.mxu0 0.0
    %859 = vmatprep.mubr.f32.mxu0 0.0
    %860 = vmatmul.mubr.f32.gmra.mrb[0].mxu0 %v723
    %v861 = vpop.f32.mrb[0].mxu0
    %v862 = vadd.f32 0.0, %v861
    %v863 = vpop.f32.mrb[0].mxu0
    %864 = vdwg.mxu0
    %v865 = vadd.f32 %v261, %v791
    %v866 = vadd.f32 %v263, %v793
    %v867 = vxor.u32 %v865, 2147483648
    %v868 = vxor.u32 %v866, 2147483648
    %v869 = vmul.f32 %v867, 1.442695
    %v870 = vpow.pop %v869
    %v871 = vmul.f32 %v868, 1.442695
    %v872 = vpow.pop %v871
    %v873 = vadd.f32 %v870, 1.0
    %v874 = vadd.f32 %v872, 1.0
    %v875 = vrcp.pop %v873
    %v876 = vmul.f32 1.0, %v875
    %v877 = vrcp.pop %v874
    %v878 = vmul.f32 1.0, %v877
    %v879 = vadd.f32 %v862, %v164
    %v880 = vmul.f32 %v876, %v879
    %v881 = vadd.f32 %v372, %v880
    %v882 = vtanh.pop %v881
    %v883 = vsub.f32 %v723, %v882
    %v884 = vmul.f32 %v878, %v883
    %v885 = vadd.f32 %v882, %v884
    %886 = vmatprep.subr.mxu0 %v111
    %887 = vmatpush1.msra.mxu0 %v110
    %888 = vmatprep.subr.mxu0 %v114
    %889 = vmatpush1.msra.mxu0 %v113
    %890 = vmatprep.subr.mxu0 %v117
    %891 = vmatpush1.msra.mxu0 %v116
    %892 = vmatprep.subr.mxu0 %v120
    %893 = vmatpush1.msra.mxu0 %v119
    %894 = vmatprep.subr.mxu0 %v123
    %895 = vmatpush1.msra.mxu0 %v122
    %896 = vmatprep.subr.mxu0 %v126
    %897 = vmatpush1.msra.mxu0 %v125
    %898 = vmatprep.subr.mxu0 %v129
    %899 = vmatpush1.msra.mxu0 %v128
    %900 = vmatprep.subr.mxu0 %v132
    %901 = vmatpush1.msra.mxu0 %v131
    %902 = vmatprep.subr.mxu0 %v135
    %903 = vmatpush1.msra.mxu0 %v134
    %904 = vmatprep.subr.mxu0 %v138
    %905 = vmatpush1.msra.mxu0 %v137
    %906 = vmatprep.subr.mxu0 %v141
    %907 = vmatpush1.msra.mxu0 %v140
    %908 = vmatprep.subr.mxu0 %v144
    %909 = vmatpush1.msra.mxu0 %v143
    %910 = vmatprep.subr.mxu0 %v147
    %911 = vmatpush1.msra.mxu0 %v146
    %912 = vmatprep.subr.mxu0 %v150
    %913 = vmatpush1.msra.mxu0 %v149
    %914 = vmatprep.subr.mxu0 %v153
    %915 = vmatpush1.msra.mxu0 %v152
    %916 = vmatprep.subr.mxu0 %v156
    %917 = vmatpush1.msra.mxu0 %v155
    %918 = vmatprep.subr.mxu0 0.0
    %919 = vmatpush1.msra.mxu0 0.0
    %920 = vmatprep.subr.mxu0 0.0
    %921 = vmatpush1.msra.mxu0 0.0
    %922 = vmatprep.subr.mxu0 0.0
    %923 = vmatpush1.msra.mxu0 0.0
    %924 = vmatprep.subr.mxu0 0.0
    %925 = vmatpush1.msra.mxu0 0.0
    %926 = vmatprep.subr.mxu0 0.0
    %927 = vmatpush1.msra.mxu0 0.0
    %928 = vmatprep.subr.mxu0 0.0
    %929 = vmatpush1.msra.mxu0 0.0
    %930 = vmatprep.subr.mxu0 0.0
    %931 = vmatpush1.msra.mxu0 0.0
    %932 = vmatprep.subr.mxu0 0.0
    %933 = vmatpush1.msra.mxu0 0.0
    %934 = vmatprep.subr.mxu0 0.0
    %935 = vmatpush1.msra.mxu0 0.0
    %936 = vmatprep.subr.mxu0 0.0
    %937 = vmatpush1.msra.mxu0 0.0
    %938 = vmatprep.subr.mxu0 0.0
    %939 = vmatpush1.msra.mxu0 0.0
    %940 = vmatprep.subr.mxu0 0.0
    %941 = vmatpush1.msra.mxu0 0.0
    %942 = vmatprep.subr.mxu0 0.0
    %943 = vmatpush1.msra.mxu0 0.0
    %944 = vmatprep.subr.mxu0 0.0
    %945 = vmatpush1.msra.mxu0 0.0
    %946 = vmatprep.subr.mxu0 0.0
    %947 = vmatpush1.msra.mxu0 0.0
    %948 = vmatprep.subr.mxu0 0.0
    %949 = vmatpush1.msra.mxu0 0.0
    %950 = vmatprep.mubr.f32.mxu0 0.0
    %951 = vmatmul.mubr.f32.gmra.mrb[0].mxu0 %v885
    %v952 = vpop.f32.mrb[0].mxu0
    %v953 = vadd.f32 0.0, %v952
    %v954 = vpop.f32.mrb[0].mxu0
    %v955 = vadd.f32 0.0, %v954
    %956 = vdwg.mxu0
    %957 = vmatprep.subr.mxu0 0.0
    %958 = vmatpush1.msra.mxu0 %v112
    %959 = vmatprep.subr.mxu0 0.0
    %960 = vmatpush1.msra.mxu0 %v115
    %961 = vmatprep.subr.mxu0 0.0
    %962 = vmatpush1.msra.mxu0 %v118
    %963 = vmatprep.subr.mxu0 0.0
    %964 = vmatpush1.msra.mxu0 %v121
    %965 = vmatprep.subr.mxu0 0.0
    %966 = vmatpush1.msra.mxu0 %v124
    %967 = vmatprep.subr.mxu0 0.0
    %968 = vmatpush1.msra.mxu0 %v127
    %969 = vmatprep.subr.mxu0 0.0
    %970 = vmatpush1.msra.mxu0 %v130
    %971 = vmatprep.subr.mxu0 0.0
    %972 = vmatpush1.msra.mxu0 %v133
    %973 = vmatprep.subr.mxu0 0.0
    %974 = vmatpush1.msra.mxu0 %v136
    %975 = vmatprep.subr.mxu0 0.0
    %976 = vmatpush1.msra.mxu0 %v139
    %977 = vmatprep.subr.mxu0 0.0
    %978 = vmatpush1.msra.mxu0 %v142
    %979 = vmatprep.subr.mxu0 0.0
    %980 = vmatpush1.msra.mxu0 %v145
    %981 = vmatprep.subr.mxu0 0.0
    %982 = vmatpush1.msra.mxu0 %v148
    %983 = vmatprep.subr.mxu0 0.0
    %984 = vmatpush1.msra.mxu0 %v151
    %985 = vmatprep.subr.mxu0 0.0
    %986 = vmatpush1.msra.mxu0 %v154
    %987 = vmatprep.subr.mxu0 0.0
    %988 = vmatpush1.msra.mxu0 %v157
    %989 = vmatprep.subr.mxu0 0.0
    %990 = vmatpush1.msra.mxu0 0.0
    %991 = vmatprep.subr.mxu0 0.0
    %992 = vmatpush1.msra.mxu0 0.0
    %993 = vmatprep.subr.mxu0 0.0
    %994 = vmatpush1.msra.mxu0 0.0
    %995 = vmatprep.subr.mxu0 0.0
    %996 = vmatpush1.msra.mxu0 0.0
    %997 = vmatprep.subr.mxu0 0.0
    %998 = vmatpush1.msra.mxu0 0.0
    %999 = vmatprep.subr.mxu0 0.0
    %1000 = vmatpush1.msra.mxu0 0.0
    %1001 = vmatprep.subr.mxu0 0.0
    %1002 = vmatpush1.msra.mxu0 0.0
    %1003 = vmatprep.subr.mxu0 0.0
    %1004 = vmatpush1.msra.mxu0 0.0
    %1005 = vmatprep.subr.mxu0 0.0
    %1006 = vmatpush1.msra.mxu0 0.0
    %1007 = vmatprep.subr.mxu0 0.0
    %1008 = vmatpush1.msra.mxu0 0.0
    %1009 = vmatprep.subr.mxu0 0.0
    %1010 = vmatpush1.msra.mxu0 0.0
    %1011 = vmatprep.subr.mxu0 0.0
    %1012 = vmatpush1.msra.mxu0 0.0
    %1013 = vmatprep.subr.mxu0 0.0
    %1014 = vmatpush1.msra.mxu0 0.0
    %1015 = vmatprep.subr.mxu0 0.0
    %1016 = vmatpush1.msra.mxu0 0.0
    %1017 = vmatprep.subr.mxu0 0.0
    %1018 = vmatpush1.msra.mxu0 0.0
    %1019 = vmatprep.subr.mxu0 0.0
    %1020 = vmatpush1.msra.mxu0 0.0
    %1021 = vmatprep.mubr.f32.mxu0 0.0
    %1022 = vmatmul.mubr.f32.gmra.mrb[0].mxu0 %v885
    %v1023 = vpop.f32.mrb[0].mxu0
    %v1024 = vadd.f32 0.0, %v1023
    %v1025 = vpop.f32.mrb[0].mxu0
    %1026 = vdwg.mxu0
    %v1027 = vadd.f32 %v267, %v953
    %v1028 = vadd.f32 %v269, %v955
    %v1029 = vxor.u32 %v1027, 2147483648
    %v1030 = vxor.u32 %v1028, 2147483648
    %v1031 = vmul.f32 %v1029, 1.442695
    %v1032 = vpow.pop %v1031
    %v1033 = vmul.f32 %v1030, 1.442695
    %v1034 = vpow.pop %v1033
    %v1035 = vadd.f32 %v1032, 1.0
    %v1036 = vadd.f32 %v1034, 1.0
    %v1037 = vrcp.pop %v1035
    %v1038 = vmul.f32 1.0, %v1037
    %v1039 = vrcp.pop %v1036
    %v1040 = vmul.f32 1.0, %v1039
    %v1041 = vadd.f32 %v1024, %v164
    %v1042 = vmul.f32 %v1038, %v1041
    %v1043 = vadd.f32 %v377, %v1042
    %v1044 = vtanh.pop %v1043
    %v1045 = vsub.f32 %v885, %v1044
    %v1046 = vmul.f32 %v1040, %v1045
    %v1047 = vadd.f32 %v1044, %v1046
    %1048 = vmatprep.subr.mxu0 %v111
    %1049 = vmatpush1.msra.mxu0 %v110
    %1050 = vmatprep.subr.mxu0 %v114
    %1051 = vmatpush1.msra.mxu0 %v113
    %1052 = vmatprep.subr.mxu0 %v117
    %1053 = vmatpush1.msra.mxu0 %v116
    %1054 = vmatprep.subr.mxu0 %v120
    %1055 = vmatpush1.msra.mxu0 %v119
    %1056 = vmatprep.subr.mxu0 %v123
    %1057 = vmatpush1.msra.mxu0 %v122
    %1058 = vmatprep.subr.mxu0 %v126
    %1059 = vmatpush1.msra.mxu0 %v125
    %1060 = vmatprep.subr.mxu0 %v129
    %1061 = vmatpush1.msra.mxu0 %v128
    %1062 = vmatprep.subr.mxu0 %v132
    %1063 = vmatpush1.msra.mxu0 %v131
    %1064 = vmatprep.subr.mxu0 %v135
    %1065 = vmatpush1.msra.mxu0 %v134
    %1066 = vmatprep.subr.mxu0 %v138
    %1067 = vmatpush1.msra.mxu0 %v137
    %1068 = vmatprep.subr.mxu0 %v141
    %1069 = vmatpush1.msra.mxu0 %v140
    %1070 = vmatprep.subr.mxu0 %v144
    %1071 = vmatpush1.msra.mxu0 %v143
    %1072 = vmatprep.subr.mxu0 %v147
    %1073 = vmatpush1.msra.mxu0 %v146
    %1074 = vmatprep.subr.mxu0 %v150
    %1075 = vmatpush1.msra.mxu0 %v149
    %1076 = vmatprep.subr.mxu0 %v153
    %1077 = vmatpush1.msra.mxu0 %v152
    %1078 = vmatprep.subr.mxu0 %v156
    %1079 = vmatpush1.msra.mxu0 %v155
    %1080 = vmatprep.subr.mxu0 0.0
    %1081 = vmatpush1.msra.mxu0 0.0
    %1082 = vmatprep.subr.mxu0 0.0
    %1083 = vmatpush1.msra.mxu0 0.0
    %1084 = vmatprep.subr.mxu0 0.0
    %1085 = vmatpush1.msra.mxu0 0.0
    %1086 = vmatprep.subr.mxu0 0.0
    %1087 = vmatpush1.msra.mxu0 0.0
    %1088 = vmatprep.subr.mxu0 0.0
    %1089 = vmatpush1.msra.mxu0 0.0
    %1090 = vmatprep.subr.mxu0 0.0
    %1091 = vmatpush1.msra.mxu0 0.0
    %1092 = vmatprep.subr.mxu0 0.0
    %1093 = vmatpush1.msra.mxu0 0.0
    %1094 = vmatprep.subr.mxu0 0.0
    %1095 = vmatpush1.msra.mxu0 0.0
    %1096 = vmatprep.subr.mxu0 0.0
    %1097 = vmatpush1.msra.mxu0 0.0
    %1098 = vmatprep.subr.mxu0 0.0
    %1099 = vmatpush1.msra.mxu0 0.0
    %1100 = vmatprep.subr.mxu0 0.0
    %1101 = vmatpush1.msra.mxu0 0.0
    %1102 = vmatprep.subr.mxu0 0.0
    %1103 = vmatpush1.msra.mxu0 0.0
    %1104 = vmatprep.subr.mxu0 0.0
    %1105 = vmatpush1.msra.mxu0 0.0
    %1106 = vmatprep.subr.mxu0 0.0
    %1107 = vmatpush1.msra.mxu0 0.0
    %1108 = vmatprep.subr.mxu0 0.0
    %1109 = vmatpush1.msra.mxu0 0.0
    %1110 = vmatprep.subr.mxu0 0.0
    %1111 = vmatpush1.msra.mxu0 0.0
    %1112 = vmatprep.mubr.f32.mxu0 0.0
    %1113 = vmatmul.mubr.f32.gmra.mrb[0].mxu0 %v1047
    %v1114 = vpop.f32.mrb[0].mxu0
    %v1115 = vadd.f32 0.0, %v1114
    %v1116 = vpop.f32.mrb[0].mxu0
    %v1117 = vadd.f32 0.0, %v1116
    %1118 = vdwg.mxu0
    %1119 = vmatprep.subr.mxu0 0.0
    %1120 = vmatpush1.msra.mxu0 %v112
    %1121 = vmatprep.subr.mxu0 0.0
    %1122 = vmatpush1.msra.mxu0 %v115
    %1123 = vmatprep.subr.mxu0 0.0
    %1124 = vmatpush1.msra.mxu0 %v118
    %1125 = vmatprep.subr.mxu0 0.0
    %1126 = vmatpush1.msra.mxu0 %v121
    %1127 = vmatprep.subr.mxu0 0.0
    %1128 = vmatpush1.msra.mxu0 %v124
    %1129 = vmatprep.subr.mxu0 0.0
    %1130 = vmatpush1.msra.mxu0 %v127
    %1131 = vmatprep.subr.mxu0 0.0
    %1132 = vmatpush1.msra.mxu0 %v130
    %1133 = vmatprep.subr.mxu0 0.0
    %1134 = vmatpush1.msra.mxu0 %v133
    %1135 = vmatprep.subr.mxu0 0.0
    %1136 = vmatpush1.msra.mxu0 %v136
    %1137 = vmatprep.subr.mxu0 0.0
    %1138 = vmatpush1.msra.mxu0 %v139
    %1139 = vmatprep.subr.mxu0 0.0
    %1140 = vmatpush1.msra.mxu0 %v142
    %1141 = vmatprep.subr.mxu0 0.0
    %1142 = vmatpush1.msra.mxu0 %v145
    %1143 = vmatprep.subr.mxu0 0.0
    %1144 = vmatpush1.msra.mxu0 %v148
    %1145 = vmatprep.subr.mxu0 0.0
    %1146 = vmatpush1.msra.mxu0 %v151
    %1147 = vmatprep.subr.mxu0 0.0
    %1148 = vmatpush1.msra.mxu0 %v154
    %1149 = vmatprep.subr.mxu0 0.0
    %1150 = vmatpush1.msra.mxu0 %v157
    %1151 = vmatprep.subr.mxu0 0.0
    %1152 = vmatpush1.msra.mxu0 0.0
    %1153 = vmatprep.subr.mxu0 0.0
    %1154 = vmatpush1.msra.mxu0 0.0
    %1155 = vmatprep.subr.mxu0 0.0
    %1156 = vmatpush1.msra.mxu0 0.0
    %1157 = vmatprep.subr.mxu0 0.0
    %1158 = vmatpush1.msra.mxu0 0.0
    %1159 = vmatprep.subr.mxu0 0.0
    %1160 = vmatpush1.msra.mxu0 0.0
    %1161 = vmatprep.subr.mxu0 0.0
    %1162 = vmatpush1.msra.mxu0 0.0
    %1163 = vmatprep.subr.mxu0 0.0
    %1164 = vmatpush1.msra.mxu0 0.0
    %1165 = vmatprep.subr.mxu0 0.0
    %1166 = vmatpush1.msra.mxu0 0.0
    %1167 = vmatprep.subr.mxu0 0.0
    %1168 = vmatpush1.msra.mxu0 0.0
    %1169 = vmatprep.subr.mxu0 0.0
    %1170 = vmatpush1.msra.mxu0 0.0
    %1171 = vmatprep.subr.mxu0 0.0
    %1172 = vmatpush1.msra.mxu0 0.0
    %1173 = vmatprep.subr.mxu0 0.0
    %1174 = vmatpush1.msra.mxu0 0.0
    %1175 = vmatprep.subr.mxu0 0.0
    %1176 = vmatpush1.msra.mxu0 0.0
    %1177 = vmatprep.subr.mxu0 0.0
    %1178 = vmatpush1.msra.mxu0 0.0
    %1179 = vmatprep.subr.mxu0 0.0
    %1180 = vmatpush1.msra.mxu0 0.0
    %1181 = vmatprep.subr.mxu0 0.0
    %1182 = vmatpush1.msra.mxu0 0.0
    %1183 = vmatprep.mubr.f32.mxu0 0.0
    %1184 = vmatmul.mubr.f32.gmra.mrb[0].mxu0 %v1047
    %v1185 = vpop.f32.mrb[0].mxu0
    %v1186 = vadd.f32 0.0, %v1185
    %v1187 = vpop.f32.mrb[0].mxu0
    %1188 = vdwg.mxu0
    %v1189 = vadd.f32 %v273, %v1115
    %v1190 = vadd.f32 %v275, %v1117
    %v1191 = vxor.u32 %v1189, 2147483648
    %v1192 = vxor.u32 %v1190, 2147483648
    %v1193 = vmul.f32 %v1191, 1.442695
    %v1194 = vpow.pop %v1193
    %v1195 = vmul.f32 %v1192, 1.442695
    %v1196 = vpow.pop %v1195
    %v1197 = vadd.f32 %v1194, 1.0
    %v1198 = vadd.f32 %v1196, 1.0
    %v1199 = vrcp.pop %v1197
    %v1200 = vmul.f32 1.0, %v1199
    %v1201 = vrcp.pop %v1198
    %v1202 = vmul.f32 1.0, %v1201
    %v1203 = vadd.f32 %v1186, %v164
    %v1204 = vmul.f32 %v1200, %v1203
    %v1205 = vadd.f32 %v382, %v1204
    %v1206 = vtanh.pop %v1205
    %v1207 = vsub.f32 %v1047, %v1206
    %v1208 = vmul.f32 %v1202, %v1207
    %v1209 = vadd.f32 %v1206, %v1208
    %1210 = vmatprep.subr.mxu0 %v111
    %1211 = vmatpush1.msra.mxu0 %v110
    %1212 = vmatprep.subr.mxu0 %v114
    %1213 = vmatpush1.msra.mxu0 %v113
    %1214 = vmatprep.subr.mxu0 %v117
    %1215 = vmatpush1.msra.mxu0 %v116
    %1216 = vmatprep.subr.mxu0 %v120
    %1217 = vmatpush1.msra.mxu0 %v119
    %1218 = vmatprep.subr.mxu0 %v123
    %1219 = vmatpush1.msra.mxu0 %v122
    %1220 = vmatprep.subr.mxu0 %v126
    %1221 = vmatpush1.msra.mxu0 %v125
    %1222 = vmatprep.subr.mxu0 %v129
    %1223 = vmatpush1.msra.mxu0 %v128
    %1224 = vmatprep.subr.mxu0 %v132
    %1225 = vmatpush1.msra.mxu0 %v131
    %1226 = vmatprep.subr.mxu0 %v135
    %1227 = vmatpush1.msra.mxu0 %v134
    %1228 = vmatprep.subr.mxu0 %v138
    %1229 = vmatpush1.msra.mxu0 %v137
    %1230 = vmatprep.subr.mxu0 %v141
    %1231 = vmatpush1.msra.mxu0 %v140
    %1232 = vmatprep.subr.mxu0 %v144
    %1233 = vmatpush1.msra.mxu0 %v143
    %1234 = vmatprep.subr.mxu0 %v147
    %1235 = vmatpush1.msra.mxu0 %v146
    %1236 = vmatprep.subr.mxu0 %v150
    %1237 = vmatpush1.msra.mxu0 %v149
    %1238 = vmatprep.subr.mxu0 %v153
    %1239 = vmatpush1.msra.mxu0 %v152
    %1240 = vmatprep.subr.mxu0 %v156
    %1241 = vmatpush1.msra.mxu0 %v155
    %1242 = vmatprep.subr.mxu0 0.0
    %1243 = vmatpush1.msra.mxu0 0.0
    %1244 = vmatprep.subr.mxu0 0.0
    %1245 = vmatpush1.msra.mxu0 0.0
    %1246 = vmatprep.subr.mxu0 0.0
    %1247 = vmatpush1.msra.mxu0 0.0
    %1248 = vmatprep.subr.mxu0 0.0
    %1249 = vmatpush1.msra.mxu0 0.0
    %1250 = vmatprep.subr.mxu0 0.0
    %1251 = vmatpush1.msra.mxu0 0.0
    %1252 = vmatprep.subr.mxu0 0.0
    %1253 = vmatpush1.msra.mxu0 0.0
    %1254 = vmatprep.subr.mxu0 0.0
    %1255 = vmatpush1.msra.mxu0 0.0
    %1256 = vmatprep.subr.mxu0 0.0
    %1257 = vmatpush1.msra.mxu0 0.0
    %1258 = vmatprep.subr.mxu0 0.0
    %1259 = vmatpush1.msra.mxu0 0.0
    %1260 = vmatprep.subr.mxu0 0.0
    %1261 = vmatpush1.msra.mxu0 0.0
    %1262 = vmatprep.subr.mxu0 0.0
    %1263 = vmatpush1.msra.mxu0 0.0
    %1264 = vmatprep.subr.mxu0 0.0
    %1265 = vmatpush1.msra.mxu0 0.0
    %1266 = vmatprep.subr.mxu0 0.0
    %1267 = vmatpush1.msra.mxu0 0.0
    %1268 = vmatprep.subr.mxu0 0.0
    %1269 = vmatpush1.msra.mxu0 0.0
    %1270 = vmatprep.subr.mxu0 0.0
    %1271 = vmatpush1.msra.mxu0 0.0
    %1272 = vmatprep.subr.mxu0 0.0
    %1273 = vmatpush1.msra.mxu0 0.0
    %1274 = vmatprep.mubr.f32.mxu0 0.0
    %1275 = vmatmul.mubr.f32.gmra.mrb[0].mxu0 %v1209
    %v1276 = vpop.f32.mrb[0].mxu0
    %v1277 = vadd.f32 0.0, %v1276
    %v1278 = vpop.f32.mrb[0].mxu0
    %v1279 = vadd.f32 0.0, %v1278
    %1280 = vdwg.mxu0
    %1281 = vmatprep.subr.mxu0 0.0
    %1282 = vmatpush1.msra.mxu0 %v112
    %1283 = vmatprep.subr.mxu0 0.0
    %1284 = vmatpush1.msra.mxu0 %v115
    %1285 = vmatprep.subr.mxu0 0.0
    %1286 = vmatpush1.msra.mxu0 %v118
    %1287 = vmatprep.subr.mxu0 0.0
    %1288 = vmatpush1.msra.mxu0 %v121
    %1289 = vmatprep.subr.mxu0 0.0
    %1290 = vmatpush1.msra.mxu0 %v124
    %1291 = vmatprep.subr.mxu0 0.0
    %1292 = vmatpush1.msra.mxu0 %v127
    %1293 = vmatprep.subr.mxu0 0.0
    %1294 = vmatpush1.msra.mxu0 %v130
    %1295 = vmatprep.subr.mxu0 0.0
    %1296 = vmatpush1.msra.mxu0 %v133
    %1297 = vmatprep.subr.mxu0 0.0
    %1298 = vmatpush1.msra.mxu0 %v136
    %1299 = vmatprep.subr.mxu0 0.0
    %1300 = vmatpush1.msra.mxu0 %v139
    %1301 = vmatprep.subr.mxu0 0.0
    %1302 = vmatpush1.msra.mxu0 %v142
    %1303 = vmatprep.subr.mxu0 0.0
    %1304 = vmatpush1.msra.mxu0 %v145
    %1305 = vmatprep.subr.mxu0 0.0
    %1306 = vmatpush1.msra.mxu0 %v148
    %1307 = vmatprep.subr.mxu0 0.0
    %1308 = vmatpush1.msra.mxu0 %v151
    %1309 = vmatprep.subr.mxu0 0.0
    %1310 = vmatpush1.msra.mxu0 %v154
    %1311 = vmatprep.subr.mxu0 0.0
    %1312 = vmatpush1.msra.mxu0 %v157
    %1313 = vmatprep.subr.mxu0 0.0
    %1314 = vmatpush1.msra.mxu0 0.0
    %1315 = vmatprep.subr.mxu0 0.0
    %1316 = vmatpush1.msra.mxu0 0.0
    %1317 = vmatprep.subr.mxu0 0.0
    %1318 = vmatpush1.msra.mxu0 0.0
    %1319 = vmatprep.subr.mxu0 0.0
    %1320 = vmatpush1.msra.mxu0 0.0
    %1321 = vmatprep.subr.mxu0 0.0
    %1322 = vmatpush1.msra.mxu0 0.0
    %1323 = vmatprep.subr.mxu0 0.0
    %1324 = vmatpush1.msra.mxu0 0.0
    %1325 = vmatprep.subr.mxu0 0.0
    %1326 = vmatpush1.msra.mxu0 0.0
    %1327 = vmatprep.subr.mxu0 0.0
    %1328 = vmatpush1.msra.mxu0 0.0
    %1329 = vmatprep.subr.mxu0 0.0
    %1330 = vmatpush1.msra.mxu0 0.0
    %1331 = vmatprep.subr.mxu0 0.0
    %1332 = vmatpush1.msra.mxu0 0.0
    %1333 = vmatprep.subr.mxu0 0.0
    %1334 = vmatpush1.msra.mxu0 0.0
    %1335 = vmatprep.subr.mxu0 0.0
    %1336 = vmatpush1.msra.mxu0 0.0
    %1337 = vmatprep.subr.mxu0 0.0
    %1338 = vmatpush1.msra.mxu0 0.0
    %1339 = vmatprep.subr.mxu0 0.0
    %1340 = vmatpush1.msra.mxu0 0.0
    %1341 = vmatprep.subr.mxu0 0.0
    %1342 = vmatpush1.msra.mxu0 0.0
    %1343 = vmatprep.subr.mxu0 0.0
    %1344 = vmatpush1.msra.mxu0 0.0
    %1345 = vmatprep.mubr.f32.mxu0 0.0
    %1346 = vmatmul.mubr.f32.gmra.mrb[0].mxu0 %v1209
    %v1347 = vpop.f32.mrb[0].mxu0
    %v1348 = vadd.f32 0.0, %v1347
    %v1349 = vpop.f32.mrb[0].mxu0
    %1350 = vdwg.mxu0
    %v1351 = vadd.f32 %v279, %v1277
    %v1352 = vadd.f32 %v281, %v1279
    %v1353 = vxor.u32 %v1351, 2147483648
    %v1354 = vxor.u32 %v1352, 2147483648
    %v1355 = vmul.f32 %v1353, 1.442695
    %v1356 = vpow.pop %v1355
    %v1357 = vmul.f32 %v1354, 1.442695
    %v1358 = vpow.pop %v1357
    %v1359 = vadd.f32 %v1356, 1.0
    %v1360 = vadd.f32 %v1358, 1.0
    %v1361 = vrcp.pop %v1359
    %v1362 = vmul.f32 1.0, %v1361
    %v1363 = vrcp.pop %v1360
    %v1364 = vmul.f32 1.0, %v1363
    %v1365 = vadd.f32 %v1348, %v164
    %v1366 = vmul.f32 %v1362, %v1365
    %v1367 = vadd.f32 %v387, %v1366
    %v1368 = vtanh.pop %v1367
    %v1369 = vsub.f32 %v1209, %v1368
    %v1370 = vmul.f32 %v1364, %v1369
    %v1371 = vadd.f32 %v1368, %v1370
    %1372 = vmatprep.subr.mxu0 %v111
    %1373 = vmatpush1.msra.mxu0 %v110
    %1374 = vmatprep.subr.mxu0 %v114
    %1375 = vmatpush1.msra.mxu0 %v113
    %1376 = vmatprep.subr.mxu0 %v117
    %1377 = vmatpush1.msra.mxu0 %v116
    %1378 = vmatprep.subr.mxu0 %v120
    %1379 = vmatpush1.msra.mxu0 %v119
    %1380 = vmatprep.subr.mxu0 %v123
    %1381 = vmatpush1.msra.mxu0 %v122
    %1382 = vmatprep.subr.mxu0 %v126
    %1383 = vmatpush1.msra.mxu0 %v125
    %1384 = vmatprep.subr.mxu0 %v129
    %1385 = vmatpush1.msra.mxu0 %v128
    %1386 = vmatprep.subr.mxu0 %v132
    %1387 = vmatpush1.msra.mxu0 %v131
    %1388 = vmatprep.subr.mxu0 %v135
    %1389 = vmatpush1.msra.mxu0 %v134
    %1390 = vmatprep.subr.mxu0 %v138
    %1391 = vmatpush1.msra.mxu0 %v137
    %1392 = vmatprep.subr.mxu0 %v141
    %1393 = vmatpush1.msra.mxu0 %v140
    %1394 = vmatprep.subr.mxu0 %v144
    %1395 = vmatpush1.msra.mxu0 %v143
    %1396 = vmatprep.subr.mxu0 %v147
    %1397 = vmatpush1.msra.mxu0 %v146
    %1398 = vmatprep.subr.mxu0 %v150
    %1399 = vmatpush1.msra.mxu0 %v149
    %1400 = vmatprep.subr.mxu0 %v153
    %1401 = vmatpush1.msra.mxu0 %v152
    %1402 = vmatprep.subr.mxu0 %v156
    %1403 = vmatpush1.msra.mxu0 %v155
    %1404 = vmatprep.subr.mxu0 0.0
    %1405 = vmatpush1.msra.mxu0 0.0
    %1406 = vmatprep.subr.mxu0 0.0
    %1407 = vmatpush1.msra.mxu0 0.0
    %1408 = vmatprep.subr.mxu0 0.0
    %1409 = vmatpush1.msra.mxu0 0.0
    %1410 = vmatprep.subr.mxu0 0.0
    %1411 = vmatpush1.msra.mxu0 0.0
    %1412 = vmatprep.subr.mxu0 0.0
    %1413 = vmatpush1.msra.mxu0 0.0
    %1414 = vmatprep.subr.mxu0 0.0
    %1415 = vmatpush1.msra.mxu0 0.0
    %1416 = vmatprep.subr.mxu0 0.0
    %1417 = vmatpush1.msra.mxu0 0.0
    %1418 = vmatprep.subr.mxu0 0.0
    %1419 = vmatpush1.msra.mxu0 0.0
    %1420 = vmatprep.subr.mxu0 0.0
    %1421 = vmatpush1.msra.mxu0 0.0
    %1422 = vmatprep.subr.mxu0 0.0
    %1423 = vmatpush1.msra.mxu0 0.0
    %1424 = vmatprep.subr.mxu0 0.0
    %1425 = vmatpush1.msra.mxu0 0.0
    %1426 = vmatprep.subr.mxu0 0.0
    %1427 = vmatpush1.msra.mxu0 0.0
    %1428 = vmatprep.subr.mxu0 0.0
    %1429 = vmatpush1.msra.mxu0 0.0
    %1430 = vmatprep.subr.mxu0 0.0
    %1431 = vmatpush1.msra.mxu0 0.0
    %1432 = vmatprep.subr.mxu0 0.0
    %1433 = vmatpush1.msra.mxu0 0.0
    %1434 = vmatprep.subr.mxu0 0.0
    %1435 = vmatpush1.msra.mxu0 0.0
    %1436 = vmatprep.mubr.f32.mxu0 0.0
    %1437 = vmatmul.mubr.f32.gmra.mrb[0].mxu0 %v1371
    %v1438 = vpop.f32.mrb[0].mxu0
    %v1439 = vadd.f32 0.0, %v1438
    %v1440 = vpop.f32.mrb[0].mxu0
    %v1441 = vadd.f32 0.0, %v1440
    %1442 = vdwg.mxu0
    %1443 = vmatprep.subr.mxu0 0.0
    %1444 = vmatpush1.msra.mxu0 %v112
    %1445 = vmatprep.subr.mxu0 0.0
    %1446 = vmatpush1.msra.mxu0 %v115
    %1447 = vmatprep.subr.mxu0 0.0
    %1448 = vmatpush1.msra.mxu0 %v118
    %1449 = vmatprep.subr.mxu0 0.0
    %1450 = vmatpush1.msra.mxu0 %v121
    %1451 = vmatprep.subr.mxu0 0.0
    %1452 = vmatpush1.msra.mxu0 %v124
    %1453 = vmatprep.subr.mxu0 0.0
    %1454 = vmatpush1.msra.mxu0 %v127
    %1455 = vmatprep.subr.mxu0 0.0
    %1456 = vmatpush1.msra.mxu0 %v130
    %1457 = vmatprep.subr.mxu0 0.0
    %1458 = vmatpush1.msra.mxu0 %v133
    %1459 = vmatprep.subr.mxu0 0.0
    %1460 = vmatpush1.msra.mxu0 %v136
    %1461 = vmatprep.subr.mxu0 0.0
    %1462 = vmatpush1.msra.mxu0 %v139
    %1463 = vmatprep.subr.mxu0 0.0
    %1464 = vmatpush1.msra.mxu0 %v142
    %1465 = vmatprep.subr.mxu0 0.0
    %1466 = vmatpush1.msra.mxu0 %v145
    %1467 = vmatprep.subr.mxu0 0.0
    %1468 = vmatpush1.msra.mxu0 %v148
    %1469 = vmatprep.subr.mxu0 0.0
    %1470 = vmatpush1.msra.mxu0 %v151
    %1471 = vmatprep.subr.mxu0 0.0
    %1472 = vmatpush1.msra.mxu0 %v154
    %1473 = vmatprep.subr.mxu0 0.0
    %1474 = vmatpush1.msra.mxu0 %v157
    %1475 = vmatprep.subr.mxu0 0.0
    %1476 = vmatpush1.msra.mxu0 0.0
    %1477 = vmatprep.subr.mxu0 0.0
    %1478 = vmatpush1.msra.mxu0 0.0
    %1479 = vmatprep.subr.mxu0 0.0
    %1480 = vmatpush1.msra.mxu0 0.0
    %1481 = vmatprep.subr.mxu0 0.0
    %1482 = vmatpush1.msra.mxu0 0.0
    %1483 = vmatprep.subr.mxu0 0.0
    %1484 = vmatpush1.msra.mxu0 0.0
    %1485 = vmatprep.subr.mxu0 0.0
    %1486 = vmatpush1.msra.mxu0 0.0
    %1487 = vmatprep.subr.mxu0 0.0
    %1488 = vmatpush1.msra.mxu0 0.0
    %1489 = vmatprep.subr.mxu0 0.0
    %1490 = vmatpush1.msra.mxu0 0.0
    %1491 = vmatprep.subr.mxu0 0.0
    %1492 = vmatpush1.msra.mxu0 0.0
    %1493 = vmatprep.subr.mxu0 0.0
    %1494 = vmatpush1.msra.mxu0 0.0
    %1495 = vmatprep.subr.mxu0 0.0
    %1496 = vmatpush1.msra.mxu0 0.0
    %1497 = vmatprep.subr.mxu0 0.0
    %1498 = vmatpush1.msra.mxu0 0.0
    %1499 = vmatprep.subr.mxu0 0.0
    %1500 = vmatpush1.msra.mxu0 0.0
    %1501 = vmatprep.subr.mxu0 0.0
    %1502 = vmatpush1.msra.mxu0 0.0
    %1503 = vmatprep.subr.mxu0 0.0
    %1504 = vmatpush1.msra.mxu0 0.0
    %1505 = vmatprep.subr.mxu0 0.0
    %1506 = vmatpush1.msra.mxu0 0.0
    %1507 = vmatprep.mubr.f32.mxu0 0.0
    %1508 = vmatmul.mubr.f32.gmra.mrb[0].mxu0 %v1371
    %v1509 = vpop.f32.mrb[0].mxu0
    %v1510 = vadd.f32 0.0, %v1509
    %v1511 = vpop.f32.mrb[0].mxu0
    %1512 = vdwg.mxu0
    %v1513 = vadd.f32 %v285, %v1439
    %v1514 = vadd.f32 %v287, %v1441
    %v1515 = vxor.u32 %v1513, 2147483648
    %v1516 = vxor.u32 %v1514, 2147483648
    %v1517 = vmul.f32 %v1515, 1.442695
    %v1518 = vpow.pop %v1517
    %v1519 = vmul.f32 %v1516, 1.442695
    %v1520 = vpow.pop %v1519
    %v1521 = vadd.f32 %v1518, 1.0
    %v1522 = vadd.f32 %v1520, 1.0
    %v1523 = vrcp.pop %v1521
    %v1524 = vmul.f32 1.0, %v1523
    %v1525 = vrcp.pop %v1522
    %v1526 = vmul.f32 1.0, %v1525
    %v1527 = vadd.f32 %v1510, %v164
    %v1528 = vmul.f32 %v1524, %v1527
    %v1529 = vadd.f32 %v392, %v1528
    %v1530 = vtanh.pop %v1529
    %v1531 = vsub.f32 %v1371, %v1530
    %v1532 = vmul.f32 %v1526, %v1531
    %v1533 = vadd.f32 %v1530, %v1532
    %1534 = vmatprep.subr.mxu0 %v111
    %1535 = vmatpush1.msra.mxu0 %v110
    %1536 = vmatprep.subr.mxu0 %v114
    %1537 = vmatpush1.msra.mxu0 %v113
    %1538 = vmatprep.subr.mxu0 %v117
    %1539 = vmatpush1.msra.mxu0 %v116
    %1540 = vmatprep.subr.mxu0 %v120
    %1541 = vmatpush1.msra.mxu0 %v119
    %1542 = vmatprep.subr.mxu0 %v123
    %1543 = vmatpush1.msra.mxu0 %v122
    %1544 = vmatprep.subr.mxu0 %v126
    %1545 = vmatpush1.msra.mxu0 %v125
    %1546 = vmatprep.subr.mxu0 %v129
    %1547 = vmatpush1.msra.mxu0 %v128
    %1548 = vmatprep.subr.mxu0 %v132
    %1549 = vmatpush1.msra.mxu0 %v131
    %1550 = vmatprep.subr.mxu0 %v135
    %1551 = vmatpush1.msra.mxu0 %v134
    %1552 = vmatprep.subr.mxu0 %v138
    %1553 = vmatpush1.msra.mxu0 %v137
    %1554 = vmatprep.subr.mxu0 %v141
    %1555 = vmatpush1.msra.mxu0 %v140
    %1556 = vmatprep.subr.mxu0 %v144
    %1557 = vmatpush1.msra.mxu0 %v143
    %1558 = vmatprep.subr.mxu0 %v147
    %1559 = vmatpush1.msra.mxu0 %v146
    %1560 = vmatprep.subr.mxu0 %v150
    %1561 = vmatpush1.msra.mxu0 %v149
    %1562 = vmatprep.subr.mxu0 %v153
    %1563 = vmatpush1.msra.mxu0 %v152
    %1564 = vmatprep.subr.mxu0 %v156
    %1565 = vmatpush1.msra.mxu0 %v155
    %1566 = vmatprep.subr.mxu0 0.0
    %1567 = vmatpush1.msra.mxu0 0.0
    %1568 = vmatprep.subr.mxu0 0.0
    %1569 = vmatpush1.msra.mxu0 0.0
    %1570 = vmatprep.subr.mxu0 0.0
    %1571 = vmatpush1.msra.mxu0 0.0
    %1572 = vmatprep.subr.mxu0 0.0
    %1573 = vmatpush1.msra.mxu0 0.0
    %1574 = vmatprep.subr.mxu0 0.0
    %1575 = vmatpush1.msra.mxu0 0.0
    %1576 = vmatprep.subr.mxu0 0.0
    %1577 = vmatpush1.msra.mxu0 0.0
    %1578 = vmatprep.subr.mxu0 0.0
    %1579 = vmatpush1.msra.mxu0 0.0
    %1580 = vmatprep.subr.mxu0 0.0
    %1581 = vmatpush1.msra.mxu0 0.0
    %1582 = vmatprep.subr.mxu0 0.0
    %1583 = vmatpush1.msra.mxu0 0.0
    %1584 = vmatprep.subr.mxu0 0.0
    %1585 = vmatpush1.msra.mxu0 0.0
    %1586 = vmatprep.subr.mxu0 0.0
    %1587 = vmatpush1.msra.mxu0 0.0
    %1588 = vmatprep.subr.mxu0 0.0
    %1589 = vmatpush1.msra.mxu0 0.0
    %1590 = vmatprep.subr.mxu0 0.0
    %1591 = vmatpush1.msra.mxu0 0.0
    %1592 = vmatprep.subr.mxu0 0.0
    %1593 = vmatpush1.msra.mxu0 0.0
    %1594 = vmatprep.subr.mxu0 0.0
    %1595 = vmatpush1.msra.mxu0 0.0
    %1596 = vmatprep.subr.mxu0 0.0
    %1597 = vmatpush1.msra.mxu0 0.0
    %1598 = vmatprep.mubr.f32.mxu0 0.0
    %1599 = vmatmul.mubr.f32.gmra.mrb[0].mxu0 %v1533
    %v1600 = vpop.f32.mrb[0].mxu0
    %v1601 = vadd.f32 0.0, %v1600
    %v1602 = vpop.f32.mrb[0].mxu0
    %v1603 = vadd.f32 0.0, %v1602
    %1604 = vdwg.mxu0
    %1605 = vmatprep.subr.mxu0 0.0
    %1606 = vmatpush1.msra.mxu0 %v112
    %1607 = vmatprep.subr.mxu0 0.0
    %1608 = vmatpush1.msra.mxu0 %v115
    %1609 = vmatprep.subr.mxu0 0.0
    %1610 = vmatpush1.msra.mxu0 %v118
    %1611 = vmatprep.subr.mxu0 0.0
    %1612 = vmatpush1.msra.mxu0 %v121
    %1613 = vmatprep.subr.mxu0 0.0
    %1614 = vmatpush1.msra.mxu0 %v124
    %1615 = vmatprep.subr.mxu0 0.0
    %1616 = vmatpush1.msra.mxu0 %v127
    %1617 = vmatprep.subr.mxu0 0.0
    %1618 = vmatpush1.msra.mxu0 %v130
    %1619 = vmatprep.subr.mxu0 0.0
    %1620 = vmatpush1.msra.mxu0 %v133
    %1621 = vmatprep.subr.mxu0 0.0
    %1622 = vmatpush1.msra.mxu0 %v136
    %1623 = vmatprep.subr.mxu0 0.0
    %1624 = vmatpush1.msra.mxu0 %v139
    %1625 = vmatprep.subr.mxu0 0.0
    %1626 = vmatpush1.msra.mxu0 %v142
    %1627 = vmatprep.subr.mxu0 0.0
    %1628 = vmatpush1.msra.mxu0 %v145
    %1629 = vmatprep.subr.mxu0 0.0
    %1630 = vmatpush1.msra.mxu0 %v148
    %1631 = vmatprep.subr.mxu0 0.0
    %1632 = vmatpush1.msra.mxu0 %v151
    %1633 = vmatprep.subr.mxu0 0.0
    %1634 = vmatpush1.msra.mxu0 %v154
    %1635 = vmatprep.subr.mxu0 0.0
    %1636 = vmatpush1.msra.mxu0 %v157
    %1637 = vmatprep.subr.mxu0 0.0
    %1638 = vmatpush1.msra.mxu0 0.0
    %1639 = vmatprep.subr.mxu0 0.0
    %1640 = vmatpush1.msra.mxu0 0.0
    %1641 = vmatprep.subr.mxu0 0.0
    %1642 = vmatpush1.msra.mxu0 0.0
    %1643 = vmatprep.subr.mxu0 0.0
    %1644 = vmatpush1.msra.mxu0 0.0
    %1645 = vmatprep.subr.mxu0 0.0
    %1646 = vmatpush1.msra.mxu0 0.0
    %1647 = vmatprep.subr.mxu0 0.0
    %1648 = vmatpush1.msra.mxu0 0.0
    %1649 = vmatprep.subr.mxu0 0.0
    %1650 = vmatpush1.msra.mxu0 0.0
    %1651 = vmatprep.subr.mxu0 0.0
    %1652 = vmatpush1.msra.mxu0 0.0
    %1653 = vmatprep.subr.mxu0 0.0
    %1654 = vmatpush1.msra.mxu0 0.0
    %1655 = vmatprep.subr.mxu0 0.0
    %1656 = vmatpush1.msra.mxu0 0.0
    %1657 = vmatprep.subr.mxu0 0.0
    %1658 = vmatpush1.msra.mxu0 0.0
    %1659 = vmatprep.subr.mxu0 0.0
    %1660 = vmatpush1.msra.mxu0 0.0
    %1661 = vmatprep.subr.mxu0 0.0
    %1662 = vmatpush1.msra.mxu0 0.0
    %1663 = vmatprep.subr.mxu0 0.0
    %1664 = vmatpush1.msra.mxu0 0.0
    %1665 = vmatprep.subr.mxu0 0.0
    %1666 = vmatpush1.msra.mxu0 0.0
    %1667 = vmatprep.subr.mxu0 0.0
    %1668 = vmatpush1.msra.mxu0 0.0
    %1669 = vmatprep.mubr.f32.mxu0 0.0
    %1670 = vmatmul.mubr.f32.gmra.mrb[0].mxu0 %v1533
    %v1671 = vpop.f32.mrb[0].mxu0
    %v1672 = vadd.f32 0.0, %v1671
    %v1673 = vpop.f32.mrb[0].mxu0
    %1674 = vdwg.mxu0
    %v1675 = vadd.f32 %v291, %v1601
    %v1676 = vadd.f32 %v293, %v1603
    %v1677 = vxor.u32 %v1675, 2147483648
    %v1678 = vxor.u32 %v1676, 2147483648
    %v1679 = vmul.f32 %v1677, 1.442695
    %v1680 = vpow.pop %v1679
    %v1681 = vmul.f32 %v1678, 1.442695
    %v1682 = vpow.pop %v1681
    %v1683 = vadd.f32 %v1680, 1.0
    %v1684 = vadd.f32 %v1682, 1.0
    %v1685 = vrcp.pop %v1683
    %v1686 = vmul.f32 1.0, %v1685
    %v1687 = vrcp.pop %v1684
    %v1688 = vmul.f32 1.0, %v1687
    %v1689 = vadd.f32 %v1672, %v164
    %v1690 = vmul.f32 %v1686, %v1689
    %v1691 = vadd.f32 %v397, %v1690
    %v1692 = vtanh.pop %v1691
    %v1693 = vsub.f32 %v1533, %v1692
    %v1694 = vmul.f32 %v1688, %v1693
    %v1695 = vadd.f32 %v1692, %v1694
    %s1696 = scalar_lea.vmem [#allocation2], 384
    %v1697 = vld [vmem:[%s1696] sm:$0xff]
    %v1698 = vld [vmem:[%s1696 + $0x8] sm:$0xff]
    %v1699 = vld [vmem:[%s1696 + $0x10] sm:$0xff]
    %v1700 = vld [vmem:[%s1696 + $0x18] sm:$0xff]
    %v1701 = vld [vmem:[%s1696 + $0x20] sm:$0xff]
    %v1702 = vld [vmem:[%s1696 + $0x28] sm:$0xff]
    %v1703 = vld [vmem:[%s1696 + $0x30] sm:$0xff]
    %v1704 = vld [vmem:[%s1696 + $0x38] sm:$0xff]
    %v1705 = vld [vmem:[%s1696 + $0x40] sm:$0xff]
    %v1706 = vld [vmem:[%s1696 + $0x48] sm:$0xff]
    %v1707 = vld [vmem:[%s1696 + $0x50] sm:$0xff]
    %v1708 = vld [vmem:[%s1696 + $0x58] sm:$0xff]
    %v1709 = vld [vmem:[%s1696 + $0x60] sm:$0xff]
    %v1710 = vld [vmem:[%s1696 + $0x68] sm:$0xff]
    %v1711 = vld [vmem:[%s1696 + $0x70] sm:$0xff]
    %v1712 = vld [vmem:[%s1696 + $0x78] sm:$0xff]
    %v1713 = vld [vmem:[%s1696 + $0x80] sm:$0xff]
    %v1714 = vld [vmem:[%s1696 + $0x88] sm:$0xff]
    %v1715 = vld [vmem:[%s1696 + $0x90] sm:$0xff]
    %v1716 = vld [vmem:[%s1696 + $0x98] sm:$0xff]
    %v1717 = vld [vmem:[%s1696 + $0xa0] sm:$0xff]
    %v1718 = vld [vmem:[%s1696 + $0xa8] sm:$0xff]
    %v1719 = vld [vmem:[%s1696 + $0xb0] sm:$0xff]
    %v1720 = vld [vmem:[%s1696 + $0xb8] sm:$0xff]
    %v1721 = vld [vmem:[%s1696 + $0xc0] sm:$0xff]
    %v1722 = vld [vmem:[%s1696 + $0xc8] sm:$0xff]
    %v1723 = vld [vmem:[%s1696 + $0xd0] sm:$0xff]
    %v1724 = vld [vmem:[%s1696 + $0xd8] sm:$0xff]
    %v1725 = vld [vmem:[%s1696 + $0xe0] sm:$0xff]
    %v1726 = vld [vmem:[%s1696 + $0xe8] sm:$0xff]
    %v1727 = vld [vmem:[%s1696 + $0xf0] sm:$0xff]
    %v1728 = vld [vmem:[%s1696 + $0xf8] sm:$0xff]
    %v1729 = vld [vmem:[%s1696 + $0x100] sm:$0xff]
    %v1730 = vld [vmem:[%s1696 + $0x108] sm:$0xff]
    %v1731 = vld [vmem:[%s1696 + $0x110] sm:$0xff]
    %v1732 = vld [vmem:[%s1696 + $0x118] sm:$0xff]
    %v1733 = vld [vmem:[%s1696 + $0x120] sm:$0xff]
    %v1734 = vld [vmem:[%s1696 + $0x128] sm:$0xff]
    %v1735 = vld [vmem:[%s1696 + $0x130] sm:$0xff]
    %v1736 = vld [vmem:[%s1696 + $0x138] sm:$0xff]
    %v1737 = vld [vmem:[%s1696 + $0x140] sm:$0xff]
    %v1738 = vld [vmem:[%s1696 + $0x148] sm:$0xff]
    %v1739 = vld [vmem:[%s1696 + $0x150] sm:$0xff]
    %v1740 = vld [vmem:[%s1696 + $0x158] sm:$0xff]
    %v1741 = vld [vmem:[%s1696 + $0x160] sm:$0xff]
    %v1742 = vld [vmem:[%s1696 + $0x168] sm:$0xff]
    %v1743 = vld [vmem:[%s1696 + $0x170] sm:$0xff]
    %v1744 = vld [vmem:[%s1696 + $0x178] sm:$0xff]
    %s1745 = scalar_lea.vmem [#allocation4], 384
    %v1746 = vld [vmem:[%s1745] sm:$0xff]
    %v1747 = vld [vmem:[%s1745 + $0x8] sm:$0xff]
    %v1748 = vld [vmem:[%s1745 + $0x10] sm:$0xff]
    %v1749 = vld [vmem:[%s1745 + $0x18] sm:$0xff]
    %v1750 = vld [vmem:[%s1745 + $0x20] sm:$0xff]
    %v1751 = vld [vmem:[%s1745 + $0x28] sm:$0xff]
    %v1752 = vld [vmem:[%s1745 + $0x30] sm:$0xff]
    %v1753 = vld [vmem:[%s1745 + $0x38] sm:$0xff]
    %v1754 = vld [vmem:[%s1745 + $0x40] sm:$0xff]
    %v1755 = vld [vmem:[%s1745 + $0x48] sm:$0xff]
    %v1756 = vld [vmem:[%s1745 + $0x50] sm:$0xff]
    %v1757 = vld [vmem:[%s1745 + $0x58] sm:$0xff]
    %v1758 = vld [vmem:[%s1745 + $0x60] sm:$0xff]
    %v1759 = vld [vmem:[%s1745 + $0x68] sm:$0xff]
    %v1760 = vld [vmem:[%s1745 + $0x70] sm:$0xff]
    %v1761 = vld [vmem:[%s1745 + $0x78] sm:$0xff]
    %v1762 = vld [vmem:[%s1745 + $0x80] sm:$0xff]
    %v1763 = vld [vmem:[%s1745 + $0x88] sm:$0xff]
    %v1764 = vld [vmem:[%s1745 + $0x90] sm:$0xff]
    %v1765 = vld [vmem:[%s1745 + $0x98] sm:$0xff]
    %v1766 = vld [vmem:[%s1745 + $0xa0] sm:$0xff]
    %v1767 = vld [vmem:[%s1745 + $0xa8] sm:$0xff]
    %v1768 = vld [vmem:[%s1745 + $0xb0] sm:$0xff]
    %v1769 = vld [vmem:[%s1745 + $0xb8] sm:$0xff]
    %v1770 = vld [vmem:[%s1745 + $0xc0] sm:$0xff]
    %v1771 = vld [vmem:[%s1745 + $0xc8] sm:$0xff]
    %v1772 = vld [vmem:[%s1745 + $0xd0] sm:$0xff]
    %v1773 = vld [vmem:[%s1745 + $0xd8] sm:$0xff]
    %v1774 = vld [vmem:[%s1745 + $0xe0] sm:$0xff]
    %v1775 = vld [vmem:[%s1745 + $0xe8] sm:$0xff]
    %v1776 = vld [vmem:[%s1745 + $0xf0] sm:$0xff]
    %v1777 = vld [vmem:[%s1745 + $0xf8] sm:$0xff]
    %v1778 = vld [vmem:[%s1745 + $0x100] sm:$0xff]
    %v1779 = vld [vmem:[%s1745 + $0x108] sm:$0xff]
    %v1780 = vld [vmem:[%s1745 + $0x110] sm:$0xff]
    %v1781 = vld [vmem:[%s1745 + $0x118] sm:$0xff]
    %v1782 = vld [vmem:[%s1745 + $0x120] sm:$0xff]
    %v1783 = vld [vmem:[%s1745 + $0x128] sm:$0xff]
    %v1784 = vld [vmem:[%s1745 + $0x130] sm:$0xff]
    %v1785 = vld [vmem:[%s1745 + $0x138] sm:$0xff]
    %v1786 = vld [vmem:[%s1745 + $0x140] sm:$0xff]
    %v1787 = vld [vmem:[%s1745 + $0x148] sm:$0xff]
    %v1788 = vld [vmem:[%s1745 + $0x150] sm:$0xff]
    %v1789 = vld [vmem:[%s1745 + $0x158] sm:$0xff]
    %v1790 = vld [vmem:[%s1745 + $0x160] sm:$0xff]
    %v1791 = vld [vmem:[%s1745 + $0x168] sm:$0xff]
    %v1792 = vld [vmem:[%s1745 + $0x170] sm:$0xff]
    %v1793 = vld [vmem:[%s1745 + $0x178] sm:$0xff]
    %s1794 = scalar_lea.vmem %s3, 3
    %v1795 = vld [vmem:[%s1794] sm:$0x7]
    %s1796 = scalar_lea.vmem %s4, 1
    %v1797 = vld [vmem:[%s1796] sm:$0x1]
    %v1799 = vlaneseq
    %v1800 = vshrl.u32 %v1799, 7
    %v1801 = vsub.s32 0, %v1800
    %v1802 = vrot.slane %v1797, %v1801
    %v1805 = vlaneseq
    %v1806 = vshrl.u32 %v1805, 7
    %v1807 = vsub.s32 0, %v1806
    %v1808 = vrot.slane %v1795, %v1807
    %v1809 = vlaneseq
    %v1810 = vshrl.u32 %v1809, 7
    %v1811 = vsub.s32 1, %v1810
    %v1812 = vrot.slane %v1795, %v1811
    %v1813 = vlaneseq
    %v1814 = vshrl.u32 %v1813, 7
    %v1815 = vsub.s32 2, %v1814
    %v1816 = vrot.slane %v1795, %v1815
    %1820 = vmatprep.subr.mxu0 %v1698
    %1821 = vmatpush1.msra.mxu0 %v1697
    %1822 = vmatprep.subr.mxu0 %v1701
    %1823 = vmatpush1.msra.mxu0 %v1700
    %1824 = vmatprep.subr.mxu0 %v1704
    %1825 = vmatpush1.msra.mxu0 %v1703
    %1826 = vmatprep.subr.mxu0 %v1707
    %1827 = vmatpush1.msra.mxu0 %v1706
    %1828 = vmatprep.subr.mxu0 %v1710
    %1829 = vmatpush1.msra.mxu0 %v1709
    %1830 = vmatprep.subr.mxu0 %v1713
    %1831 = vmatpush1.msra.mxu0 %v1712
    %1832 = vmatprep.subr.mxu0 %v1716
    %1833 = vmatpush1.msra.mxu0 %v1715
    %1834 = vmatprep.subr.mxu0 %v1719
    %1835 = vmatpush1.msra.mxu0 %v1718
    %1836 = vmatprep.subr.mxu0 %v1722
    %1837 = vmatpush1.msra.mxu0 %v1721
    %1838 = vmatprep.subr.mxu0 %v1725
    %1839 = vmatpush1.msra.mxu0 %v1724
    %1840 = vmatprep.subr.mxu0 %v1728
    %1841 = vmatpush1.msra.mxu0 %v1727
    %1842 = vmatprep.subr.mxu0 %v1731
    %1843 = vmatpush1.msra.mxu0 %v1730
    %1844 = vmatprep.subr.mxu0 %v1734
    %1845 = vmatpush1.msra.mxu0 %v1733
    %1846 = vmatprep.subr.mxu0 %v1737
    %1847 = vmatpush1.msra.mxu0 %v1736
    %1848 = vmatprep.subr.mxu0 %v1740
    %1849 = vmatpush1.msra.mxu0 %v1739
    %1850 = vmatprep.subr.mxu0 %v1743
    %1851 = vmatpush1.msra.mxu0 %v1742
    %1852 = vmatprep.subr.mxu0 0.0
    %1853 = vmatpush1.msra.mxu0 0.0
    %1854 = vmatprep.subr.mxu0 0.0
    %1855 = vmatpush1.msra.mxu0 0.0
    %1856 = vmatprep.subr.mxu0 0.0
    %1857 = vmatpush1.msra.mxu0 0.0
    %1858 = vmatprep.subr.mxu0 0.0
    %1859 = vmatpush1.msra.mxu0 0.0
    %1860 = vmatprep.subr.mxu0 0.0
    %1861 = vmatpush1.msra.mxu0 0.0
    %1862 = vmatprep.subr.mxu0 0.0
    %1863 = vmatpush1.msra.mxu0 0.0
    %1864 = vmatprep.subr.mxu0 0.0
    %1865 = vmatpush1.msra.mxu0 0.0
    %1866 = vmatprep.subr.mxu0 0.0
    %1867 = vmatpush1.msra.mxu0 0.0
    %1868 = vmatprep.subr.mxu0 0.0
    %1869 = vmatpush1.msra.mxu0 0.0
    %1870 = vmatprep.subr.mxu0 0.0
    %1871 = vmatpush1.msra.mxu0 0.0
    %1872 = vmatprep.subr.mxu0 0.0
    %1873 = vmatpush1.msra.mxu0 0.0
    %1874 = vmatprep.subr.mxu0 0.0
    %1875 = vmatpush1.msra.mxu0 0.0
    %1876 = vmatprep.subr.mxu0 0.0
    %1877 = vmatpush1.msra.mxu0 0.0
    %1878 = vmatprep.subr.mxu0 0.0
    %1879 = vmatpush1.msra.mxu0 0.0
    %1880 = vmatprep.subr.mxu0 0.0
    %1881 = vmatpush1.msra.mxu0 0.0
    %1882 = vmatprep.subr.mxu0 0.0
    %1883 = vmatpush1.msra.mxu0 0.0
    %1884 = vmatprep.mubr.f32.mxu0 0.0
    %1885 = vmatmul.mubr.f32.gmra.mrb[0].mxu0 %v561
    %v1886 = vpop.f32.mrb[0].mxu0
    %v1887 = vadd.f32 %v1808, %v1886
    %v1888 = vpop.f32.mrb[0].mxu0
    %v1889 = vadd.f32 %v1812, %v1888
    %1890 = vmatprep.mubr.f32.mxu0 0.0
    %1891 = vmatmul.mubr.f32.gmra.mrb[0].mxu0 %v723
    %v1892 = vpop.f32.mrb[0].mxu0
    %v1893 = vadd.f32 %v1808, %v1892
    %v1894 = vpop.f32.mrb[0].mxu0
    %v1895 = vadd.f32 %v1812, %v1894
    %1896 = vmatprep.mubr.f32.mxu0 0.0
    %1897 = vmatmul.mubr.f32.gmra.mrb[0].mxu0 %v885
    %v1898 = vpop.f32.mrb[0].mxu0
    %v1899 = vadd.f32 %v1808, %v1898
    %v1900 = vpop.f32.mrb[0].mxu0
    %v1901 = vadd.f32 %v1812, %v1900
    %1902 = vmatprep.mubr.f32.mxu0 0.0
    %1903 = vmatmul.mubr.f32.gmra.mrb[0].mxu0 %v1047
    %v1904 = vpop.f32.mrb[0].mxu0
    %v1905 = vadd.f32 %v1808, %v1904
    %v1906 = vpop.f32.mrb[0].mxu0
    %v1907 = vadd.f32 %v1812, %v1906
    %1908 = vmatprep.mubr.f32.mxu0 0.0
    %1909 = vmatmul.mubr.f32.gmra.mrb[0].mxu0 %v1209
    %v1910 = vpop.f32.mrb[0].mxu0
    %v1911 = vadd.f32 %v1808, %v1910
    %v1912 = vpop.f32.mrb[0].mxu0
    %v1913 = vadd.f32 %v1812, %v1912
    %1914 = vmatprep.mubr.f32.mxu0 0.0
    %1915 = vmatmul.mubr.f32.gmra.mrb[0].mxu0 %v1371
    %v1916 = vpop.f32.mrb[0].mxu0
    %v1917 = vadd.f32 %v1808, %v1916
    %v1918 = vpop.f32.mrb[0].mxu0
    %v1919 = vadd.f32 %v1812, %v1918
    %1920 = vmatprep.mubr.f32.mxu0 0.0
    %1921 = vmatmul.mubr.f32.gmra.mrb[0].mxu0 %v1533
    %v1922 = vpop.f32.mrb[0].mxu0
    %v1923 = vadd.f32 %v1808, %v1922
    %v1924 = vpop.f32.mrb[0].mxu0
    %v1925 = vadd.f32 %v1812, %v1924
    %1926 = vmatprep.mubr.f32.mxu0 0.0
    %1927 = vmatmul.mubr.f32.gmra.mrb[0].mxu0 %v1695
    %v1928 = vpop.f32.mrb[0].mxu0
    %v1929 = vadd.f32 %v1808, %v1928
    %v1930 = vpop.f32.mrb[0].mxu0
    %v1931 = vadd.f32 %v1812, %v1930
    %1932 = vdwg.mxu0
    %1933 = vmatprep.subr.mxu0 0.0
    %1934 = vmatpush1.msra.mxu0 %v1699
    %1935 = vmatprep.subr.mxu0 0.0
    %1936 = vmatpush1.msra.mxu0 %v1702
    %1937 = vmatprep.subr.mxu0 0.0
    %1938 = vmatpush1.msra.mxu0 %v1705
    %1939 = vmatprep.subr.mxu0 0.0
    %1940 = vmatpush1.msra.mxu0 %v1708
    %1941 = vmatprep.subr.mxu0 0.0
    %1942 = vmatpush1.msra.mxu0 %v1711
    %1943 = vmatprep.subr.mxu0 0.0
    %1944 = vmatpush1.msra.mxu0 %v1714
    %1945 = vmatprep.subr.mxu0 0.0
    %1946 = vmatpush1.msra.mxu0 %v1717
    %1947 = vmatprep.subr.mxu0 0.0
    %1948 = vmatpush1.msra.mxu0 %v1720
    %1949 = vmatprep.subr.mxu0 0.0
    %1950 = vmatpush1.msra.mxu0 %v1723
    %1951 = vmatprep.subr.mxu0 0.0
    %1952 = vmatpush1.msra.mxu0 %v1726
    %1953 = vmatprep.subr.mxu0 0.0
    %1954 = vmatpush1.msra.mxu0 %v1729
    %1955 = vmatprep.subr.mxu0 0.0
    %1956 = vmatpush1.msra.mxu0 %v1732
    %1957 = vmatprep.subr.mxu0 0.0
    %1958 = vmatpush1.msra.mxu0 %v1735
    %1959 = vmatprep.subr.mxu0 0.0
    %1960 = vmatpush1.msra.mxu0 %v1738
    %1961 = vmatprep.subr.mxu0 0.0
    %1962 = vmatpush1.msra.mxu0 %v1741
    %1963 = vmatprep.subr.mxu0 0.0
    %1964 = vmatpush1.msra.mxu0 %v1744
    %1965 = vmatprep.subr.mxu0 0.0
    %1966 = vmatpush1.msra.mxu0 0.0
    %1967 = vmatprep.subr.mxu0 0.0
    %1968 = vmatpush1.msra.mxu0 0.0
    %1969 = vmatprep.subr.mxu0 0.0
    %1970 = vmatpush1.msra.mxu0 0.0
    %1971 = vmatprep.subr.mxu0 0.0
    %1972 = vmatpush1.msra.mxu0 0.0
    %1973 = vmatprep.subr.mxu0 0.0
    %1974 = vmatpush1.msra.mxu0 0.0
    %1975 = vmatprep.subr.mxu0 0.0
    %1976 = vmatpush1.msra.mxu0 0.0
    %1977 = vmatprep.subr.mxu0 0.0
    %1978 = vmatpush1.msra.mxu0 0.0
    %1979 = vmatprep.subr.mxu0 0.0
    %1980 = vmatpush1.msra.mxu0 0.0
    %1981 = vmatprep.subr.mxu0 0.0
    %1982 = vmatpush1.msra.mxu0 0.0
    %1983 = vmatprep.subr.mxu0 0.0
    %1984 = vmatpush1.msra.mxu0 0.0
    %1985 = vmatprep.subr.mxu0 0.0
    %1986 = vmatpush1.msra.mxu0 0.0
    %1987 = vmatprep.subr.mxu0 0.0
    %1988 = vmatpush1.msra.mxu0 0.0
    %1989 = vmatprep.subr.mxu0 0.0
    %1990 = vmatpush1.msra.mxu0 0.0
    %1991 = vmatprep.subr.mxu0 0.0
    %1992 = vmatpush1.msra.mxu0 0.0
    %1993 = vmatprep.subr.mxu0 0.0
    %1994 = vmatpush1.msra.mxu0 0.0
    %1995 = vmatprep.subr.mxu0 0.0
    %1996 = vmatpush1.msra.mxu0 0.0
    %1997 = vmatprep.mubr.f32.mxu0 0.0
    %1998 = vmatmul.mubr.f32.gmra.mrb[0].mxu0 %v561
    %v1999 = vpop.f32.mrb[0].mxu0
    %v2000 = vadd.f32 %v1816, %v1999
    %v2001 = vpop.f32.mrb[0].mxu0
    %2002 = vmatprep.mubr.f32.mxu0 0.0
    %2003 = vmatmul.mubr.f32.gmra.mrb[0].mxu0 %v723
    %v2004 = vpop.f32.mrb[0].mxu0
    %v2005 = vadd.f32 %v1816, %v2004
    %v2006 = vpop.f32.mrb[0].mxu0
    %2007 = vmatprep.mubr.f32.mxu0 0.0
    %2008 = vmatmul.mubr.f32.gmra.mrb[0].mxu0 %v885
    %v2009 = vpop.f32.mrb[0].mxu0
    %v2010 = vadd.f32 %v1816, %v2009
    %v2011 = vpop.f32.mrb[0].mxu0
    %2012 = vmatprep.mubr.f32.mxu0 0.0
    %2013 = vmatmul.mubr.f32.gmra.mrb[0].mxu0 %v1047
    %v2014 = vpop.f32.mrb[0].mxu0
    %v2015 = vadd.f32 %v1816, %v2014
    %v2016 = vpop.f32.mrb[0].mxu0
    %2017 = vmatprep.mubr.f32.mxu0 0.0
    %2018 = vmatmul.mubr.f32.gmra.mrb[0].mxu0 %v1209
    %v2019 = vpop.f32.mrb[0].mxu0
    %v2020 = vadd.f32 %v1816, %v2019
    %v2021 = vpop.f32.mrb[0].mxu0
    %2022 = vmatprep.mubr.f32.mxu0 0.0
    %2023 = vmatmul.mubr.f32.gmra.mrb[0].mxu0 %v1371
    %v2024 = vpop.f32.mrb[0].mxu0
    %v2025 = vadd.f32 %v1816, %v2024
    %v2026 = vpop.f32.mrb[0].mxu0
    %2027 = vmatprep.mubr.f32.mxu0 0.0
    %2028 = vmatmul.mubr.f32.gmra.mrb[0].mxu0 %v1533
    %v2029 = vpop.f32.mrb[0].mxu0
    %v2030 = vadd.f32 %v1816, %v2029
    %v2031 = vpop.f32.mrb[0].mxu0
    %2032 = vmatprep.mubr.f32.mxu0 0.0
    %2033 = vmatmul.mubr.f32.gmra.mrb[0].mxu0 %v1695
    %v2034 = vpop.f32.mrb[0].mxu0
    %v2035 = vadd.f32 %v1816, %v2034
    %v2036 = vpop.f32.mrb[0].mxu0
    %2037 = vdwg.mxu0
    %2038 = vmatprep.subr.mxu0 %v1747
    %2039 = vmatpush1.msra.mxu0 %v1746
    %2040 = vmatprep.subr.mxu0 %v1750
    %2041 = vmatpush1.msra.mxu0 %v1749
    %2042 = vmatprep.subr.mxu0 %v1753
    %2043 = vmatpush1.msra.mxu0 %v1752
    %2044 = vmatprep.subr.mxu0 %v1756
    %2045 = vmatpush1.msra.mxu0 %v1755
    %2046 = vmatprep.subr.mxu0 %v1759
    %2047 = vmatpush1.msra.mxu0 %v1758
    %2048 = vmatprep.subr.mxu0 %v1762
    %2049 = vmatpush1.msra.mxu0 %v1761
    %2050 = vmatprep.subr.mxu0 %v1765
    %2051 = vmatpush1.msra.mxu0 %v1764
    %2052 = vmatprep.subr.mxu0 %v1768
    %2053 = vmatpush1.msra.mxu0 %v1767
    %2054 = vmatprep.subr.mxu0 %v1771
    %2055 = vmatpush1.msra.mxu0 %v1770
    %2056 = vmatprep.subr.mxu0 %v1774
    %2057 = vmatpush1.msra.mxu0 %v1773
    %2058 = vmatprep.subr.mxu0 %v1777
    %2059 = vmatpush1.msra.mxu0 %v1776
    %2060 = vmatprep.subr.mxu0 %v1780
    %2061 = vmatpush1.msra.mxu0 %v1779
    %2062 = vmatprep.subr.mxu0 %v1783
    %2063 = vmatpush1.msra.mxu0 %v1782
    %2064 = vmatprep.subr.mxu0 %v1786
    %2065 = vmatpush1.msra.mxu0 %v1785
    %2066 = vmatprep.subr.mxu0 %v1789
    %2067 = vmatpush1.msra.mxu0 %v1788
    %2068 = vmatprep.subr.mxu0 %v1792
    %2069 = vmatpush1.msra.mxu0 %v1791
    %2070 = vmatprep.subr.mxu0 0.0
    %2071 = vmatpush1.msra.mxu0 0.0
    %2072 = vmatprep.subr.mxu0 0.0
    %2073 = vmatpush1.msra.mxu0 0.0
    %2074 = vmatprep.subr.mxu0 0.0
    %2075 = vmatpush1.msra.mxu0 0.0
    %2076 = vmatprep.subr.mxu0 0.0
    %2077 = vmatpush1.msra.mxu0 0.0
    %2078 = vmatprep.subr.mxu0 0.0
    %2079 = vmatpush1.msra.mxu0 0.0
    %2080 = vmatprep.subr.mxu0 0.0
    %2081 = vmatpush1.msra.mxu0 0.0
    %2082 = vmatprep.subr.mxu0 0.0
    %2083 = vmatpush1.msra.mxu0 0.0
    %2084 = vmatprep.subr.mxu0 0.0
    %2085 = vmatpush1.msra.mxu0 0.0
    %2086 = vmatprep.subr.mxu0 0.0
    %2087 = vmatpush1.msra.mxu0 0.0
    %2088 = vmatprep.subr.mxu0 0.0
    %2089 = vmatpush1.msra.mxu0 0.0
    %2090 = vmatprep.subr.mxu0 0.0
    %2091 = vmatpush1.msra.mxu0 0.0
    %2092 = vmatprep.subr.mxu0 0.0
    %2093 = vmatpush1.msra.mxu0 0.0
    %2094 = vmatprep.subr.mxu0 0.0
    %2095 = vmatpush1.msra.mxu0 0.0
    %2096 = vmatprep.subr.mxu0 0.0
    %2097 = vmatpush1.msra.mxu0 0.0
    %2098 = vmatprep.subr.mxu0 0.0
    %2099 = vmatpush1.msra.mxu0 0.0
    %2100 = vmatprep.subr.mxu0 0.0
    %2101 = vmatpush1.msra.mxu0 0.0
    %2102 = vmatprep.mubr.f32.mxu0 0.0
    %2103 = vmatmul.mubr.f32.gmra.mrb[0].mxu0 0.0
    %v2104 = vpop.f32.mrb[0].mxu0
    %v2105 = vadd.f32 0.0, %v2104
    %v2106 = vpop.f32.mrb[0].mxu0
    %v2107 = vadd.f32 0.0, %v2106
    %2108 = vdwg.mxu0
    %2109 = vmatprep.subr.mxu0 0.0
    %2110 = vmatpush1.msra.mxu0 %v1748
    %2111 = vmatprep.subr.mxu0 0.0
    %2112 = vmatpush1.msra.mxu0 %v1751
    %2113 = vmatprep.subr.mxu0 0.0
    %2114 = vmatpush1.msra.mxu0 %v1754
    %2115 = vmatprep.subr.mxu0 0.0
    %2116 = vmatpush1.msra.mxu0 %v1757
    %2117 = vmatprep.subr.mxu0 0.0
    %2118 = vmatpush1.msra.mxu0 %v1760
    %2119 = vmatprep.subr.mxu0 0.0
    %2120 = vmatpush1.msra.mxu0 %v1763
    %2121 = vmatprep.subr.mxu0 0.0
    %2122 = vmatpush1.msra.mxu0 %v1766
    %2123 = vmatprep.subr.mxu0 0.0
    %2124 = vmatpush1.msra.mxu0 %v1769
    %2125 = vmatprep.subr.mxu0 0.0
    %2126 = vmatpush1.msra.mxu0 %v1772
    %2127 = vmatprep.subr.mxu0 0.0
    %2128 = vmatpush1.msra.mxu0 %v1775
    %2129 = vmatprep.subr.mxu0 0.0
    %2130 = vmatpush1.msra.mxu0 %v1778
    %2131 = vmatprep.subr.mxu0 0.0
    %2132 = vmatpush1.msra.mxu0 %v1781
    %2133 = vmatprep.subr.mxu0 0.0
    %2134 = vmatpush1.msra.mxu0 %v1784
    %2135 = vmatprep.subr.mxu0 0.0
    %2136 = vmatpush1.msra.mxu0 %v1787
    %2137 = vmatprep.subr.mxu0 0.0
    %2138 = vmatpush1.msra.mxu0 %v1790
    %2139 = vmatprep.subr.mxu0 0.0
    %2140 = vmatpush1.msra.mxu0 %v1793
    %2141 = vmatprep.subr.mxu0 0.0
    %2142 = vmatpush1.msra.mxu0 0.0
    %2143 = vmatprep.subr.mxu0 0.0
    %2144 = vmatpush1.msra.mxu0 0.0
    %2145 = vmatprep.subr.mxu0 0.0
    %2146 = vmatpush1.msra.mxu0 0.0
    %2147 = vmatprep.subr.mxu0 0.0
    %2148 = vmatpush1.msra.mxu0 0.0
    %2149 = vmatprep.subr.mxu0 0.0
    %2150 = vmatpush1.msra.mxu0 0.0
    %2151 = vmatprep.subr.mxu0 0.0
    %2152 = vmatpush1.msra.mxu0 0.0
    %2153 = vmatprep.subr.mxu0 0.0
    %2154 = vmatpush1.msra.mxu0 0.0
    %2155 = vmatprep.subr.mxu0 0.0
    %2156 = vmatpush1.msra.mxu0 0.0
    %2157 = vmatprep.subr.mxu0 0.0
    %2158 = vmatpush1.msra.mxu0 0.0
    %2159 = vmatprep.subr.mxu0 0.0
    %2160 = vmatpush1.msra.mxu0 0.0
    %2161 = vmatprep.subr.mxu0 0.0
    %2162 = vmatpush1.msra.mxu0 0.0
    %2163 = vmatprep.subr.mxu0 0.0
    %2164 = vmatpush1.msra.mxu0 0.0
    %2165 = vmatprep.subr.mxu0 0.0
    %2166 = vmatpush1.msra.mxu0 0.0
    %2167 = vmatprep.subr.mxu0 0.0
    %2168 = vmatpush1.msra.mxu0 0.0
    %2169 = vmatprep.subr.mxu0 0.0
    %2170 = vmatpush1.msra.mxu0 0.0
    %2171 = vmatprep.subr.mxu0 0.0
    %2172 = vmatpush1.msra.mxu0 0.0
    %2173 = vmatprep.mubr.f32.mxu0 0.0
    %2174 = vmatmul.mubr.f32.gmra.mrb[0].mxu0 0.0
    %v2175 = vpop.f32.mrb[0].mxu0
    %v2176 = vadd.f32 0.0, %v2175
    %v2177 = vpop.f32.mrb[0].mxu0
    %2178 = vdwg.mxu0
    %v2179 = vadd.f32 %v1887, %v2105
    %v2180 = vadd.f32 %v1889, %v2107
    %v2181 = vxor.u32 %v2179, 2147483648
    %v2182 = vxor.u32 %v2180, 2147483648
    %v2183 = vmul.f32 %v2181, 1.442695
    %v2184 = vpow.pop %v2183
    %v2185 = vmul.f32 %v2182, 1.442695
    %v2186 = vpow.pop %v2185
    %v2187 = vadd.f32 %v2184, 1.0
    %v2188 = vadd.f32 %v2186, 1.0
    %v2189 = vrcp.pop %v2187
    %v2190 = vmul.f32 1.0, %v2189
    %v2191 = vrcp.pop %v2188
    %v2192 = vmul.f32 1.0, %v2191
    %v2193 = vadd.f32 %v2176, %v1802
    %v2194 = vmul.f32 %v2190, %v2193
    %v2195 = vadd.f32 %v2000, %v2194
    %v2196 = vtanh.pop %v2195
    %v2197 = vsub.f32 0.0, %v2196
    %v2198 = vmul.f32 %v2192, %v2197
    %v2199 = vadd.f32 %v2196, %v2198
    %2200 = vmatprep.subr.mxu0 %v1747
    %2201 = vmatpush1.msra.mxu0 %v1746
    %2202 = vmatprep.subr.mxu0 %v1750
    %2203 = vmatpush1.msra.mxu0 %v1749
    %2204 = vmatprep.subr.mxu0 %v1753
    %2205 = vmatpush1.msra.mxu0 %v1752
    %2206 = vmatprep.subr.mxu0 %v1756
    %2207 = vmatpush1.msra.mxu0 %v1755
    %2208 = vmatprep.subr.mxu0 %v1759
    %2209 = vmatpush1.msra.mxu0 %v1758
    %2210 = vmatprep.subr.mxu0 %v1762
    %2211 = vmatpush1.msra.mxu0 %v1761
    %2212 = vmatprep.subr.mxu0 %v1765
    %2213 = vmatpush1.msra.mxu0 %v1764
    %2214 = vmatprep.subr.mxu0 %v1768
    %2215 = vmatpush1.msra.mxu0 %v1767
    %2216 = vmatprep.subr.mxu0 %v1771
    %2217 = vmatpush1.msra.mxu0 %v1770
    %2218 = vmatprep.subr.mxu0 %v1774
    %2219 = vmatpush1.msra.mxu0 %v1773
    %2220 = vmatprep.subr.mxu0 %v1777
    %2221 = vmatpush1.msra.mxu0 %v1776
    %2222 = vmatprep.subr.mxu0 %v1780
    %2223 = vmatpush1.msra.mxu0 %v1779
    %2224 = vmatprep.subr.mxu0 %v1783
    %2225 = vmatpush1.msra.mxu0 %v1782
    %2226 = vmatprep.subr.mxu0 %v1786
    %2227 = vmatpush1.msra.mxu0 %v1785
    %2228 = vmatprep.subr.mxu0 %v1789
    %2229 = vmatpush1.msra.mxu0 %v1788
    %2230 = vmatprep.subr.mxu0 %v1792
    %2231 = vmatpush1.msra.mxu0 %v1791
    %2232 = vmatprep.subr.mxu0 0.0
    %2233 = vmatpush1.msra.mxu0 0.0
    %2234 = vmatprep.subr.mxu0 0.0
    %2235 = vmatpush1.msra.mxu0 0.0
    %2236 = vmatprep.subr.mxu0 0.0
    %2237 = vmatpush1.msra.mxu0 0.0
    %2238 = vmatprep.subr.mxu0 0.0
    %2239 = vmatpush1.msra.mxu0 0.0
    %2240 = vmatprep.subr.mxu0 0.0
    %2241 = vmatpush1.msra.mxu0 0.0
    %2242 = vmatprep.subr.mxu0 0.0
    %2243 = vmatpush1.msra.mxu0 0.0
    %2244 = vmatprep.subr.mxu0 0.0
    %2245 = vmatpush1.msra.mxu0 0.0
    %2246 = vmatprep.subr.mxu0 0.0
    %2247 = vmatpush1.msra.mxu0 0.0
    %2248 = vmatprep.subr.mxu0 0.0
    %2249 = vmatpush1.msra.mxu0 0.0
    %2250 = vmatprep.subr.mxu0 0.0
    %2251 = vmatpush1.msra.mxu0 0.0
    %2252 = vmatprep.subr.mxu0 0.0
    %2253 = vmatpush1.msra.mxu0 0.0
    %2254 = vmatprep.subr.mxu0 0.0
    %2255 = vmatpush1.msra.mxu0 0.0
    %2256 = vmatprep.subr.mxu0 0.0
    %2257 = vmatpush1.msra.mxu0 0.0
    %2258 = vmatprep.subr.mxu0 0.0
    %2259 = vmatpush1.msra.mxu0 0.0
    %2260 = vmatprep.subr.mxu0 0.0
    %2261 = vmatpush1.msra.mxu0 0.0
    %2262 = vmatprep.subr.mxu0 0.0
    %2263 = vmatpush1.msra.mxu0 0.0
    %2264 = vmatprep.mubr.f32.mxu0 0.0
    %2265 = vmatmul.mubr.f32.gmra.mrb[0].mxu0 %v2199
    %v2266 = vpop.f32.mrb[0].mxu0
    %v2267 = vadd.f32 0.0, %v2266
    %v2268 = vpop.f32.mrb[0].mxu0
    %v2269 = vadd.f32 0.0, %v2268
    %2270 = vdwg.mxu0
    %2271 = vmatprep.subr.mxu0 0.0
    %2272 = vmatpush1.msra.mxu0 %v1748
    %2273 = vmatprep.subr.mxu0 0.0
    %2274 = vmatpush1.msra.mxu0 %v1751
    %2275 = vmatprep.subr.mxu0 0.0
    %2276 = vmatpush1.msra.mxu0 %v1754
    %2277 = vmatprep.subr.mxu0 0.0
    %2278 = vmatpush1.msra.mxu0 %v1757
    %2279 = vmatprep.subr.mxu0 0.0
    %2280 = vmatpush1.msra.mxu0 %v1760
    %2281 = vmatprep.subr.mxu0 0.0
    %2282 = vmatpush1.msra.mxu0 %v1763
    %2283 = vmatprep.subr.mxu0 0.0
    %2284 = vmatpush1.msra.mxu0 %v1766
    %2285 = vmatprep.subr.mxu0 0.0
    %2286 = vmatpush1.msra.mxu0 %v1769
    %2287 = vmatprep.subr.mxu0 0.0
    %2288 = vmatpush1.msra.mxu0 %v1772
    %2289 = vmatprep.subr.mxu0 0.0
    %2290 = vmatpush1.msra.mxu0 %v1775
    %2291 = vmatprep.subr.mxu0 0.0
    %2292 = vmatpush1.msra.mxu0 %v1778
    %2293 = vmatprep.subr.mxu0 0.0
    %2294 = vmatpush1.msra.mxu0 %v1781
    %2295 = vmatprep.subr.mxu0 0.0
    %2296 = vmatpush1.msra.mxu0 %v1784
    %2297 = vmatprep.subr.mxu0 0.0
    %2298 = vmatpush1.msra.mxu0 %v1787
    %2299 = vmatprep.subr.mxu0 0.0
    %2300 = vmatpush1.msra.mxu0 %v1790
    %2301 = vmatprep.subr.mxu0 0.0
    %2302 = vmatpush1.msra.mxu0 %v1793
    %2303 = vmatprep.subr.mxu0 0.0
    %2304 = vmatpush1.msra.mxu0 0.0
    %2305 = vmatprep.subr.mxu0 0.0
    %2306 = vmatpush1.msra.mxu0 0.0
    %2307 = vmatprep.subr.mxu0 0.0
    %2308 = vmatpush1.msra.mxu0 0.0
    %2309 = vmatprep.subr.mxu0 0.0
    %2310 = vmatpush1.msra.mxu0 0.0
    %2311 = vmatprep.subr.mxu0 0.0
    %2312 = vmatpush1.msra.mxu0 0.0
    %2313 = vmatprep.subr.mxu0 0.0
    %2314 = vmatpush1.msra.mxu0 0.0
    %2315 = vmatprep.subr.mxu0 0.0
    %2316 = vmatpush1.msra.mxu0 0.0
    %2317 = vmatprep.subr.mxu0 0.0
    %2318 = vmatpush1.msra.mxu0 0.0
    %2319 = vmatprep.subr.mxu0 0.0
    %2320 = vmatpush1.msra.mxu0 0.0
    %2321 = vmatprep.subr.mxu0 0.0
    %2322 = vmatpush1.msra.mxu0 0.0
    %2323 = vmatprep.subr.mxu0 0.0
    %2324 = vmatpush1.msra.mxu0 0.0
    %2325 = vmatprep.subr.mxu0 0.0
    %2326 = vmatpush1.msra.mxu0 0.0
    %2327 = vmatprep.subr.mxu0 0.0
    %2328 = vmatpush1.msra.mxu0 0.0
    %2329 = vmatprep.subr.mxu0 0.0
    %2330 = vmatpush1.msra.mxu0 0.0
    %2331 = vmatprep.subr.mxu0 0.0
    %2332 = vmatpush1.msra.mxu0 0.0
    %2333 = vmatprep.subr.mxu0 0.0
    %2334 = vmatpush1.msra.mxu0 0.0
    %2335 = vmatprep.mubr.f32.mxu0 0.0
    %2336 = vmatmul.mubr.f32.gmra.mrb[0].mxu0 %v2199
    %v2337 = vpop.f32.mrb[0].mxu0
    %v2338 = vadd.f32 0.0, %v2337
    %v2339 = vpop.f32.mrb[0].mxu0
    %2340 = vdwg.mxu0
    %v2341 = vadd.f32 %v1893, %v2267
    %v2342 = vadd.f32 %v1895, %v2269
    %v2343 = vxor.u32 %v2341, 2147483648
    %v2344 = vxor.u32 %v2342, 2147483648
    %v2345 = vmul.f32 %v2343, 1.442695
    %v2346 = vpow.pop %v2345
    %v2347 = vmul.f32 %v2344, 1.442695
    %v2348 = vpow.pop %v2347
    %v2349 = vadd.f32 %v2346, 1.0
    %v2350 = vadd.f32 %v2348, 1.0
    %v2351 = vrcp.pop %v2349
    %v2352 = vmul.f32 1.0, %v2351
    %v2353 = vrcp.pop %v2350
    %v2354 = vmul.f32 1.0, %v2353
    %v2355 = vadd.f32 %v2338, %v1802
    %v2356 = vmul.f32 %v2352, %v2355
    %v2357 = vadd.f32 %v2005, %v2356
    %v2358 = vtanh.pop %v2357
    %v2359 = vsub.f32 %v2199, %v2358
    %v2360 = vmul.f32 %v2354, %v2359
    %v2361 = vadd.f32 %v2358, %v2360
    %2362 = vmatprep.subr.mxu0 %v1747
    %2363 = vmatpush1.msra.mxu0 %v1746
    %2364 = vmatprep.subr.mxu0 %v1750
    %2365 = vmatpush1.msra.mxu0 %v1749
    %2366 = vmatprep.subr.mxu0 %v1753
    %2367 = vmatpush1.msra.mxu0 %v1752
    %2368 = vmatprep.subr.mxu0 %v1756
    %2369 = vmatpush1.msra.mxu0 %v1755
    %2370 = vmatprep.subr.mxu0 %v1759
    %2371 = vmatpush1.msra.mxu0 %v1758
    %2372 = vmatprep.subr.mxu0 %v1762
    %2373 = vmatpush1.msra.mxu0 %v1761
    %2374 = vmatprep.subr.mxu0 %v1765
    %2375 = vmatpush1.msra.mxu0 %v1764
    %2376 = vmatprep.subr.mxu0 %v1768
    %2377 = vmatpush1.msra.mxu0 %v1767
    %2378 = vmatprep.subr.mxu0 %v1771
    %2379 = vmatpush1.msra.mxu0 %v1770
    %2380 = vmatprep.subr.mxu0 %v1774
    %2381 = vmatpush1.msra.mxu0 %v1773
    %2382 = vmatprep.subr.mxu0 %v1777
    %2383 = vmatpush1.msra.mxu0 %v1776
    %2384 = vmatprep.subr.mxu0 %v1780
    %2385 = vmatpush1.msra.mxu0 %v1779
    %2386 = vmatprep.subr.mxu0 %v1783
    %2387 = vmatpush1.msra.mxu0 %v1782
    %2388 = vmatprep.subr.mxu0 %v1786
    %2389 = vmatpush1.msra.mxu0 %v1785
    %2390 = vmatprep.subr.mxu0 %v1789
    %2391 = vmatpush1.msra.mxu0 %v1788
    %2392 = vmatprep.subr.mxu0 %v1792
    %2393 = vmatpush1.msra.mxu0 %v1791
    %2394 = vmatprep.subr.mxu0 0.0
    %2395 = vmatpush1.msra.mxu0 0.0
    %2396 = vmatprep.subr.mxu0 0.0
    %2397 = vmatpush1.msra.mxu0 0.0
    %2398 = vmatprep.subr.mxu0 0.0
    %2399 = vmatpush1.msra.mxu0 0.0
    %2400 = vmatprep.subr.mxu0 0.0
    %2401 = vmatpush1.msra.mxu0 0.0
    %2402 = vmatprep.subr.mxu0 0.0
    %2403 = vmatpush1.msra.mxu0 0.0
    %2404 = vmatprep.subr.mxu0 0.0
    %2405 = vmatpush1.msra.mxu0 0.0
    %2406 = vmatprep.subr.mxu0 0.0
    %2407 = vmatpush1.msra.mxu0 0.0
    %2408 = vmatprep.subr.mxu0 0.0
    %2409 = vmatpush1.msra.mxu0 0.0
    %2410 = vmatprep.subr.mxu0 0.0
    %2411 = vmatpush1.msra.mxu0 0.0
    %2412 = vmatprep.subr.mxu0 0.0
    %2413 = vmatpush1.msra.mxu0 0.0
    %2414 = vmatprep.subr.mxu0 0.0
    %2415 = vmatpush1.msra.mxu0 0.0
    %2416 = vmatprep.subr.mxu0 0.0
    %2417 = vmatpush1.msra.mxu0 0.0
    %2418 = vmatprep.subr.mxu0 0.0
    %2419 = vmatpush1.msra.mxu0 0.0
    %2420 = vmatprep.subr.mxu0 0.0
    %2421 = vmatpush1.msra.mxu0 0.0
    %2422 = vmatprep.subr.mxu0 0.0
    %2423 = vmatpush1.msra.mxu0 0.0
    %2424 = vmatprep.subr.mxu0 0.0
    %2425 = vmatpush1.msra.mxu0 0.0
    %2426 = vmatprep.mubr.f32.mxu0 0.0
    %2427 = vmatmul.mubr.f32.gmra.mrb[0].mxu0 %v2361
    %v2428 = vpop.f32.mrb[0].mxu0
    %v2429 = vadd.f32 0.0, %v2428
    %v2430 = vpop.f32.mrb[0].mxu0
    %v2431 = vadd.f32 0.0, %v2430
    %2432 = vdwg.mxu0
    %2433 = vmatprep.subr.mxu0 0.0
    %2434 = vmatpush1.msra.mxu0 %v1748
    %2435 = vmatprep.subr.mxu0 0.0
    %2436 = vmatpush1.msra.mxu0 %v1751
    %2437 = vmatprep.subr.mxu0 0.0
    %2438 = vmatpush1.msra.mxu0 %v1754
    %2439 = vmatprep.subr.mxu0 0.0
    %2440 = vmatpush1.msra.mxu0 %v1757
    %2441 = vmatprep.subr.mxu0 0.0
    %2442 = vmatpush1.msra.mxu0 %v1760
    %2443 = vmatprep.subr.mxu0 0.0
    %2444 = vmatpush1.msra.mxu0 %v1763
    %2445 = vmatprep.subr.mxu0 0.0
    %2446 = vmatpush1.msra.mxu0 %v1766
    %2447 = vmatprep.subr.mxu0 0.0
    %2448 = vmatpush1.msra.mxu0 %v1769
    %2449 = vmatprep.subr.mxu0 0.0
    %2450 = vmatpush1.msra.mxu0 %v1772
    %2451 = vmatprep.subr.mxu0 0.0
    %2452 = vmatpush1.msra.mxu0 %v1775
    %2453 = vmatprep.subr.mxu0 0.0
    %2454 = vmatpush1.msra.mxu0 %v1778
    %2455 = vmatprep.subr.mxu0 0.0
    %2456 = vmatpush1.msra.mxu0 %v1781
    %2457 = vmatprep.subr.mxu0 0.0
    %2458 = vmatpush1.msra.mxu0 %v1784
    %2459 = vmatprep.subr.mxu0 0.0
    %2460 = vmatpush1.msra.mxu0 %v1787
    %2461 = vmatprep.subr.mxu0 0.0
    %2462 = vmatpush1.msra.mxu0 %v1790
    %2463 = vmatprep.subr.mxu0 0.0
    %2464 = vmatpush1.msra.mxu0 %v1793
    %2465 = vmatprep.subr.mxu0 0.0
    %2466 = vmatpush1.msra.mxu0 0.0
    %2467 = vmatprep.subr.mxu0 0.0
    %2468 = vmatpush1.msra.mxu0 0.0
    %2469 = vmatprep.subr.mxu0 0.0
    %2470 = vmatpush1.msra.mxu0 0.0
    %2471 = vmatprep.subr.mxu0 0.0
    %2472 = vmatpush1.msra.mxu0 0.0
    %2473 = vmatprep.subr.mxu0 0.0
    %2474 = vmatpush1.msra.mxu0 0.0
    %2475 = vmatprep.subr.mxu0 0.0
    %2476 = vmatpush1.msra.mxu0 0.0
    %2477 = vmatprep.subr.mxu0 0.0
    %2478 = vmatpush1.msra.mxu0 0.0
    %2479 = vmatprep.subr.mxu0 0.0
    %2480 = vmatpush1.msra.mxu0 0.0
    %2481 = vmatprep.subr.mxu0 0.0
    %2482 = vmatpush1.msra.mxu0 0.0
    %2483 = vmatprep.subr.mxu0 0.0
    %2484 = vmatpush1.msra.mxu0 0.0
    %2485 = vmatprep.subr.mxu0 0.0
    %2486 = vmatpush1.msra.mxu0 0.0
    %2487 = vmatprep.subr.mxu0 0.0
    %2488 = vmatpush1.msra.mxu0 0.0
    %2489 = vmatprep.subr.mxu0 0.0
    %2490 = vmatpush1.msra.mxu0 0.0
    %2491 = vmatprep.subr.mxu0 0.0
    %2492 = vmatpush1.msra.mxu0 0.0
    %2493 = vmatprep.subr.mxu0 0.0
    %2494 = vmatpush1.msra.mxu0 0.0
    %2495 = vmatprep.subr.mxu0 0.0
    %2496 = vmatpush1.msra.mxu0 0.0
    %2497 = vmatprep.mubr.f32.mxu0 0.0
    %2498 = vmatmul.mubr.f32.gmra.mrb[0].mxu0 %v2361
    %v2499 = vpop.f32.mrb[0].mxu0
    %v2500 = vadd.f32 0.0, %v2499
    %v2501 = vpop.f32.mrb[0].mxu0
    %2502 = vdwg.mxu0
    %v2503 = vadd.f32 %v1899, %v2429
    %v2504 = vadd.f32 %v1901, %v2431
    %v2505 = vxor.u32 %v2503, 2147483648
    %v2506 = vxor.u32 %v2504, 2147483648
    %v2507 = vmul.f32 %v2505, 1.442695
    %v2508 = vpow.pop %v2507
    %v2509 = vmul.f32 %v2506, 1.442695
    %v2510 = vpow.pop %v2509
    %v2511 = vadd.f32 %v2508, 1.0
    %v2512 = vadd.f32 %v2510, 1.0
    %v2513 = vrcp.pop %v2511
    %v2514 = vmul.f32 1.0, %v2513
    %v2515 = vrcp.pop %v2512
    %v2516 = vmul.f32 1.0, %v2515
    %v2517 = vadd.f32 %v2500, %v1802
    %v2518 = vmul.f32 %v2514, %v2517
    %v2519 = vadd.f32 %v2010, %v2518
    %v2520 = vtanh.pop %v2519
    %v2521 = vsub.f32 %v2361, %v2520
    %v2522 = vmul.f32 %v2516, %v2521
    %v2523 = vadd.f32 %v2520, %v2522
    %2524 = vmatprep.subr.mxu0 %v1747
    %2525 = vmatpush1.msra.mxu0 %v1746
    %2526 = vmatprep.subr.mxu0 %v1750
    %2527 = vmatpush1.msra.mxu0 %v1749
    %2528 = vmatprep.subr.mxu0 %v1753
    %2529 = vmatpush1.msra.mxu0 %v1752
    %2530 = vmatprep.subr.mxu0 %v1756
    %2531 = vmatpush1.msra.mxu0 %v1755
    %2532 = vmatprep.subr.mxu0 %v1759
    %2533 = vmatpush1.msra.mxu0 %v1758
    %2534 = vmatprep.subr.mxu0 %v1762
    %2535 = vmatpush1.msra.mxu0 %v1761
    %2536 = vmatprep.subr.mxu0 %v1765
    %2537 = vmatpush1.msra.mxu0 %v1764
    %2538 = vmatprep.subr.mxu0 %v1768
    %2539 = vmatpush1.msra.mxu0 %v1767
    %2540 = vmatprep.subr.mxu0 %v1771
    %2541 = vmatpush1.msra.mxu0 %v1770
    %2542 = vmatprep.subr.mxu0 %v1774
    %2543 = vmatpush1.msra.mxu0 %v1773
    %2544 = vmatprep.subr.mxu0 %v1777
    %2545 = vmatpush1.msra.mxu0 %v1776
    %2546 = vmatprep.subr.mxu0 %v1780
    %2547 = vmatpush1.msra.mxu0 %v1779
    %2548 = vmatprep.subr.mxu0 %v1783
    %2549 = vmatpush1.msra.mxu0 %v1782
    %2550 = vmatprep.subr.mxu0 %v1786
    %2551 = vmatpush1.msra.mxu0 %v1785
    %2552 = vmatprep.subr.mxu0 %v1789
    %2553 = vmatpush1.msra.mxu0 %v1788
    %2554 = vmatprep.subr.mxu0 %v1792
    %2555 = vmatpush1.msra.mxu0 %v1791
    %2556 = vmatprep.subr.mxu0 0.0
    %2557 = vmatpush1.msra.mxu0 0.0
    %2558 = vmatprep.subr.mxu0 0.0
    %2559 = vmatpush1.msra.mxu0 0.0
    %2560 = vmatprep.subr.mxu0 0.0
    %2561 = vmatpush1.msra.mxu0 0.0
    %2562 = vmatprep.subr.mxu0 0.0
    %2563 = vmatpush1.msra.mxu0 0.0
    %2564 = vmatprep.subr.mxu0 0.0
    %2565 = vmatpush1.msra.mxu0 0.0
    %2566 = vmatprep.subr.mxu0 0.0
    %2567 = vmatpush1.msra.mxu0 0.0
    %2568 = vmatprep.subr.mxu0 0.0
    %2569 = vmatpush1.msra.mxu0 0.0
    %2570 = vmatprep.subr.mxu0 0.0
    %2571 = vmatpush1.msra.mxu0 0.0
    %2572 = vmatprep.subr.mxu0 0.0
    %2573 = vmatpush1.msra.mxu0 0.0
    %2574 = vmatprep.subr.mxu0 0.0
    %2575 = vmatpush1.msra.mxu0 0.0
    %2576 = vmatprep.subr.mxu0 0.0
    %2577 = vmatpush1.msra.mxu0 0.0
    %2578 = vmatprep.subr.mxu0 0.0
    %2579 = vmatpush1.msra.mxu0 0.0
    %2580 = vmatprep.subr.mxu0 0.0
    %2581 = vmatpush1.msra.mxu0 0.0
    %2582 = vmatprep.subr.mxu0 0.0
    %2583 = vmatpush1.msra.mxu0 0.0
    %2584 = vmatprep.subr.mxu0 0.0
    %2585 = vmatpush1.msra.mxu0 0.0
    %2586 = vmatprep.subr.mxu0 0.0
    %2587 = vmatpush1.msra.mxu0 0.0
    %2588 = vmatprep.mubr.f32.mxu0 0.0
    %2589 = vmatmul.mubr.f32.gmra.mrb[0].mxu0 %v2523
    %v2590 = vpop.f32.mrb[0].mxu0
    %v2591 = vadd.f32 0.0, %v2590
    %v2592 = vpop.f32.mrb[0].mxu0
    %v2593 = vadd.f32 0.0, %v2592
    %2594 = vdwg.mxu0
    %2595 = vmatprep.subr.mxu0 0.0
    %2596 = vmatpush1.msra.mxu0 %v1748
    %2597 = vmatprep.subr.mxu0 0.0
    %2598 = vmatpush1.msra.mxu0 %v1751
    %2599 = vmatprep.subr.mxu0 0.0
    %2600 = vmatpush1.msra.mxu0 %v1754
    %2601 = vmatprep.subr.mxu0 0.0
    %2602 = vmatpush1.msra.mxu0 %v1757
    %2603 = vmatprep.subr.mxu0 0.0
    %2604 = vmatpush1.msra.mxu0 %v1760
    %2605 = vmatprep.subr.mxu0 0.0
    %2606 = vmatpush1.msra.mxu0 %v1763
    %2607 = vmatprep.subr.mxu0 0.0
    %2608 = vmatpush1.msra.mxu0 %v1766
    %2609 = vmatprep.subr.mxu0 0.0
    %2610 = vmatpush1.msra.mxu0 %v1769
    %2611 = vmatprep.subr.mxu0 0.0
    %2612 = vmatpush1.msra.mxu0 %v1772
    %2613 = vmatprep.subr.mxu0 0.0
    %2614 = vmatpush1.msra.mxu0 %v1775
    %2615 = vmatprep.subr.mxu0 0.0
    %2616 = vmatpush1.msra.mxu0 %v1778
    %2617 = vmatprep.subr.mxu0 0.0
    %2618 = vmatpush1.msra.mxu0 %v1781
    %2619 = vmatprep.subr.mxu0 0.0
    %2620 = vmatpush1.msra.mxu0 %v1784
    %2621 = vmatprep.subr.mxu0 0.0
    %2622 = vmatpush1.msra.mxu0 %v1787
    %2623 = vmatprep.subr.mxu0 0.0
    %2624 = vmatpush1.msra.mxu0 %v1790
    %2625 = vmatprep.subr.mxu0 0.0
    %2626 = vmatpush1.msra.mxu0 %v1793
    %2627 = vmatprep.subr.mxu0 0.0
    %2628 = vmatpush1.msra.mxu0 0.0
    %2629 = vmatprep.subr.mxu0 0.0
    %2630 = vmatpush1.msra.mxu0 0.0
    %2631 = vmatprep.subr.mxu0 0.0
    %2632 = vmatpush1.msra.mxu0 0.0
    %2633 = vmatprep.subr.mxu0 0.0
    %2634 = vmatpush1.msra.mxu0 0.0
    %2635 = vmatprep.subr.mxu0 0.0
    %2636 = vmatpush1.msra.mxu0 0.0
    %2637 = vmatprep.subr.mxu0 0.0
    %2638 = vmatpush1.msra.mxu0 0.0
    %2639 = vmatprep.subr.mxu0 0.0
    %2640 = vmatpush1.msra.mxu0 0.0
    %2641 = vmatprep.subr.mxu0 0.0
    %2642 = vmatpush1.msra.mxu0 0.0
    %2643 = vmatprep.subr.mxu0 0.0
    %2644 = vmatpush1.msra.mxu0 0.0
    %2645 = vmatprep.subr.mxu0 0.0
    %2646 = vmatpush1.msra.mxu0 0.0
    %2647 = vmatprep.subr.mxu0 0.0
    %2648 = vmatpush1.msra.mxu0 0.0
    %2649 = vmatprep.subr.mxu0 0.0
    %2650 = vmatpush1.msra.mxu0 0.0
    %2651 = vmatprep.subr.mxu0 0.0
    %2652 = vmatpush1.msra.mxu0 0.0
    %2653 = vmatprep.subr.mxu0 0.0
    %2654 = vmatpush1.msra.mxu0 0.0
    %2655 = vmatprep.subr.mxu0 0.0
    %2656 = vmatpush1.msra.mxu0 0.0
    %2657 = vmatprep.subr.mxu0 0.0
    %2658 = vmatpush1.msra.mxu0 0.0
    %2659 = vmatprep.mubr.f32.mxu0 0.0
    %2660 = vmatmul.mubr.f32.gmra.mrb[0].mxu0 %v2523
    %v2661 = vpop.f32.mrb[0].mxu0
    %v2662 = vadd.f32 0.0, %v2661
    %v2663 = vpop.f32.mrb[0].mxu0
    %2664 = vdwg.mxu0
    %v2665 = vadd.f32 %v1905, %v2591
    %v2666 = vadd.f32 %v1907, %v2593
    %v2667 = vxor.u32 %v2665, 2147483648
    %v2668 = vxor.u32 %v2666, 2147483648
    %v2669 = vmul.f32 %v2667, 1.442695
    %v2670 = vpow.pop %v2669
    %v2671 = vmul.f32 %v2668, 1.442695
    %v2672 = vpow.pop %v2671
    %v2673 = vadd.f32 %v2670, 1.0
    %v2674 = vadd.f32 %v2672, 1.0
    %v2675 = vrcp.pop %v2673
    %v2676 = vmul.f32 1.0, %v2675
    %v2677 = vrcp.pop %v2674
    %v2678 = vmul.f32 1.0, %v2677
    %v2679 = vadd.f32 %v2662, %v1802
    %v2680 = vmul.f32 %v2676, %v2679
    %v2681 = vadd.f32 %v2015, %v2680
    %v2682 = vtanh.pop %v2681
    %v2683 = vsub.f32 %v2523, %v2682
    %v2684 = vmul.f32 %v2678, %v2683
    %v2685 = vadd.f32 %v2682, %v2684
    %2686 = vmatprep.subr.mxu0 %v1747
    %2687 = vmatpush1.msra.mxu0 %v1746
    %2688 = vmatprep.subr.mxu0 %v1750
    %2689 = vmatpush1.msra.mxu0 %v1749
    %2690 = vmatprep.subr.mxu0 %v1753
    %2691 = vmatpush1.msra.mxu0 %v1752
    %2692 = vmatprep.subr.mxu0 %v1756
    %2693 = vmatpush1.msra.mxu0 %v1755
    %2694 = vmatprep.subr.mxu0 %v1759
    %2695 = vmatpush1.msra.mxu0 %v1758
    %2696 = vmatprep.subr.mxu0 %v1762
    %2697 = vmatpush1.msra.mxu0 %v1761
    %2698 = vmatprep.subr.mxu0 %v1765
    %2699 = vmatpush1.msra.mxu0 %v1764
    %2700 = vmatprep.subr.mxu0 %v1768
    %2701 = vmatpush1.msra.mxu0 %v1767
    %2702 = vmatprep.subr.mxu0 %v1771
    %2703 = vmatpush1.msra.mxu0 %v1770
    %2704 = vmatprep.subr.mxu0 %v1774
    %2705 = vmatpush1.msra.mxu0 %v1773
    %2706 = vmatprep.subr.mxu0 %v1777
    %2707 = vmatpush1.msra.mxu0 %v1776
    %2708 = vmatprep.subr.mxu0 %v1780
    %2709 = vmatpush1.msra.mxu0 %v1779
    %2710 = vmatprep.subr.mxu0 %v1783
    %2711 = vmatpush1.msra.mxu0 %v1782
    %2712 = vmatprep.subr.mxu0 %v1786
    %2713 = vmatpush1.msra.mxu0 %v1785
    %2714 = vmatprep.subr.mxu0 %v1789
    %2715 = vmatpush1.msra.mxu0 %v1788
    %2716 = vmatprep.subr.mxu0 %v1792
    %2717 = vmatpush1.msra.mxu0 %v1791
    %2718 = vmatprep.subr.mxu0 0.0
    %2719 = vmatpush1.msra.mxu0 0.0
    %2720 = vmatprep.subr.mxu0 0.0
    %2721 = vmatpush1.msra.mxu0 0.0
    %2722 = vmatprep.subr.mxu0 0.0
    %2723 = vmatpush1.msra.mxu0 0.0
    %2724 = vmatprep.subr.mxu0 0.0
    %2725 = vmatpush1.msra.mxu0 0.0
    %2726 = vmatprep.subr.mxu0 0.0
    %2727 = vmatpush1.msra.mxu0 0.0
    %2728 = vmatprep.subr.mxu0 0.0
    %2729 = vmatpush1.msra.mxu0 0.0
    %2730 = vmatprep.subr.mxu0 0.0
    %2731 = vmatpush1.msra.mxu0 0.0
    %2732 = vmatprep.subr.mxu0 0.0
    %2733 = vmatpush1.msra.mxu0 0.0
    %2734 = vmatprep.subr.mxu0 0.0
    %2735 = vmatpush1.msra.mxu0 0.0
    %2736 = vmatprep.subr.mxu0 0.0
    %2737 = vmatpush1.msra.mxu0 0.0
    %2738 = vmatprep.subr.mxu0 0.0
    %2739 = vmatpush1.msra.mxu0 0.0
    %2740 = vmatprep.subr.mxu0 0.0
    %2741 = vmatpush1.msra.mxu0 0.0
    %2742 = vmatprep.subr.mxu0 0.0
    %2743 = vmatpush1.msra.mxu0 0.0
    %2744 = vmatprep.subr.mxu0 0.0
    %2745 = vmatpush1.msra.mxu0 0.0
    %2746 = vmatprep.subr.mxu0 0.0
    %2747 = vmatpush1.msra.mxu0 0.0
    %2748 = vmatprep.subr.mxu0 0.0
    %2749 = vmatpush1.msra.mxu0 0.0
    %2750 = vmatprep.mubr.f32.mxu0 0.0
    %2751 = vmatmul.mubr.f32.gmra.mrb[0].mxu0 %v2685
    %v2752 = vpop.f32.mrb[0].mxu0
    %v2753 = vadd.f32 0.0, %v2752
    %v2754 = vpop.f32.mrb[0].mxu0
    %v2755 = vadd.f32 0.0, %v2754
    %2756 = vdwg.mxu0
    %2757 = vmatprep.subr.mxu0 0.0
    %2758 = vmatpush1.msra.mxu0 %v1748
    %2759 = vmatprep.subr.mxu0 0.0
    %2760 = vmatpush1.msra.mxu0 %v1751
    %2761 = vmatprep.subr.mxu0 0.0
    %2762 = vmatpush1.msra.mxu0 %v1754
    %2763 = vmatprep.subr.mxu0 0.0
    %2764 = vmatpush1.msra.mxu0 %v1757
    %2765 = vmatprep.subr.mxu0 0.0
    %2766 = vmatpush1.msra.mxu0 %v1760
    %2767 = vmatprep.subr.mxu0 0.0
    %2768 = vmatpush1.msra.mxu0 %v1763
    %2769 = vmatprep.subr.mxu0 0.0
    %2770 = vmatpush1.msra.mxu0 %v1766
    %2771 = vmatprep.subr.mxu0 0.0
    %2772 = vmatpush1.msra.mxu0 %v1769
    %2773 = vmatprep.subr.mxu0 0.0
    %2774 = vmatpush1.msra.mxu0 %v1772
    %2775 = vmatprep.subr.mxu0 0.0
    %2776 = vmatpush1.msra.mxu0 %v1775
    %2777 = vmatprep.subr.mxu0 0.0
    %2778 = vmatpush1.msra.mxu0 %v1778
    %2779 = vmatprep.subr.mxu0 0.0
    %2780 = vmatpush1.msra.mxu0 %v1781
    %2781 = vmatprep.subr.mxu0 0.0
    %2782 = vmatpush1.msra.mxu0 %v1784
    %2783 = vmatprep.subr.mxu0 0.0
    %2784 = vmatpush1.msra.mxu0 %v1787
    %2785 = vmatprep.subr.mxu0 0.0
    %2786 = vmatpush1.msra.mxu0 %v1790
    %2787 = vmatprep.subr.mxu0 0.0
    %2788 = vmatpush1.msra.mxu0 %v1793
    %2789 = vmatprep.subr.mxu0 0.0
    %2790 = vmatpush1.msra.mxu0 0.0
    %2791 = vmatprep.subr.mxu0 0.0
    %2792 = vmatpush1.msra.mxu0 0.0
    %2793 = vmatprep.subr.mxu0 0.0
    %2794 = vmatpush1.msra.mxu0 0.0
    %2795 = vmatprep.subr.mxu0 0.0
    %2796 = vmatpush1.msra.mxu0 0.0
    %2797 = vmatprep.subr.mxu0 0.0
    %2798 = vmatpush1.msra.mxu0 0.0
    %2799 = vmatprep.subr.mxu0 0.0
    %2800 = vmatpush1.msra.mxu0 0.0
    %2801 = vmatprep.subr.mxu0 0.0
    %2802 = vmatpush1.msra.mxu0 0.0
    %2803 = vmatprep.subr.mxu0 0.0
    %2804 = vmatpush1.msra.mxu0 0.0
    %2805 = vmatprep.subr.mxu0 0.0
    %2806 = vmatpush1.msra.mxu0 0.0
    %2807 = vmatprep.subr.mxu0 0.0
    %2808 = vmatpush1.msra.mxu0 0.0
    %2809 = vmatprep.subr.mxu0 0.0
    %2810 = vmatpush1.msra.mxu0 0.0
    %2811 = vmatprep.subr.mxu0 0.0
    %2812 = vmatpush1.msra.mxu0 0.0
    %2813 = vmatprep.subr.mxu0 0.0
    %2814 = vmatpush1.msra.mxu0 0.0
    %2815 = vmatprep.subr.mxu0 0.0
    %2816 = vmatpush1.msra.mxu0 0.0
    %2817 = vmatprep.subr.mxu0 0.0
    %2818 = vmatpush1.msra.mxu0 0.0
    %2819 = vmatprep.subr.mxu0 0.0
    %2820 = vmatpush1.msra.mxu0 0.0
    %2821 = vmatprep.mubr.f32.mxu0 0.0
    %2822 = vmatmul.mubr.f32.gmra.mrb[0].mxu0 %v2685
    %v2823 = vpop.f32.mrb[0].mxu0
    %v2824 = vadd.f32 0.0, %v2823
    %v2825 = vpop.f32.mrb[0].mxu0
    %2826 = vdwg.mxu0
    %v2827 = vadd.f32 %v1911, %v2753
    %v2828 = vadd.f32 %v1913, %v2755
    %v2829 = vxor.u32 %v2827, 2147483648
    %v2830 = vxor.u32 %v2828, 2147483648
    %v2831 = vmul.f32 %v2829, 1.442695
    %v2832 = vpow.pop %v2831
    %v2833 = vmul.f32 %v2830, 1.442695
    %v2834 = vpow.pop %v2833
    %v2835 = vadd.f32 %v2832, 1.0
    %v2836 = vadd.f32 %v2834, 1.0
    %v2837 = vrcp.pop %v2835
    %v2838 = vmul.f32 1.0, %v2837
    %v2839 = vrcp.pop %v2836
    %v2840 = vmul.f32 1.0, %v2839
    %v2841 = vadd.f32 %v2824, %v1802
    %v2842 = vmul.f32 %v2838, %v2841
    %v2843 = vadd.f32 %v2020, %v2842
    %v2844 = vtanh.pop %v2843
    %v2845 = vsub.f32 %v2685, %v2844
    %v2846 = vmul.f32 %v2840, %v2845
    %v2847 = vadd.f32 %v2844, %v2846
    %2848 = vmatprep.subr.mxu0 %v1747
    %2849 = vmatpush1.msra.mxu0 %v1746
    %2850 = vmatprep.subr.mxu0 %v1750
    %2851 = vmatpush1.msra.mxu0 %v1749
    %2852 = vmatprep.subr.mxu0 %v1753
    %2853 = vmatpush1.msra.mxu0 %v1752
    %2854 = vmatprep.subr.mxu0 %v1756
    %2855 = vmatpush1.msra.mxu0 %v1755
    %2856 = vmatprep.subr.mxu0 %v1759
    %2857 = vmatpush1.msra.mxu0 %v1758
    %2858 = vmatprep.subr.mxu0 %v1762
    %2859 = vmatpush1.msra.mxu0 %v1761
    %2860 = vmatprep.subr.mxu0 %v1765
    %2861 = vmatpush1.msra.mxu0 %v1764
    %2862 = vmatprep.subr.mxu0 %v1768
    %2863 = vmatpush1.msra.mxu0 %v1767
    %2864 = vmatprep.subr.mxu0 %v1771
    %2865 = vmatpush1.msra.mxu0 %v1770
    %2866 = vmatprep.subr.mxu0 %v1774
    %2867 = vmatpush1.msra.mxu0 %v1773
    %2868 = vmatprep.subr.mxu0 %v1777
    %2869 = vmatpush1.msra.mxu0 %v1776
    %2870 = vmatprep.subr.mxu0 %v1780
    %2871 = vmatpush1.msra.mxu0 %v1779
    %2872 = vmatprep.subr.mxu0 %v1783
    %2873 = vmatpush1.msra.mxu0 %v1782
    %2874 = vmatprep.subr.mxu0 %v1786
    %2875 = vmatpush1.msra.mxu0 %v1785
    %2876 = vmatprep.subr.mxu0 %v1789
    %2877 = vmatpush1.msra.mxu0 %v1788
    %2878 = vmatprep.subr.mxu0 %v1792
    %2879 = vmatpush1.msra.mxu0 %v1791
    %2880 = vmatprep.subr.mxu0 0.0
    %2881 = vmatpush1.msra.mxu0 0.0
    %2882 = vmatprep.subr.mxu0 0.0
    %2883 = vmatpush1.msra.mxu0 0.0
    %2884 = vmatprep.subr.mxu0 0.0
    %2885 = vmatpush1.msra.mxu0 0.0
    %2886 = vmatprep.subr.mxu0 0.0
    %2887 = vmatpush1.msra.mxu0 0.0
    %2888 = vmatprep.subr.mxu0 0.0
    %2889 = vmatpush1.msra.mxu0 0.0
    %2890 = vmatprep.subr.mxu0 0.0
    %2891 = vmatpush1.msra.mxu0 0.0
    %2892 = vmatprep.subr.mxu0 0.0
    %2893 = vmatpush1.msra.mxu0 0.0
    %2894 = vmatprep.subr.mxu0 0.0
    %2895 = vmatpush1.msra.mxu0 0.0
    %2896 = vmatprep.subr.mxu0 0.0
    %2897 = vmatpush1.msra.mxu0 0.0
    %2898 = vmatprep.subr.mxu0 0.0
    %2899 = vmatpush1.msra.mxu0 0.0
    %2900 = vmatprep.subr.mxu0 0.0
    %2901 = vmatpush1.msra.mxu0 0.0
    %2902 = vmatprep.subr.mxu0 0.0
    %2903 = vmatpush1.msra.mxu0 0.0
    %2904 = vmatprep.subr.mxu0 0.0
    %2905 = vmatpush1.msra.mxu0 0.0
    %2906 = vmatprep.subr.mxu0 0.0
    %2907 = vmatpush1.msra.mxu0 0.0
    %2908 = vmatprep.subr.mxu0 0.0
    %2909 = vmatpush1.msra.mxu0 0.0
    %2910 = vmatprep.subr.mxu0 0.0
    %2911 = vmatpush1.msra.mxu0 0.0
    %2912 = vmatprep.mubr.f32.mxu0 0.0
    %2913 = vmatmul.mubr.f32.gmra.mrb[0].mxu0 %v2847
    %v2914 = vpop.f32.mrb[0].mxu0
    %v2915 = vadd.f32 0.0, %v2914
    %v2916 = vpop.f32.mrb[0].mxu0
    %v2917 = vadd.f32 0.0, %v2916
    %2918 = vdwg.mxu0
    %2919 = vmatprep.subr.mxu0 0.0
    %2920 = vmatpush1.msra.mxu0 %v1748
    %2921 = vmatprep.subr.mxu0 0.0
    %2922 = vmatpush1.msra.mxu0 %v1751
    %2923 = vmatprep.subr.mxu0 0.0
    %2924 = vmatpush1.msra.mxu0 %v1754
    %2925 = vmatprep.subr.mxu0 0.0
    %2926 = vmatpush1.msra.mxu0 %v1757
    %2927 = vmatprep.subr.mxu0 0.0
    %2928 = vmatpush1.msra.mxu0 %v1760
    %2929 = vmatprep.subr.mxu0 0.0
    %2930 = vmatpush1.msra.mxu0 %v1763
    %2931 = vmatprep.subr.mxu0 0.0
    %2932 = vmatpush1.msra.mxu0 %v1766
    %2933 = vmatprep.subr.mxu0 0.0
    %2934 = vmatpush1.msra.mxu0 %v1769
    %2935 = vmatprep.subr.mxu0 0.0
    %2936 = vmatpush1.msra.mxu0 %v1772
    %2937 = vmatprep.subr.mxu0 0.0
    %2938 = vmatpush1.msra.mxu0 %v1775
    %2939 = vmatprep.subr.mxu0 0.0
    %2940 = vmatpush1.msra.mxu0 %v1778
    %2941 = vmatprep.subr.mxu0 0.0
    %2942 = vmatpush1.msra.mxu0 %v1781
    %2943 = vmatprep.subr.mxu0 0.0
    %2944 = vmatpush1.msra.mxu0 %v1784
    %2945 = vmatprep.subr.mxu0 0.0
    %2946 = vmatpush1.msra.mxu0 %v1787
    %2947 = vmatprep.subr.mxu0 0.0
    %2948 = vmatpush1.msra.mxu0 %v1790
    %2949 = vmatprep.subr.mxu0 0.0
    %2950 = vmatpush1.msra.mxu0 %v1793
    %2951 = vmatprep.subr.mxu0 0.0
    %2952 = vmatpush1.msra.mxu0 0.0
    %2953 = vmatprep.subr.mxu0 0.0
    %2954 = vmatpush1.msra.mxu0 0.0
    %2955 = vmatprep.subr.mxu0 0.0
    %2956 = vmatpush1.msra.mxu0 0.0
    %2957 = vmatprep.subr.mxu0 0.0
    %2958 = vmatpush1.msra.mxu0 0.0
    %2959 = vmatprep.subr.mxu0 0.0
    %2960 = vmatpush1.msra.mxu0 0.0
    %2961 = vmatprep.subr.mxu0 0.0
    %2962 = vmatpush1.msra.mxu0 0.0
    %2963 = vmatprep.subr.mxu0 0.0
    %2964 = vmatpush1.msra.mxu0 0.0
    %2965 = vmatprep.subr.mxu0 0.0
    %2966 = vmatpush1.msra.mxu0 0.0
    %2967 = vmatprep.subr.mxu0 0.0
    %2968 = vmatpush1.msra.mxu0 0.0
    %2969 = vmatprep.subr.mxu0 0.0
    %2970 = vmatpush1.msra.mxu0 0.0
    %2971 = vmatprep.subr.mxu0 0.0
    %2972 = vmatpush1.msra.mxu0 0.0
    %2973 = vmatprep.subr.mxu0 0.0
    %2974 = vmatpush1.msra.mxu0 0.0
    %2975 = vmatprep.subr.mxu0 0.0
    %2976 = vmatpush1.msra.mxu0 0.0
    %2977 = vmatprep.subr.mxu0 0.0
    %2978 = vmatpush1.msra.mxu0 0.0
    %2979 = vmatprep.subr.mxu0 0.0
    %2980 = vmatpush1.msra.mxu0 0.0
    %2981 = vmatprep.subr.mxu0 0.0
    %2982 = vmatpush1.msra.mxu0 0.0
    %2983 = vmatprep.mubr.f32.mxu0 0.0
    %2984 = vmatmul.mubr.f32.gmra.mrb[0].mxu0 %v2847
    %v2985 = vpop.f32.mrb[0].mxu0
    %v2986 = vadd.f32 0.0, %v2985
    %v2987 = vpop.f32.mrb[0].mxu0
    %2988 = vdwg.mxu0
    %v2989 = vadd.f32 %v1917, %v2915
    %v2990 = vadd.f32 %v1919, %v2917
    %v2991 = vxor.u32 %v2989, 2147483648
    %v2992 = vxor.u32 %v2990, 2147483648
    %v2993 = vmul.f32 %v2991, 1.442695
    %v2994 = vpow.pop %v2993
    %v2995 = vmul.f32 %v2992, 1.442695
    %v2996 = vpow.pop %v2995
    %v2997 = vadd.f32 %v2994, 1.0
    %v2998 = vadd.f32 %v2996, 1.0
    %v2999 = vrcp.pop %v2997
    %v3000 = vmul.f32 1.0, %v2999
    %v3001 = vrcp.pop %v2998
    %v3002 = vmul.f32 1.0, %v3001
    %v3003 = vadd.f32 %v2986, %v1802
    %v3004 = vmul.f32 %v3000, %v3003
    %v3005 = vadd.f32 %v2025, %v3004
    %v3006 = vtanh.pop %v3005
    %v3007 = vsub.f32 %v2847, %v3006
    %v3008 = vmul.f32 %v3002, %v3007
    %v3009 = vadd.f32 %v3006, %v3008
    %3010 = vmatprep.subr.mxu0 %v1747
    %3011 = vmatpush1.msra.mxu0 %v1746
    %3012 = vmatprep.subr.mxu0 %v1750
    %3013 = vmatpush1.msra.mxu0 %v1749
    %3014 = vmatprep.subr.mxu0 %v1753
    %3015 = vmatpush1.msra.mxu0 %v1752
    %3016 = vmatprep.subr.mxu0 %v1756
    %3017 = vmatpush1.msra.mxu0 %v1755
    %3018 = vmatprep.subr.mxu0 %v1759
    %3019 = vmatpush1.msra.mxu0 %v1758
    %3020 = vmatprep.subr.mxu0 %v1762
    %3021 = vmatpush1.msra.mxu0 %v1761
    %3022 = vmatprep.subr.mxu0 %v1765
    %3023 = vmatpush1.msra.mxu0 %v1764
    %3024 = vmatprep.subr.mxu0 %v1768
    %3025 = vmatpush1.msra.mxu0 %v1767
    %3026 = vmatprep.subr.mxu0 %v1771
    %3027 = vmatpush1.msra.mxu0 %v1770
    %3028 = vmatprep.subr.mxu0 %v1774
    %3029 = vmatpush1.msra.mxu0 %v1773
    %3030 = vmatprep.subr.mxu0 %v1777
    %3031 = vmatpush1.msra.mxu0 %v1776
    %3032 = vmatprep.subr.mxu0 %v1780
    %3033 = vmatpush1.msra.mxu0 %v1779
    %3034 = vmatprep.subr.mxu0 %v1783
    %3035 = vmatpush1.msra.mxu0 %v1782
    %3036 = vmatprep.subr.mxu0 %v1786
    %3037 = vmatpush1.msra.mxu0 %v1785
    %3038 = vmatprep.subr.mxu0 %v1789
    %3039 = vmatpush1.msra.mxu0 %v1788
    %3040 = vmatprep.subr.mxu0 %v1792
    %3041 = vmatpush1.msra.mxu0 %v1791
    %3042 = vmatprep.subr.mxu0 0.0
    %3043 = vmatpush1.msra.mxu0 0.0
    %3044 = vmatprep.subr.mxu0 0.0
    %3045 = vmatpush1.msra.mxu0 0.0
    %3046 = vmatprep.subr.mxu0 0.0
    %3047 = vmatpush1.msra.mxu0 0.0
    %3048 = vmatprep.subr.mxu0 0.0
    %3049 = vmatpush1.msra.mxu0 0.0
    %3050 = vmatprep.subr.mxu0 0.0
    %3051 = vmatpush1.msra.mxu0 0.0
    %3052 = vmatprep.subr.mxu0 0.0
    %3053 = vmatpush1.msra.mxu0 0.0
    %3054 = vmatprep.subr.mxu0 0.0
    %3055 = vmatpush1.msra.mxu0 0.0
    %3056 = vmatprep.subr.mxu0 0.0
    %3057 = vmatpush1.msra.mxu0 0.0
    %3058 = vmatprep.subr.mxu0 0.0
    %3059 = vmatpush1.msra.mxu0 0.0
    %3060 = vmatprep.subr.mxu0 0.0
    %3061 = vmatpush1.msra.mxu0 0.0
    %3062 = vmatprep.subr.mxu0 0.0
    %3063 = vmatpush1.msra.mxu0 0.0
    %3064 = vmatprep.subr.mxu0 0.0
    %3065 = vmatpush1.msra.mxu0 0.0
    %3066 = vmatprep.subr.mxu0 0.0
    %3067 = vmatpush1.msra.mxu0 0.0
    %3068 = vmatprep.subr.mxu0 0.0
    %3069 = vmatpush1.msra.mxu0 0.0
    %3070 = vmatprep.subr.mxu0 0.0
    %3071 = vmatpush1.msra.mxu0 0.0
    %3072 = vmatprep.subr.mxu0 0.0
    %3073 = vmatpush1.msra.mxu0 0.0
    %3074 = vmatprep.mubr.f32.mxu0 0.0
    %3075 = vmatmul.mubr.f32.gmra.mrb[0].mxu0 %v3009
    %v3076 = vpop.f32.mrb[0].mxu0
    %v3077 = vadd.f32 0.0, %v3076
    %v3078 = vpop.f32.mrb[0].mxu0
    %v3079 = vadd.f32 0.0, %v3078
    %3080 = vdwg.mxu0
    %3081 = vmatprep.subr.mxu0 0.0
    %3082 = vmatpush1.msra.mxu0 %v1748
    %3083 = vmatprep.subr.mxu0 0.0
    %3084 = vmatpush1.msra.mxu0 %v1751
    %3085 = vmatprep.subr.mxu0 0.0
    %3086 = vmatpush1.msra.mxu0 %v1754
    %3087 = vmatprep.subr.mxu0 0.0
    %3088 = vmatpush1.msra.mxu0 %v1757
    %3089 = vmatprep.subr.mxu0 0.0
    %3090 = vmatpush1.msra.mxu0 %v1760
    %3091 = vmatprep.subr.mxu0 0.0
    %3092 = vmatpush1.msra.mxu0 %v1763
    %3093 = vmatprep.subr.mxu0 0.0
    %3094 = vmatpush1.msra.mxu0 %v1766
    %3095 = vmatprep.subr.mxu0 0.0
    %3096 = vmatpush1.msra.mxu0 %v1769
    %3097 = vmatprep.subr.mxu0 0.0
    %3098 = vmatpush1.msra.mxu0 %v1772
    %3099 = vmatprep.subr.mxu0 0.0
    %3100 = vmatpush1.msra.mxu0 %v1775
    %3101 = vmatprep.subr.mxu0 0.0
    %3102 = vmatpush1.msra.mxu0 %v1778
    %3103 = vmatprep.subr.mxu0 0.0
    %3104 = vmatpush1.msra.mxu0 %v1781
    %3105 = vmatprep.subr.mxu0 0.0
    %3106 = vmatpush1.msra.mxu0 %v1784
    %3107 = vmatprep.subr.mxu0 0.0
    %3108 = vmatpush1.msra.mxu0 %v1787
    %3109 = vmatprep.subr.mxu0 0.0
    %3110 = vmatpush1.msra.mxu0 %v1790
    %3111 = vmatprep.subr.mxu0 0.0
    %3112 = vmatpush1.msra.mxu0 %v1793
    %3113 = vmatprep.subr.mxu0 0.0
    %3114 = vmatpush1.msra.mxu0 0.0
    %3115 = vmatprep.subr.mxu0 0.0
    %3116 = vmatpush1.msra.mxu0 0.0
    %3117 = vmatprep.subr.mxu0 0.0
    %3118 = vmatpush1.msra.mxu0 0.0
    %3119 = vmatprep.subr.mxu0 0.0
    %3120 = vmatpush1.msra.mxu0 0.0
    %3121 = vmatprep.subr.mxu0 0.0
    %3122 = vmatpush1.msra.mxu0 0.0
    %3123 = vmatprep.subr.mxu0 0.0
    %3124 = vmatpush1.msra.mxu0 0.0
    %3125 = vmatprep.subr.mxu0 0.0
    %3126 = vmatpush1.msra.mxu0 0.0
    %3127 = vmatprep.subr.mxu0 0.0
    %3128 = vmatpush1.msra.mxu0 0.0
    %3129 = vmatprep.subr.mxu0 0.0
    %3130 = vmatpush1.msra.mxu0 0.0
    %3131 = vmatprep.subr.mxu0 0.0
    %3132 = vmatpush1.msra.mxu0 0.0
    %3133 = vmatprep.subr.mxu0 0.0
    %3134 = vmatpush1.msra.mxu0 0.0
    %3135 = vmatprep.subr.mxu0 0.0
    %3136 = vmatpush1.msra.mxu0 0.0
    %3137 = vmatprep.subr.mxu0 0.0
    %3138 = vmatpush1.msra.mxu0 0.0
    %3139 = vmatprep.subr.mxu0 0.0
    %3140 = vmatpush1.msra.mxu0 0.0
    %3141 = vmatprep.subr.mxu0 0.0
    %3142 = vmatpush1.msra.mxu0 0.0
    %3143 = vmatprep.subr.mxu0 0.0
    %3144 = vmatpush1.msra.mxu0 0.0
    %3145 = vmatprep.mubr.f32.mxu0 0.0
    %3146 = vmatmul.mubr.f32.gmra.mrb[0].mxu0 %v3009
    %v3147 = vpop.f32.mrb[0].mxu0
    %v3148 = vadd.f32 0.0, %v3147
    %v3149 = vpop.f32.mrb[0].mxu0
    %3150 = vdwg.mxu0
    %v3151 = vadd.f32 %v1923, %v3077
    %v3152 = vadd.f32 %v1925, %v3079
    %v3153 = vxor.u32 %v3151, 2147483648
    %v3154 = vxor.u32 %v3152, 2147483648
    %v3155 = vmul.f32 %v3153, 1.442695
    %v3156 = vpow.pop %v3155
    %v3157 = vmul.f32 %v3154, 1.442695
    %v3158 = vpow.pop %v3157
    %v3159 = vadd.f32 %v3156, 1.0
    %v3160 = vadd.f32 %v3158, 1.0
    %v3161 = vrcp.pop %v3159
    %v3162 = vmul.f32 1.0, %v3161
    %v3163 = vrcp.pop %v3160
    %v3164 = vmul.f32 1.0, %v3163
    %v3165 = vadd.f32 %v3148, %v1802
    %v3166 = vmul.f32 %v3162, %v3165
    %v3167 = vadd.f32 %v2030, %v3166
    %v3168 = vtanh.pop %v3167
    %v3169 = vsub.f32 %v3009, %v3168
    %v3170 = vmul.f32 %v3164, %v3169
    %v3171 = vadd.f32 %v3168, %v3170
    %3172 = vmatprep.subr.mxu0 %v1747
    %3173 = vmatpush1.msra.mxu0 %v1746
    %3174 = vmatprep.subr.mxu0 %v1750
    %3175 = vmatpush1.msra.mxu0 %v1749
    %3176 = vmatprep.subr.mxu0 %v1753
    %3177 = vmatpush1.msra.mxu0 %v1752
    %3178 = vmatprep.subr.mxu0 %v1756
    %3179 = vmatpush1.msra.mxu0 %v1755
    %3180 = vmatprep.subr.mxu0 %v1759
    %3181 = vmatpush1.msra.mxu0 %v1758
    %3182 = vmatprep.subr.mxu0 %v1762
    %3183 = vmatpush1.msra.mxu0 %v1761
    %3184 = vmatprep.subr.mxu0 %v1765
    %3185 = vmatpush1.msra.mxu0 %v1764
    %3186 = vmatprep.subr.mxu0 %v1768
    %3187 = vmatpush1.msra.mxu0 %v1767
    %3188 = vmatprep.subr.mxu0 %v1771
    %3189 = vmatpush1.msra.mxu0 %v1770
    %3190 = vmatprep.subr.mxu0 %v1774
    %3191 = vmatpush1.msra.mxu0 %v1773
    %3192 = vmatprep.subr.mxu0 %v1777
    %3193 = vmatpush1.msra.mxu0 %v1776
    %3194 = vmatprep.subr.mxu0 %v1780
    %3195 = vmatpush1.msra.mxu0 %v1779
    %3196 = vmatprep.subr.mxu0 %v1783
    %3197 = vmatpush1.msra.mxu0 %v1782
    %3198 = vmatprep.subr.mxu0 %v1786
    %3199 = vmatpush1.msra.mxu0 %v1785
    %3200 = vmatprep.subr.mxu0 %v1789
    %3201 = vmatpush1.msra.mxu0 %v1788
    %3202 = vmatprep.subr.mxu0 %v1792
    %3203 = vmatpush1.msra.mxu0 %v1791
    %3204 = vmatprep.subr.mxu0 0.0
    %3205 = vmatpush1.msra.mxu0 0.0
    %3206 = vmatprep.subr.mxu0 0.0
    %3207 = vmatpush1.msra.mxu0 0.0
    %3208 = vmatprep.subr.mxu0 0.0
    %3209 = vmatpush1.msra.mxu0 0.0
    %3210 = vmatprep.subr.mxu0 0.0
    %3211 = vmatpush1.msra.mxu0 0.0
    %3212 = vmatprep.subr.mxu0 0.0
    %3213 = vmatpush1.msra.mxu0 0.0
    %3214 = vmatprep.subr.mxu0 0.0
    %3215 = vmatpush1.msra.mxu0 0.0
    %3216 = vmatprep.subr.mxu0 0.0
    %3217 = vmatpush1.msra.mxu0 0.0
    %3218 = vmatprep.subr.mxu0 0.0
    %3219 = vmatpush1.msra.mxu0 0.0
    %3220 = vmatprep.subr.mxu0 0.0
    %3221 = vmatpush1.msra.mxu0 0.0
    %3222 = vmatprep.subr.mxu0 0.0
    %3223 = vmatpush1.msra.mxu0 0.0
    %3224 = vmatprep.subr.mxu0 0.0
    %3225 = vmatpush1.msra.mxu0 0.0
    %3226 = vmatprep.subr.mxu0 0.0
    %3227 = vmatpush1.msra.mxu0 0.0
    %3228 = vmatprep.subr.mxu0 0.0
    %3229 = vmatpush1.msra.mxu0 0.0
    %3230 = vmatprep.subr.mxu0 0.0
    %3231 = vmatpush1.msra.mxu0 0.0
    %3232 = vmatprep.subr.mxu0 0.0
    %3233 = vmatpush1.msra.mxu0 0.0
    %3234 = vmatprep.subr.mxu0 0.0
    %3235 = vmatpush1.msra.mxu0 0.0
    %3236 = vmatprep.mubr.f32.mxu0 0.0
    %3237 = vmatmul.mubr.f32.gmra.mrb[0].mxu0 %v3171
    %v3238 = vpop.f32.mrb[0].mxu0
    %v3239 = vadd.f32 0.0, %v3238
    %v3240 = vpop.f32.mrb[0].mxu0
    %v3241 = vadd.f32 0.0, %v3240
    %3242 = vdwg.mxu0
    %3243 = vmatprep.subr.mxu0 0.0
    %3244 = vmatpush1.msra.mxu0 %v1748
    %3245 = vmatprep.subr.mxu0 0.0
    %3246 = vmatpush1.msra.mxu0 %v1751
    %3247 = vmatprep.subr.mxu0 0.0
    %3248 = vmatpush1.msra.mxu0 %v1754
    %3249 = vmatprep.subr.mxu0 0.0
    %3250 = vmatpush1.msra.mxu0 %v1757
    %3251 = vmatprep.subr.mxu0 0.0
    %3252 = vmatpush1.msra.mxu0 %v1760
    %3253 = vmatprep.subr.mxu0 0.0
    %3254 = vmatpush1.msra.mxu0 %v1763
    %3255 = vmatprep.subr.mxu0 0.0
    %3256 = vmatpush1.msra.mxu0 %v1766
    %3257 = vmatprep.subr.mxu0 0.0
    %3258 = vmatpush1.msra.mxu0 %v1769
    %3259 = vmatprep.subr.mxu0 0.0
    %3260 = vmatpush1.msra.mxu0 %v1772
    %3261 = vmatprep.subr.mxu0 0.0
    %3262 = vmatpush1.msra.mxu0 %v1775
    %3263 = vmatprep.subr.mxu0 0.0
    %3264 = vmatpush1.msra.mxu0 %v1778
    %3265 = vmatprep.subr.mxu0 0.0
    %3266 = vmatpush1.msra.mxu0 %v1781
    %3267 = vmatprep.subr.mxu0 0.0
    %3268 = vmatpush1.msra.mxu0 %v1784
    %3269 = vmatprep.subr.mxu0 0.0
    %3270 = vmatpush1.msra.mxu0 %v1787
    %3271 = vmatprep.subr.mxu0 0.0
    %3272 = vmatpush1.msra.mxu0 %v1790
    %3273 = vmatprep.subr.mxu0 0.0
    %3274 = vmatpush1.msra.mxu0 %v1793
    %3275 = vmatprep.subr.mxu0 0.0
    %3276 = vmatpush1.msra.mxu0 0.0
    %3277 = vmatprep.subr.mxu0 0.0
    %3278 = vmatpush1.msra.mxu0 0.0
    %3279 = vmatprep.subr.mxu0 0.0
    %3280 = vmatpush1.msra.mxu0 0.0
    %3281 = vmatprep.subr.mxu0 0.0
    %3282 = vmatpush1.msra.mxu0 0.0
    %3283 = vmatprep.subr.mxu0 0.0
    %3284 = vmatpush1.msra.mxu0 0.0
    %3285 = vmatprep.subr.mxu0 0.0
    %3286 = vmatpush1.msra.mxu0 0.0
    %3287 = vmatprep.subr.mxu0 0.0
    %3288 = vmatpush1.msra.mxu0 0.0
    %3289 = vmatprep.subr.mxu0 0.0
    %3290 = vmatpush1.msra.mxu0 0.0
    %3291 = vmatprep.subr.mxu0 0.0
    %3292 = vmatpush1.msra.mxu0 0.0
    %3293 = vmatprep.subr.mxu0 0.0
    %3294 = vmatpush1.msra.mxu0 0.0
    %3295 = vmatprep.subr.mxu0 0.0
    %3296 = vmatpush1.msra.mxu0 0.0
    %3297 = vmatprep.subr.mxu0 0.0
    %3298 = vmatpush1.msra.mxu0 0.0
    %3299 = vmatprep.subr.mxu0 0.0
    %3300 = vmatpush1.msra.mxu0 0.0
    %3301 = vmatprep.subr.mxu0 0.0
    %3302 = vmatpush1.msra.mxu0 0.0
    %3303 = vmatprep.subr.mxu0 0.0
    %3304 = vmatpush1.msra.mxu0 0.0
    %3305 = vmatprep.subr.mxu0 0.0
    %3306 = vmatpush1.msra.mxu0 0.0
    %3307 = vmatprep.mubr.f32.mxu0 0.0
    %3308 = vmatmul.mubr.f32.gmra.mrb[0].mxu0 %v3171
    %v3309 = vpop.f32.mrb[0].mxu0
    %v3310 = vadd.f32 0.0, %v3309
    %v3311 = vpop.f32.mrb[0].mxu0
    %3312 = vdwg.mxu0
    %v3313 = vadd.f32 %v1929, %v3239
    %v3314 = vadd.f32 %v1931, %v3241
    %v3315 = vxor.u32 %v3313, 2147483648
    %v3316 = vxor.u32 %v3314, 2147483648
    %v3317 = vmul.f32 %v3315, 1.442695
    %v3318 = vpow.pop %v3317
    %v3319 = vmul.f32 %v3316, 1.442695
    %v3320 = vpow.pop %v3319
    %v3321 = vadd.f32 %v3318, 1.0
    %v3322 = vadd.f32 %v3320, 1.0
    %v3323 = vrcp.pop %v3321
    %v3324 = vmul.f32 1.0, %v3323
    %v3325 = vrcp.pop %v3322
    %v3326 = vmul.f32 1.0, %v3325
    %v3327 = vadd.f32 %v3310, %v1802
    %v3328 = vmul.f32 %v3324, %v3327
    %v3329 = vadd.f32 %v2035, %v3328
    %v3330 = vtanh.pop %v3329
    %v3331 = vsub.f32 %v3171, %v3330
    %v3332 = vmul.f32 %v3326, %v3331
    %v3333 = vadd.f32 %v3330, %v3332
    %v3334 = vmax.f32 %v3333, 0.0
    %v3335 = vld [vmem:[%s5] sm:$0xff]
    %v3336 = vld [vmem:[%s5 + $0x8] sm:$0xff]
    %v3337 = vld [vmem:[%s5 + $0x10] sm:$0xff]
    %v3338 = vld [vmem:[%s5 + $0x18] sm:$0xff]
    %v3339 = vld [vmem:[%s5 + $0x20] sm:$0xff]
    %v3340 = vld [vmem:[%s5 + $0x28] sm:$0xff]
    %v3341 = vld [vmem:[%s5 + $0x30] sm:$0xff]
    %v3342 = vld [vmem:[%s5 + $0x38] sm:$0xff]
    %v3343 = vld [vmem:[%s5 + $0x40] sm:$0xff]
    %v3344 = vld [vmem:[%s5 + $0x48] sm:$0xff]
    %v3345 = vld [vmem:[%s5 + $0x50] sm:$0xff]
    %v3346 = vld [vmem:[%s5 + $0x58] sm:$0xff]
    %v3347 = vld [vmem:[%s5 + $0x60] sm:$0xff]
    %v3348 = vld [vmem:[%s5 + $0x68] sm:$0xff]
    %v3349 = vld [vmem:[%s5 + $0x70] sm:$0xff]
    %v3350 = vld [vmem:[%s5 + $0x78] sm:$0xff]
    %v3351 = vld [vmem:[%s6] sm:$0x1]
    %v3353 = vlaneseq
    %v3354 = vshrl.u32 %v3353, 7
    %v3355 = vsub.s32 0, %v3354
    %v3356 = vrot.slane %v3351, %v3355
    %3358 = vmatprep.subr.mxu0 0.0
    %3359 = vmatpush1.msra.mxu0 %v3335
    %3360 = vmatprep.subr.mxu0 0.0
    %3361 = vmatpush1.msra.mxu0 %v3336
    %3362 = vmatprep.subr.mxu0 0.0
    %3363 = vmatpush1.msra.mxu0 %v3337
    %3364 = vmatprep.subr.mxu0 0.0
    %3365 = vmatpush1.msra.mxu0 %v3338
    %3366 = vmatprep.subr.mxu0 0.0
    %3367 = vmatpush1.msra.mxu0 %v3339
    %3368 = vmatprep.subr.mxu0 0.0
    %3369 = vmatpush1.msra.mxu0 %v3340
    %3370 = vmatprep.subr.mxu0 0.0
    %3371 = vmatpush1.msra.mxu0 %v3341
    %3372 = vmatprep.subr.mxu0 0.0
    %3373 = vmatpush1.msra.mxu0 %v3342
    %3374 = vmatprep.subr.mxu0 0.0
    %3375 = vmatpush1.msra.mxu0 %v3343
    %3376 = vmatprep.subr.mxu0 0.0
    %3377 = vmatpush1.msra.mxu0 %v3344
    %3378 = vmatprep.subr.mxu0 0.0
    %3379 = vmatpush1.msra.mxu0 %v3345
    %3380 = vmatprep.subr.mxu0 0.0
    %3381 = vmatpush1.msra.mxu0 %v3346
    %3382 = vmatprep.subr.mxu0 0.0
    %3383 = vmatpush1.msra.mxu0 %v3347
    %3384 = vmatprep.subr.mxu0 0.0
    %3385 = vmatpush1.msra.mxu0 %v3348
    %3386 = vmatprep.subr.mxu0 0.0
    %3387 = vmatpush1.msra.mxu0 %v3349
    %3388 = vmatprep.subr.mxu0 0.0
    %3389 = vmatpush1.msra.mxu0 %v3350
    %3390 = vmatprep.subr.mxu0 0.0
    %3391 = vmatpush1.msra.mxu0 0.0
    %3392 = vmatprep.subr.mxu0 0.0
    %3393 = vmatpush1.msra.mxu0 0.0
    %3394 = vmatprep.subr.mxu0 0.0
    %3395 = vmatpush1.msra.mxu0 0.0
    %3396 = vmatprep.subr.mxu0 0.0
    %3397 = vmatpush1.msra.mxu0 0.0
    %3398 = vmatprep.subr.mxu0 0.0
    %3399 = vmatpush1.msra.mxu0 0.0
    %3400 = vmatprep.subr.mxu0 0.0
    %3401 = vmatpush1.msra.mxu0 0.0
    %3402 = vmatprep.subr.mxu0 0.0
    %3403 = vmatpush1.msra.mxu0 0.0
    %3404 = vmatprep.subr.mxu0 0.0
    %3405 = vmatpush1.msra.mxu0 0.0
    %3406 = vmatprep.subr.mxu0 0.0
    %3407 = vmatpush1.msra.mxu0 0.0
    %3408 = vmatprep.subr.mxu0 0.0
    %3409 = vmatpush1.msra.mxu0 0.0
    %3410 = vmatprep.subr.mxu0 0.0
    %3411 = vmatpush1.msra.mxu0 0.0
    %3412 = vmatprep.subr.mxu0 0.0
    %3413 = vmatpush1.msra.mxu0 0.0
    %3414 = vmatprep.subr.mxu0 0.0
    %3415 = vmatpush1.msra.mxu0 0.0
    %3416 = vmatprep.subr.mxu0 0.0
    %3417 = vmatpush1.msra.mxu0 0.0
    %3418 = vmatprep.subr.mxu0 0.0
    %3419 = vmatpush1.msra.mxu0 0.0
    %3420 = vmatprep.subr.mxu0 0.0
    %3421 = vmatpush1.msra.mxu0 0.0
    %3422 = vmatprep.mubr.f32.mxu0 0.0
    %3423 = vmatmul.mubr.f32.gmra.mrb[0].mxu0 %v3334
    %v3424 = vpop.f32.mrb[0].mxu0
    %v3425 = vadd.f32 %v3356, %v3424
    %v3426 = vpop.f32.mrb[0].mxu0
    %3427 = vdwg.mxu0
    %vm3428 = vcmask 31744
    %3429 = vst.msk [vmem:[%s7] sm:$0xff] %vm3428, %v3425
    // Predicated region
    $region38: #{tpu_custom_call.1} parent=1 // pred_check
      _
    $region39: #{tpu_custom_call.1} parent=1 // pred_check_branch
      %3431 = sbr.rel (0) target = $region41
    $region40: #{tpu_custom_call.1} parent=1 // pred_region
      _
    $region41: #{tpu_custom_call.1} parent=1 // pred_fallthru
      _
    // Predicated region
    $region42: #{tpu_custom_call.1} parent=1 // pred_check
      _
    $region43: #{tpu_custom_call.1} parent=1 // pred_check_branch
      %3433 = sbr.rel (0) target = $region45
    $region44: #{tpu_custom_call.1} parent=1 // pred_region
      _
    $region45: #{tpu_custom_call.1} parent=1 // pred_fallthru
      _
    %3434 = vsyncpa [#allocation3], 1
    %3435 = vsyncpa [#allocation5], 1

</llo_original>
